<compile_context>
chip_gen: v7x
topology: tpu7x:2x2x1
jax: 0.10.0
libtpu: 0.0.40
codegen_flags: <defaults>
</compile_context>

<pallas_src>
import jax
import jax.numpy as jnp
import numpy as np
from jax.experimental import pallas as pl
from jax.experimental.pallas import tpu as pltpu


# ----------------------------------------------------------------------------- kernel ---

def _attention_kernel(hidden_ref, enc_ref, mask_ref,
                      wh_ref, we_ref, b_ref, v_ref, out_ref):
    # hidden_ref: (Bt, Dd)           wh_ref: (Dd, Dd)
    # enc_ref:    (S, Bt, E2)        we_ref: (E2, Dd)
    # mask_ref:   (Bt, S) int        b_ref:  (1, Dd)   v_ref: (1, Dd)
    # out_ref:    (Bt, S) float32
    S, Bt, E2 = enc_ref.shape
    Dd = wh_ref.shape[1]

    # hidden part of the split linear: (Bt, Dd) @ (Dd, Dd) -> (Bt, Dd), f32 accumulate (MXU).
    h_part = jnp.dot(hidden_ref[...], wh_ref[...], preferred_element_type=jnp.float32)

    # encoder part: collapse (S, Bt) rows (layout no-op since Bt is sublane-aligned), MXU matmul.
    e2d = enc_ref[...].reshape(S * Bt, E2)
    e_part = jnp.dot(e2d, we_ref[...], preferred_element_type=jnp.float32)
    e_part = e_part.reshape(S, Bt, Dd)

    # energy = tanh(attn(cat([hidden, enc], -1)))  (split-weight form, f32 elementwise math)
    energy = jnp.tanh(e_part + h_part[None, :, :] + b_ref[...].reshape(1, 1, Dd))

    # v projection (out_features=1, no bias): lane-reduce over Dd -> (S, Bt), then one small
    # 2-D transpose (XLU) to the (Bt, S) layout of mask/output.
    score_sb = jnp.sum(energy * v_ref[...].reshape(1, 1, Dd), axis=-1)   # (S, Bt)
    score = score_sb.T                                                   # (Bt, S)

    # masked_fill(mask == 0, -1e10)  (integer mask compared directly, no f32 round-trip)
    score = jnp.where(mask_ref[...] != 0, score, jnp.float32(-10000000000.0))

    # softmax over src_len (full S resident -> single pass)
    m = jnp.max(score, axis=1, keepdims=True)
    ex = jnp.exp(score - m)
    denom = jnp.sum(ex, axis=1, keepdims=True)
    # approx reciprocal -> rows sum to ~1 (not bit-exact); use approx=False if exactness needed.
    out_ref[...] = (ex * pl.reciprocal(denom, approx=True)).astype(out_ref.dtype)


# -------------------------------------------------------------------------- parameters ---

def prepare_attention_params(attn_w, attn_b, v_w, compute_dtype=jnp.float32):
    """Hoisted (once-per-model) weight preprocessing: split the concat-Linear weight.

    attn_w: [dec_hid, dec_hid + 2*enc_hid]   (PyTorch Linear weight, cat order [hidden, enc])
    attn_b: [dec_hid]
    v_w:    [1, dec_hid]
    Set compute_dtype=jnp.bfloat16 to run the MXU matmuls in bf16 (f32 accumulate); in that
    case the producer should also emit encoder_outputs in bf16 (do NOT cast in the hot path).
    """
    Dd = attn_w.shape[0]
    wh = jnp.asarray(attn_w[:, :Dd].T, dtype=compute_dtype)      # (Dd, Dd)
    we = jnp.asarray(attn_w[:, Dd:].T, dtype=compute_dtype)      # (E2, Dd)
    b = jnp.asarray(attn_b, dtype=jnp.float32).reshape(1, Dd)    # (1, Dd)
    v = jnp.asarray(v_w, dtype=jnp.float32).reshape(1, Dd)       # (1, Dd)
    return wh, we, b, v


# ------------------------------------------------------------------- tile / VMEM sizing ---

def _default_vmem_limit_bytes():
    """Scoped-VMEM limit derived from the actual chip, with a v7x-safe fallback."""
    try:
        cap = int(pltpu.get_tpu_info().vmem_capacity_bytes)   # 128 MiB v5e/v6e, 64 MiB v7x/TC
    except Exception:
        cap = 64 * 1024 * 1024                                # conservative (v7x per-TC)
    return (cap * 3) // 4                                     # leave headroom for compiler scratch


def _choose_batch_tile(B, S, E2, Dd, compute_itemsize, vmem_limit_bytes, sublane):
    """Pick the largest sublane-aligned batch tile whose full per-step footprint
    (double-buffered enc block + f32 energy/e_part temporaries + mask/out blocks)
    fits the VMEM limit, preferring >= 2 grid steps so the 'parallel' batch axis
    can shard across v7x's 2 TensorCores.

    Returns a tile that divides B when possible; otherwise a tile the caller pads B to.
    """
    per_row = (2 * S * E2 * compute_itemsize     # enc block, double-buffered
               + 3 * S * Dd * 4                  # f32 e_part / energy / broadcast temporaries
               + 12 * S * 4                      # mask + out blocks (double-buffered) + score/exp
               + 4 * Dd * compute_itemsize)      # hidden block
    fixed = 2 * (Dd * Dd + E2 * Dd + 2 * Dd) * compute_itemsize + (4 << 20)  # weights + slack
    budget = max(vmem_limit_bytes - fixed, per_row * sublane)
    cap = max(sublane, (int(budget // per_row) // sublane) * sublane)

    # Search aligned divisors of B from largest to smallest, preferring >= 2 grid steps.
    best_single = None
    t = min(cap, (B // sublane) * sublane) if B >= sublane else 0
    while t >= sublane:
        if B % t == 0:
            if B // t >= 2:
                return t
            if best_single is None:
                best_single = t
        t -= sublane
    if best_single is not None:
        return best_single

    # No aligned divisor of B fits: the caller pads the batch to a multiple of this tile.
    # TODO(synk): have the producer pad the batch instead (padding enc here costs an HBM pass).
    return min(cap, ((B + sublane - 1) // sublane) * sublane)


# ----------------------------------------------------------------------------- wrapper ---

def attention_forward(hidden, encoder_outputs, mask, wh, we, b, v, *,
                      batch_tile=None, vmem_limit_bytes=None, enc_buffers=None):
    """
    hidden:          [B, dec_hid]
    encoder_outputs: [S, B, 2*enc_hid]   (native PyTorch layout; consumed as-is, no transpose)
    mask:            [B, src_len]  (0/1; any integer dtype — no cast pass is added)
    wh, we, b, v:    from prepare_attention_params
    returns:         [B, S]  float32 softmax attention weights
    """
    B, Dd = hidden.shape
    S, Bz, E2 = encoder_outputs.shape
    assert Bz == B, "encoder_outputs must be [src_len, batch, 2*enc_hid]"

    compute_dtype = wh.dtype
    # No hot-path casts of the big tensor: require the producer to emit enc in compute_dtype.
    if encoder_outputs.dtype != compute_dtype:
        # TODO(synk): fuse this cast upstream — on a mem-bound kernel it erases the bf16 win.
        encoder_outputs = encoder_outputs.astype(compute_dtype)
    hid = hidden.astype(compute_dtype) if hidden.dtype != compute_dtype else hidden  # tiny
    if jnp.issubdtype(mask.dtype, jnp.integer):
        mask_i = mask
    else:
        mask_i = mask.astype(jnp.int32)

    if vmem_limit_bytes is None:
        vmem_limit_bytes = _default_vmem_limit_bytes()

    # bf16 blocks pack (16,128): align the batch tile accordingly.
    sublane = 16 if jnp.dtype(compute_dtype).itemsize == 2 else 8
    bt = batch_tile if batch_tile is not None else _choose_batch_tile(
        B, S, E2, Dd, jnp.dtype(compute_dtype).itemsize, vmem_limit_bytes, sublane)

    # Pad the batch if the tile does not divide it (correctness fallback only).
    Bp = ((B + bt - 1) // bt) * bt
    if Bp != B:
        pad = Bp - B
        hid = jnp.pad(hid, ((0, pad), (0, 0)))
        encoder_outputs = jnp.pad(encoder_outputs, ((0, 0), (0, pad), (0, 0)))
        mask_i = jnp.pad(mask_i, ((0, pad), (0, 0)))   # padded rows fully masked -> sliced away

    grid = (Bp // bt,)

    enc_spec_kwargs = {}
    if enc_buffers is not None:
        # Optional deeper pipelining of the strided enc DMA (sweep 2 vs 3 if DMA is exposed).
        enc_spec_kwargs["pipeline_mode"] = pl.Buffered(enc_buffers)

    out = pl.pallas_call(
        _attention_kernel,
        out_shape=jax.ShapeDtypeStruct((Bp, S), jnp.float32),
        grid=grid,
        in_specs=[
            pl.BlockSpec((bt, Dd), lambda i: (i, 0)),         # hidden      (batch-tiled)
            pl.BlockSpec((S, bt, E2), lambda i: (0, i, 0),    # encoder out (native [S,B,E2])
                         **enc_spec_kwargs),
            pl.BlockSpec((bt, S), lambda i: (i, 0)),          # mask        (batch-tiled)
            pl.BlockSpec((Dd, Dd), lambda i: (0, 0)),         # wh   (VMEM-resident)
            pl.BlockSpec((E2, Dd), lambda i: (0, 0)),         # we   (VMEM-resident)
            pl.BlockSpec((1, Dd), lambda i: (0, 0)),          # bias (VMEM-resident)
            pl.BlockSpec((1, Dd), lambda i: (0, 0)),          # v    (VMEM-resident)
        ],
        out_specs=pl.BlockSpec((bt, S), lambda i: (i, 0)),    # lane-dense full-S rows
        compiler_params=pltpu.CompilerParams(
            dimension_semantics=("parallel",),                # megacore sharding on v7x
            vmem_limit_bytes=int(vmem_limit_bytes),
        ),
    )(hid, encoder_outputs, mask_i, wh, we, b, v)

    return out[:B] if Bp != B else out


# --------------------------------------------------------------------------- reference ---

def _reference(hidden, encoder_outputs, mask, attn_w, attn_b, v_w):
    # Pure-JAX reference mirroring the PyTorch forward exactly.
    S = encoder_outputs.shape[0]
    h = jnp.repeat(hidden[:, None, :], S, axis=1)                 # (B, S, Dd)
    enc = jnp.transpose(encoder_outputs, (1, 0, 2))               # (B, S, E2)
    x = jnp.concatenate([h, enc], axis=2)                         # (B, S, Dd+E2)
    energy = jnp.tanh(x @ attn_w.T + attn_b)                      # (B, S, Dd)
    attention = (energy @ v_w.T)[..., 0]                          # (B, S)
    attention = jnp.where(mask == 0, -10000000000.0, attention)
    return jax.nn.softmax(attention, axis=1)


if __name__ == "__main__":
    enc_hid_dim = 16
    dec_hid_dim = 32
    src_len = 128          # multiple of 128 -> lane-dense mask/output blocks
    batch = 16             # tile chooser picks bt=8 -> 2 grid steps (exercises the pipeline)
    in_dim = enc_hid_dim * 2 + dec_hid_dim

    key = jax.random.PRNGKey(0)
    k1, k2, k3, k4, k5, k6 = jax.random.split(key, 6)

    hidden = jax.random.normal(k1, (batch, dec_hid_dim), dtype=jnp.float32)
    encoder_outputs = jax.random.normal(
        k2, (src_len, batch, enc_hid_dim * 2), dtype=jnp.float32)
    # Mask produced directly as int32 -> no wrapper cast pass.
    mask = (jax.random.uniform(k3, (batch, src_len)) > 0.3).astype(jnp.int32)
    # Guarantee at least one unmasked position per row (PyTorch usage assumes this).
    mask = mask.at[:, 0].set(1)

    # Deterministic parameter init (shapes from the nn.Linear definitions).
    lim_attn = 1.0 / np.sqrt(in_dim)
    attn_w = jax.random.uniform(k4, (dec_hid_dim, in_dim),
                                minval=-lim_attn, maxval=lim_attn, dtype=jnp.float32)
    attn_b = jax.random.uniform(k5, (dec_hid_dim,),
                                minval=-lim_attn, maxval=lim_attn, dtype=jnp.float32)
    lim_v = 1.0 / np.sqrt(dec_hid_dim)
    v_w = jax.random.uniform(k6, (1, dec_hid_dim),
                             minval=-lim_v, maxval=lim_v, dtype=jnp.float32)

    # Weight preprocessing hoisted out of the hot path (done once per model).
    # (Use compute_dtype=jnp.bfloat16 with a bf16 encoder_outputs producer on v5e/v6e/v7x.)
    wh, we, b, v = prepare_attention_params(attn_w, attn_b, v_w, compute_dtype=jnp.float32)

    fwd = jax.jit(attention_forward,
                  static_argnames=("batch_tile", "vmem_limit_bytes", "enc_buffers"))
    out = fwd(hidden, encoder_outputs, mask, wh, we, b, v)
    out = jax.block_until_ready(out)

    ref = _reference(hidden, encoder_outputs, mask, attn_w, attn_b, v_w)
    ref = jax.block_until_ready(ref)

    assert out.shape == (batch, src_len)
    # Tolerance accounts for the approximate (EUP) reciprocal in the softmax normalization.
    np.testing.assert_allclose(np.asarray(out), np.asarray(ref), rtol=1e-2, atol=2e-4)

    print("KERNEL_OK")
</pallas_src>

<mosaic_0001>
module attributes {stable_mosaic.version = 11 : i64} {
  func.func @_attention_kernel(%arg0: i32, %arg1: memref<8x32xf32, #tpu.memory_space<vmem>>, %arg2: memref<128x8x32xf32, #tpu.memory_space<vmem>>, %arg3: memref<8x128xi32, #tpu.memory_space<vmem>>, %arg4: memref<32x32xf32, #tpu.memory_space<vmem>>, %arg5: memref<32x32xf32, #tpu.memory_space<vmem>>, %arg6: memref<1x32xf32, #tpu.memory_space<vmem>>, %arg7: memref<1x32xf32, #tpu.memory_space<vmem>>, %arg8: memref<8x128xf32, #tpu.memory_space<vmem>>) attributes {dimension_semantics = [#tpu.dimension_semantics<parallel>], iteration_bounds = array<i64: 2>, scalar_prefetch = 0 : i64, scratch_operands = 0 : i64, tpu.core_type = #tpu.core_type<tc>, window_params = [{transform_indices = @transform_0, window_bounds = array<i64: 8, 32>}, {transform_indices = @transform_1, window_bounds = array<i64: 128, 8, 32>}, {transform_indices = @transform_2, window_bounds = array<i64: 8, 128>}, {pipeline_mode = #tpu.pipeline_mode<synchronous>, transform_indices = @transform_3, window_bounds = array<i64: 32, 32>}, {pipeline_mode = #tpu.pipeline_mode<synchronous>, transform_indices = @transform_4, window_bounds = array<i64: 32, 32>}, {pipeline_mode = #tpu.pipeline_mode<synchronous>, transform_indices = @transform_5, window_bounds = array<i64: 1, 32>}, {pipeline_mode = #tpu.pipeline_mode<synchronous>, transform_indices = @transform_6, window_bounds = array<i64: 1, 32>}, {transform_indices = @transform_7, window_bounds = array<i64: 8, 128>}]} {
    %c0 = arith.constant 0 : index
    %c0_0 = arith.constant 0 : index
    %0 = vector.load %arg1[%c0, %c0_0] : memref<8x32xf32, #tpu.memory_space<vmem>>, vector<8x32xf32>
    %c0_1 = arith.constant 0 : index
    %c0_2 = arith.constant 0 : index
    %1 = vector.load %arg4[%c0_1, %c0_2] : memref<32x32xf32, #tpu.memory_space<vmem>>, vector<32x32xf32>
    %cst = arith.constant dense<0.000000e+00> : vector<8x32xf32>
    %2 = tpu.matmul %0, %1, %cst {dimension_numbers = #tpu.dot_dimension_numbers<[1], [0], [0], [1], [0, 0, 1, 1], [], []>} : vector<8x32xf32>, vector<32x32xf32>, vector<8x32xf32> -> vector<8x32xf32>
    %c0_3 = arith.constant 0 : index
    %c0_4 = arith.constant 0 : index
    %c0_5 = arith.constant 0 : index
    %3 = vector.load %arg2[%c0_3, %c0_4, %c0_5] : memref<128x8x32xf32, #tpu.memory_space<vmem>>, vector<128x8x32xf32>
    %4 = vector.shape_cast %3 : vector<128x8x32xf32> to vector<1024x32xf32>
    %c0_6 = arith.constant 0 : index
    %c0_7 = arith.constant 0 : index
    %5 = vector.load %arg5[%c0_6, %c0_7] : memref<32x32xf32, #tpu.memory_space<vmem>>, vector<32x32xf32>
    %cst_8 = arith.constant dense<0.000000e+00> : vector<1024x32xf32>
    %6 = tpu.matmul %4, %5, %cst_8 {dimension_numbers = #tpu.dot_dimension_numbers<[1], [0], [0], [1], [0, 0, 1, 1], [], []>} : vector<1024x32xf32>, vector<32x32xf32>, vector<1024x32xf32> -> vector<1024x32xf32>
    %7 = vector.shape_cast %6 : vector<1024x32xf32> to vector<128x8x32xf32>
    %8 = vector.shape_cast %2 : vector<8x32xf32> to vector<1x8x32xf32>
    %9 = vector.broadcast %8 : vector<1x8x32xf32> to vector<128x8x32xf32>
    %10 = arith.addf %7, %9 : vector<128x8x32xf32>
    %c0_9 = arith.constant 0 : index
    %c0_10 = arith.constant 0 : index
    %11 = vector.load %arg6[%c0_9, %c0_10] : memref<1x32xf32, #tpu.memory_space<vmem>>, vector<1x32xf32>
    %12 = vector.shape_cast %11 : vector<1x32xf32> to vector<1x1x32xf32>
    %13 = vector.broadcast %12 : vector<1x1x32xf32> to vector<128x8x32xf32>
    %14 = arith.addf %10, %13 : vector<128x8x32xf32>
    %15 = math.tanh %14 : vector<128x8x32xf32>
    %c0_11 = arith.constant 0 : index
    %c0_12 = arith.constant 0 : index
    %16 = vector.load %arg7[%c0_11, %c0_12] : memref<1x32xf32, #tpu.memory_space<vmem>>, vector<1x32xf32>
    %17 = vector.shape_cast %16 : vector<1x32xf32> to vector<1x1x32xf32>
    %18 = vector.broadcast %17 : vector<1x1x32xf32> to vector<128x8x32xf32>
    %19 = arith.mulf %15, %18 : vector<128x8x32xf32>
    %cst_13 = arith.constant dense<0.000000e+00> : vector<128x8xf32>
    %20 = vector.multi_reduction <add>, %19, %cst_13 [2] : vector<128x8x32xf32> to vector<128x8xf32>
    %21 = tpu.transpose %20, [1, 0] : vector<128x8xf32> -> vector<8x128xf32>
    %c0_14 = arith.constant 0 : index
    %c0_15 = arith.constant 0 : index
    %22 = vector.load %arg3[%c0_14, %c0_15] : memref<8x128xi32, #tpu.memory_space<vmem>>, vector<8x128xi32>
    %c0_i32 = arith.constant 0 : i32
    %23 = vector.broadcast %c0_i32 : i32 to vector<8x128xi32>
    %24 = arith.cmpi ne, %22, %23 : vector<8x128xi32>
    %cst_16 = arith.constant -1.000000e+10 : f32
    %25 = vector.broadcast %cst_16 : f32 to vector<8x128xf32>
    %26 = arith.select %24, %21, %25 : vector<8x128xi1>, vector<8x128xf32>
    %cst_17 = arith.constant dense<0xFF800000> : vector<8xf32>
    %27 = vector.multi_reduction <maximumf>, %26, %cst_17 [1] : vector<8x128xf32> to vector<8xf32>
    %28 = vector.shape_cast %27 : vector<8xf32> to vector<8x1xf32>
    %29 = vector.broadcast %28 : vector<8x1xf32> to vector<8x128xf32>
    %30 = arith.subf %26, %29 : vector<8x128xf32>
    %31 = math.exp %30 : vector<8x128xf32>
    %cst_18 = arith.constant dense<0.000000e+00> : vector<8xf32>
    %32 = vector.multi_reduction <add>, %31, %cst_18 [1] : vector<8x128xf32> to vector<8xf32>
    %33 = vector.shape_cast %32 : vector<8xf32> to vector<8x1xf32>
    %34 = tpu.reciprocal %33 {approx = true} : vector<8x1xf32> -> vector<8x1xf32>
    %35 = vector.broadcast %34 : vector<8x1xf32> to vector<8x128xf32>
    %36 = arith.mulf %31, %35 : vector<8x128xf32>
    %c0_19 = arith.constant 0 : index
    %c0_20 = arith.constant 0 : index
    %37 = vector.load %arg8[%c0_19, %c0_20] : memref<8x128xf32, #tpu.memory_space<vmem>>, vector<8x128xf32>
    tpu.vector_store %arg8[%c0_19, %c0_20], %36 {strides = array<i32>} : memref<8x128xf32, #tpu.memory_space<vmem>>, vector<8x128xf32>,
    return
  }
  func.func @transform_0(%arg0: i32) -> (i32, i32) {
    %c0_i32 = arith.constant 0 : i32
    %c0_i32_0 = arith.constant 0 : i32
    return %arg0, %c0_i32 : i32, i32
  }
  func.func @transform_1(%arg0: i32) -> (i32, i32, i32) {
    %c0_i32 = arith.constant 0 : i32
    %c0_i32_0 = arith.constant 0 : i32
    %c0_i32_1 = arith.constant 0 : i32
    return %c0_i32, %arg0, %c0_i32_0 : i32, i32, i32
  }
  func.func @transform_2(%arg0: i32) -> (i32, i32) {
    %c0_i32 = arith.constant 0 : i32
    %c0_i32_0 = arith.constant 0 : i32
    return %arg0, %c0_i32 : i32, i32
  }
  func.func @transform_3(%arg0: i32) -> (i32, i32) {
    %c0_i32 = arith.constant 0 : i32
    %c0_i32_0 = arith.constant 0 : i32
    %c0_i32_1 = arith.constant 0 : i32
    return %c0_i32, %c0_i32_0 : i32, i32
  }
  func.func @transform_4(%arg0: i32) -> (i32, i32) {
    %c0_i32 = arith.constant 0 : i32
    %c0_i32_0 = arith.constant 0 : i32
    %c0_i32_1 = arith.constant 0 : i32
    return %c0_i32, %c0_i32_0 : i32, i32
  }
  func.func @transform_5(%arg0: i32) -> (i32, i32) {
    %c0_i32 = arith.constant 0 : i32
    %c0_i32_0 = arith.constant 0 : i32
    %c0_i32_1 = arith.constant 0 : i32
    return %c0_i32, %c0_i32_0 : i32, i32
  }
  func.func @transform_6(%arg0: i32) -> (i32, i32) {
    %c0_i32 = arith.constant 0 : i32
    %c0_i32_0 = arith.constant 0 : i32
    %c0_i32_1 = arith.constant 0 : i32
    return %c0_i32, %c0_i32_0 : i32, i32
  }
  func.func @transform_7(%arg0: i32) -> (i32, i32) {
    %c0_i32 = arith.constant 0 : i32
    %c0_i32_0 = arith.constant 0 : i32
    return %arg0, %c0_i32 : i32, i32
  }
}

</mosaic_0001>

<llo_original>
// kernel: attention_forward.1
$region0: #{attention_forward.1}
  #allocation0 [shape = 'u32[]', space=smem, size = 0x4, offset = 0x4, fixed_abs, tag = 'smem constant byte address 0x4 - core index']
  #allocation1 [shape = 'u32[144,128]{1,0:T(1,128)}', space=vmem, size = 0x12000, scoped, tag = 'internal scratch']
  %s0 = inlined_call_operand.vmem [shape: f32[16,32], index: 0, kind: input, shape index: {}]
  %s1 = inlined_call_operand.vmem [shape: f32[128,16,32], index: 1, kind: input, shape index: {}]
  %s2 = inlined_call_operand.vmem [shape: s32[16,128], index: 2, kind: input, shape index: {}]
  %s3 = inlined_call_operand.vmem [shape: f32[32,32], index: 3, kind: input, shape index: {}]
  %s4 = inlined_call_operand.vmem [shape: f32[32,32], index: 4, kind: input, shape index: {}]
  %s5 = inlined_call_operand.vmem [shape: f32[1,32], index: 5, kind: input, shape index: {}]
  %s6 = inlined_call_operand.vmem [shape: f32[1,32], index: 6, kind: input, shape index: {}]
  %s7 = inlined_call_operand.hbm [shape: f32[16,128], index: 7, kind: output, shape index: {}]
  %s8 = sld [smem:[#allocation0]]
  $region99: #{attention_forward.1} parent=0
    _
  %s10 = ssub.s32 1, %s8
  %s11 = scalar_select 0, %s10, %s8
  $region1: #{attention_forward.1} parent=0
    #allocation2 [shape = 'u8[1048576]{0}', space=vmem, size = 0x100000, scoped, tag = 'input window, operand 1']
    #allocation3 [shape = 'u8[8192]{0}', space=vmem, size = 0x2000, scoped, tag = 'output window, operand 0']
    #allocation4 [shape = 's32[2]{0}', space=sflag, size = 0x8, scoped, tag = 'scoped memory for attention_forward.1']
    %12 = vsyncpa [#allocation4], 0
    %s13 = scalar_lea.sflag [#allocation4], 1
    %14 = vsyncpa %s13, 0
    loop: start=0, step=1, limit=4
    $region2: #{attention_forward.1} parent=1 // loop_pre_header
      _
    $region3: #{attention_forward.1} parent=1 // loop_header
      %s16 = sphi 0, %s20
      %p17 = scmp.ge.s32.totalorder %s16, 4
      %s26 = sphi 0, %s28
      %s29 = sphi 0, %s26
      %s30 = sphi 0, %s29
      %s46 = sphi 0, %s30
      %s52 = sphi 0, %s54
      %s55 = sphi 0, %s52
      %s56 = sphi 0, %s55
      %s72 = sphi 0, %s56
      %s78 = sphi 0, %s80
      %s81 = sphi 0, %s78
      %s82 = sphi 0, %s81
      %s98 = sphi 0, %s82
      %s102 = sphi 0, %s102
      %s104 = sphi 0, %s102
      %s105 = sphi 0, %s104
      %s119 = sphi 0, %s105
      %s123 = sphi 0, %s123
      %s125 = sphi 0, %s123
      %s126 = sphi 0, %s125
      %s140 = sphi 0, %s126
      %s144 = sphi 0, %s144
      %s146 = sphi 0, %s144
      %s147 = sphi 0, %s146
      %s161 = sphi 0, %s147
      %s165 = sphi 0, %s165
      %s167 = sphi 0, %s165
      %s168 = sphi 0, %s167
      %s182 = sphi 0, %s168
      %s188 = sphi 0, %s190
      %s191 = sphi 0, %s188
      %s192 = sphi 0, %s191
      %s208 = sphi 0, %s192
    $region4: #{attention_forward.1} parent=1 // loop_header_branch
      %19 = sbr.rel (%p17) target = $region8
    $region5: #{attention_forward.1} parent=1 // loop_body
      %s21 = ssub.s32 %s16, 1
      %s22 = ssub.s32 %s16, 2
      %s23 = sadd.s32 %s16, 1
      %s24 = ssub.s32 %s16, %s23
      %p25 = scmp.eq.s32.totalorder %s24, 0
      %s27 = sadd.s32 %s26, 1
      %s28 = scalar_select %p25, %s26, %s27
      %p31 = pneg %p25
      %p32 = scmp.eq.s32.totalorder %s16, 1
      %p33 = por %p31, %p32
      %p34 = scmp.ne.s32.totalorder %s26, %s29
      %p35 = scmp.eq.s32.totalorder %s16, 0
      %p36 = por %p34, %p35
      %p37 = scmp.ne.s32.totalorder %s26, %s29
      %p38 = scmp.eq.s32.totalorder %s21, 1
      %p39 = por %p37, %p38
      %p40 = scmp.ne.s32.totalorder %s29, %s30
      %p41 = scmp.eq.s32.totalorder %s21, 0
      %p42 = por %p40, %p41
      %p43 = scmp.ne.s32.totalorder %s29, %s30
      %p44 = scmp.eq.s32.totalorder %s22, 1
      %p45 = por %p43, %p44
      %p47 = scmp.ne.s32.totalorder %s30, %s46
      %p48 = scmp.eq.s32.totalorder %s22, 0
      %p49 = por %p47, %p48
      %s50 = ssub.s32 %s16, %s23
      %p51 = scmp.eq.s32.totalorder %s50, 0
      %s53 = sadd.s32 %s52, 1
      %s54 = scalar_select %p51, %s52, %s53
      %p57 = pneg %p51
      %p58 = scmp.eq.s32.totalorder %s16, 1
      %p59 = por %p57, %p58
      %p60 = scmp.ne.s32.totalorder %s52, %s55
      %p61 = scmp.eq.s32.totalorder %s16, 0
      %p62 = por %p60, %p61
      %p63 = scmp.ne.s32.totalorder %s52, %s55
      %p64 = scmp.eq.s32.totalorder %s21, 1
      %p65 = por %p63, %p64
      %p66 = scmp.ne.s32.totalorder %s55, %s56
      %p67 = scmp.eq.s32.totalorder %s21, 0
      %p68 = por %p66, %p67
      %p69 = scmp.ne.s32.totalorder %s55, %s56
      %p70 = scmp.eq.s32.totalorder %s22, 1
      %p71 = por %p69, %p70
      %p73 = scmp.ne.s32.totalorder %s56, %s72
      %p74 = scmp.eq.s32.totalorder %s22, 0
      %p75 = por %p73, %p74
      %s76 = ssub.s32 %s16, %s23
      %p77 = scmp.eq.s32.totalorder %s76, 0
      %s79 = sadd.s32 %s78, 1
      %s80 = scalar_select %p77, %s78, %s79
      %p83 = pneg %p77
      %p84 = scmp.eq.s32.totalorder %s16, 1
      %p85 = por %p83, %p84
      %p86 = scmp.ne.s32.totalorder %s78, %s81
      %p87 = scmp.eq.s32.totalorder %s16, 0
      %p88 = por %p86, %p87
      %p89 = scmp.ne.s32.totalorder %s78, %s81
      %p90 = scmp.eq.s32.totalorder %s21, 1
      %p91 = por %p89, %p90
      %p92 = scmp.ne.s32.totalorder %s81, %s82
      %p93 = scmp.eq.s32.totalorder %s21, 0
      %p94 = por %p92, %p93
      %p95 = scmp.ne.s32.totalorder %s81, %s82
      %p96 = scmp.eq.s32.totalorder %s22, 1
      %p97 = por %p95, %p96
      %p99 = scmp.ne.s32.totalorder %s82, %s98
      %p100 = scmp.eq.s32.totalorder %s22, 0
      %p101 = por %p99, %p100
      %s103 = sadd.s32 %s102, 1
      %p106 = scmp.eq.s32.totalorder %s16, 1
      %p107 = scmp.ne.s32.totalorder %s102, %s104
      %p108 = scmp.eq.s32.totalorder %s16, 0
      %p109 = por %p107, %p108
      %p110 = scmp.ne.s32.totalorder %s102, %s104
      %p111 = scmp.eq.s32.totalorder %s21, 1
      %p112 = por %p110, %p111
      %p113 = scmp.ne.s32.totalorder %s104, %s105
      %p114 = scmp.eq.s32.totalorder %s21, 0
      %p115 = por %p113, %p114
      %p116 = scmp.ne.s32.totalorder %s104, %s105
      %p117 = scmp.eq.s32.totalorder %s22, 1
      %p118 = por %p116, %p117
      %p120 = scmp.ne.s32.totalorder %s105, %s119
      %p121 = scmp.eq.s32.totalorder %s22, 0
      %p122 = por %p120, %p121
      %s124 = sadd.s32 %s123, 1
      %p127 = scmp.eq.s32.totalorder %s16, 1
      %p128 = scmp.ne.s32.totalorder %s123, %s125
      %p129 = scmp.eq.s32.totalorder %s16, 0
      %p130 = por %p128, %p129
      %p131 = scmp.ne.s32.totalorder %s123, %s125
      %p132 = scmp.eq.s32.totalorder %s21, 1
      %p133 = por %p131, %p132
      %p134 = scmp.ne.s32.totalorder %s125, %s126
      %p135 = scmp.eq.s32.totalorder %s21, 0
      %p136 = por %p134, %p135
      %p137 = scmp.ne.s32.totalorder %s125, %s126
      %p138 = scmp.eq.s32.totalorder %s22, 1
      %p139 = por %p137, %p138
      %p141 = scmp.ne.s32.totalorder %s126, %s140
      %p142 = scmp.eq.s32.totalorder %s22, 0
      %p143 = por %p141, %p142
      %s145 = sadd.s32 %s144, 1
      %p148 = scmp.eq.s32.totalorder %s16, 1
      %p149 = scmp.ne.s32.totalorder %s144, %s146
      %p150 = scmp.eq.s32.totalorder %s16, 0
      %p151 = por %p149, %p150
      %p152 = scmp.ne.s32.totalorder %s144, %s146
      %p153 = scmp.eq.s32.totalorder %s21, 1
      %p154 = por %p152, %p153
      %p155 = scmp.ne.s32.totalorder %s146, %s147
      %p156 = scmp.eq.s32.totalorder %s21, 0
      %p157 = por %p155, %p156
      %p158 = scmp.ne.s32.totalorder %s146, %s147
      %p159 = scmp.eq.s32.totalorder %s22, 1
      %p160 = por %p158, %p159
      %p162 = scmp.ne.s32.totalorder %s147, %s161
      %p163 = scmp.eq.s32.totalorder %s22, 0
      %p164 = por %p162, %p163
      %s166 = sadd.s32 %s165, 1
      %p169 = scmp.eq.s32.totalorder %s16, 1
      %p170 = scmp.ne.s32.totalorder %s165, %s167
      %p171 = scmp.eq.s32.totalorder %s16, 0
      %p172 = por %p170, %p171
      %p173 = scmp.ne.s32.totalorder %s165, %s167
      %p174 = scmp.eq.s32.totalorder %s21, 1
      %p175 = por %p173, %p174
      %p176 = scmp.ne.s32.totalorder %s167, %s168
      %p177 = scmp.eq.s32.totalorder %s21, 0
      %p178 = por %p176, %p177
      %p179 = scmp.ne.s32.totalorder %s167, %s168
      %p180 = scmp.eq.s32.totalorder %s22, 1
      %p181 = por %p179, %p180
      %p183 = scmp.ne.s32.totalorder %s168, %s182
      %p184 = scmp.eq.s32.totalorder %s22, 0
      %p185 = por %p183, %p184
      %s186 = ssub.s32 %s16, %s23
      %p187 = scmp.eq.s32.totalorder %s186, 0
      %s189 = sadd.s32 %s188, 1
      %s190 = scalar_select %p187, %s188, %s189
      %p193 = pneg %p187
      %p194 = scmp.eq.s32.totalorder %s16, 1
      %p195 = por %p193, %p194
      %p196 = scmp.ne.s32.totalorder %s188, %s191
      %p197 = scmp.eq.s32.totalorder %s16, 0
      %p198 = por %p196, %p197
      %p199 = scmp.ne.s32.totalorder %s188, %s191
      %p200 = scmp.eq.s32.totalorder %s21, 1
      %p201 = por %p199, %p200
      %p202 = scmp.ne.s32.totalorder %s191, %s192
      %p203 = scmp.eq.s32.totalorder %s21, 0
      %p204 = por %p202, %p203
      %p205 = scmp.ne.s32.totalorder %s191, %s192
      %p206 = scmp.eq.s32.totalorder %s22, 1
      %p207 = por %p205, %p206
      %p209 = scmp.ne.s32.totalorder %s192, %s208
      %p210 = scmp.eq.s32.totalorder %s22, 0
      %p211 = por %p209, %p210
      %p212 = scmp.le.s32.totalorder 1, %s16
      %p213 = scmp.lt.s32.totalorder %s16, 3
      %p214 = pnand %p212, %p213
      %p215 = pneg %p214
      // Predicated region
      $region9: #{attention_forward.1} parent=5 // pred_check
        _
      $region10: #{attention_forward.1} parent=5 // pred_check_branch
        %217 = sbr.rel (%p214) target = $region12
      $region11: #{attention_forward.1} parent=5 // pred_region
        %s218 = ssub.s32 %s16, 1
        // Predicated region
        $region13: #{attention_forward.1} parent=11 // pred_check
          %p219 = pneg %p115
        $region14: #{attention_forward.1} parent=11 // pred_check_branch
          %221 = sbr.rel (%p219) target = $region16
        $region15: #{attention_forward.1} parent=11 // pred_region
          _
        $region16: #{attention_forward.1} parent=11 // pred_fallthru
          _
        // Predicated region
        $region17: #{attention_forward.1} parent=11 // pred_check
          %p222 = pneg %p136
        $region18: #{attention_forward.1} parent=11 // pred_check_branch
          %224 = sbr.rel (%p222) target = $region20
        $region19: #{attention_forward.1} parent=11 // pred_region
          _
        $region20: #{attention_forward.1} parent=11 // pred_fallthru
          _
        // Predicated region
        $region21: #{attention_forward.1} parent=11 // pred_check
          %p225 = pneg %p157
        $region22: #{attention_forward.1} parent=11 // pred_check_branch
          %227 = sbr.rel (%p225) target = $region24
        $region23: #{attention_forward.1} parent=11 // pred_region
          _
        $region24: #{attention_forward.1} parent=11 // pred_fallthru
          _
        // Predicated region
        $region25: #{attention_forward.1} parent=11 // pred_check
          %p228 = pneg %p178
        $region26: #{attention_forward.1} parent=11 // pred_check_branch
          %230 = sbr.rel (%p228) target = $region28
        $region27: #{attention_forward.1} parent=11 // pred_region
          _
        $region28: #{attention_forward.1} parent=11 // pred_fallthru
          _
      $region12: #{attention_forward.1} parent=5 // pred_fallthru
        _
      %p231 = scmp.lt.s32.totalorder %s16, 2
      // Predicated region
      $region29: #{attention_forward.1} parent=5 // pred_check
        %p232 = pneg %p231
      $region30: #{attention_forward.1} parent=5 // pred_check_branch
        %234 = sbr.rel (%p232) target = $region32
      $region31: #{attention_forward.1} parent=5 // pred_region
        // Predicated region
        $region33: #{attention_forward.1} parent=31 // pred_check
          %p235 = pneg %p36
        $region34: #{attention_forward.1} parent=31 // pred_check_branch
          %237 = sbr.rel (%p235) target = $region36
        $region35: #{attention_forward.1} parent=31 // pred_region
          %p238 = scmp.lt.s32.totalorder %s16, 1
          %s239 = scalar_select %p238, %s16, 1
          %s240 = smul.addr %s239, 8
          %s241 = scalar_lea.vmem %s0, %s240
        $region36: #{attention_forward.1} parent=31 // pred_fallthru
          _
        // Predicated region
        $region37: #{attention_forward.1} parent=31 // pred_check
          %p242 = pneg %p62
        $region38: #{attention_forward.1} parent=31 // pred_check_branch
          %244 = sbr.rel (%p242) target = $region40
        $region39: #{attention_forward.1} parent=31 // pred_region
          %s245 = sand.u32 %s52, 1
          %s246 = sand.u32 %s52, 1
          %s247 = smul.addr %s246, 1024
          %s248 = scalar_lea.vmem [#allocation2], %s247
          %s249 = smul.addr %s16, 8
          %s250 = scalar_lea.vmem %s1, %s249
          // Predicated region
          $region41: #{attention_forward.1} parent=39 // pred_check
            _
          $region42: #{attention_forward.1} parent=39 // pred_check_branch
            %252 = sbr.rel (0) target = $region44
          $region43: #{attention_forward.1} parent=39 // pred_region
            // Predicated region
            $region45: #{attention_forward.1} parent=43 // pred_check
              _
            $region46: #{attention_forward.1} parent=43 // pred_check_branch
              %254 = sbr.rel (0) target = $region48
            $region47: #{attention_forward.1} parent=43 // pred_region
              // Predicated region
              $region60: #{attention_forward.1} parent=47 // pred_check
                _
              $region61: #{attention_forward.1} parent=47 // pred_check_branch
                %523 = sbr.rel (0) target = $region63
              $region62: #{attention_forward.1} parent=47 // pred_region
                loop: start=0, step=1, limit=1
                $region64: #{attention_forward.1} parent=62 // loop_pre_header
                  _
                $region65: #{attention_forward.1} parent=62 // loop_header
                  %s525 = sphi 0, %s529
                  %p526 = scmp.ge.s32.totalorder %s525, 1
                  %s530 = sphi %s250, %s250
                  %s531 = sphi %s248, %s248
                $region66: #{attention_forward.1} parent=62 // loop_header_branch
                  %528 = sbr.rel (%p526) target = $region70
                $region67: #{attention_forward.1} parent=62 // loop_body
                  %v532 = vld [vmem:[%s530] sm:$0xff]
                  %533 = vst [vmem:[%s531] sm:$0xff] %v532
                  %v534 = vld [vmem:[%s530 + $0x10] sm:$0xff]
                  %535 = vst [vmem:[%s531 + $0x8] sm:$0xff] %v534
                  %v536 = vld [vmem:[%s530 + $0x20] sm:$0xff]
                  %537 = vst [vmem:[%s531 + $0x10] sm:$0xff] %v536
                  %v538 = vld [vmem:[%s530 + $0x30] sm:$0xff]
                  %539 = vst [vmem:[%s531 + $0x18] sm:$0xff] %v538
                  %v540 = vld [vmem:[%s530 + $0x40] sm:$0xff]
                  %541 = vst [vmem:[%s531 + $0x20] sm:$0xff] %v540
                  %v542 = vld [vmem:[%s530 + $0x50] sm:$0xff]
                  %543 = vst [vmem:[%s531 + $0x28] sm:$0xff] %v542
                  %v544 = vld [vmem:[%s530 + $0x60] sm:$0xff]
                  %545 = vst [vmem:[%s531 + $0x30] sm:$0xff] %v544
                  %v546 = vld [vmem:[%s530 + $0x70] sm:$0xff]
                  %547 = vst [vmem:[%s531 + $0x38] sm:$0xff] %v546
                  %v548 = vld [vmem:[%s530 + $0x80] sm:$0xff]
                  %549 = vst [vmem:[%s531 + $0x40] sm:$0xff] %v548
                  %v550 = vld [vmem:[%s530 + $0x90] sm:$0xff]
                  %551 = vst [vmem:[%s531 + $0x48] sm:$0xff] %v550
                  %v552 = vld [vmem:[%s530 + $0xa0] sm:$0xff]
                  %553 = vst [vmem:[%s531 + $0x50] sm:$0xff] %v552
                  %v554 = vld [vmem:[%s530 + $0xb0] sm:$0xff]
                  %555 = vst [vmem:[%s531 + $0x58] sm:$0xff] %v554
                  %v556 = vld [vmem:[%s530 + $0xc0] sm:$0xff]
                  %557 = vst [vmem:[%s531 + $0x60] sm:$0xff] %v556
                  %v558 = vld [vmem:[%s530 + $0xd0] sm:$0xff]
                  %559 = vst [vmem:[%s531 + $0x68] sm:$0xff] %v558
                  %v560 = vld [vmem:[%s530 + $0xe0] sm:$0xff]
                  %561 = vst [vmem:[%s531 + $0x70] sm:$0xff] %v560
                  %v562 = vld [vmem:[%s530 + $0xf0] sm:$0xff]
                  %563 = vst [vmem:[%s531 + $0x78] sm:$0xff] %v562
                  %v564 = vld [vmem:[%s530 + $0x100] sm:$0xff]
                  %565 = vst [vmem:[%s531 + $0x80] sm:$0xff] %v564
                  %v566 = vld [vmem:[%s530 + $0x110] sm:$0xff]
                  %567 = vst [vmem:[%s531 + $0x88] sm:$0xff] %v566
                  %v568 = vld [vmem:[%s530 + $0x120] sm:$0xff]
                  %569 = vst [vmem:[%s531 + $0x90] sm:$0xff] %v568
                  %v570 = vld [vmem:[%s530 + $0x130] sm:$0xff]
                  %571 = vst [vmem:[%s531 + $0x98] sm:$0xff] %v570
                  %v572 = vld [vmem:[%s530 + $0x140] sm:$0xff]
                  %573 = vst [vmem:[%s531 + $0xa0] sm:$0xff] %v572
                  %v574 = vld [vmem:[%s530 + $0x150] sm:$0xff]
                  %575 = vst [vmem:[%s531 + $0xa8] sm:$0xff] %v574
                  %v576 = vld [vmem:[%s530 + $0x160] sm:$0xff]
                  %577 = vst [vmem:[%s531 + $0xb0] sm:$0xff] %v576
                  %v578 = vld [vmem:[%s530 + $0x170] sm:$0xff]
                  %579 = vst [vmem:[%s531 + $0xb8] sm:$0xff] %v578
                  %v580 = vld [vmem:[%s530 + $0x180] sm:$0xff]
                  %581 = vst [vmem:[%s531 + $0xc0] sm:$0xff] %v580
                  %v582 = vld [vmem:[%s530 + $0x190] sm:$0xff]
                  %583 = vst [vmem:[%s531 + $0xc8] sm:$0xff] %v582
                  %v584 = vld [vmem:[%s530 + $0x1a0] sm:$0xff]
                  %585 = vst [vmem:[%s531 + $0xd0] sm:$0xff] %v584
                  %v586 = vld [vmem:[%s530 + $0x1b0] sm:$0xff]
                  %587 = vst [vmem:[%s531 + $0xd8] sm:$0xff] %v586
                  %v588 = vld [vmem:[%s530 + $0x1c0] sm:$0xff]
                  %589 = vst [vmem:[%s531 + $0xe0] sm:$0xff] %v588
                  %v590 = vld [vmem:[%s530 + $0x1d0] sm:$0xff]
                  %591 = vst [vmem:[%s531 + $0xe8] sm:$0xff] %v590
                  %v592 = vld [vmem:[%s530 + $0x1e0] sm:$0xff]
                  %593 = vst [vmem:[%s531 + $0xf0] sm:$0xff] %v592
                  %v594 = vld [vmem:[%s530 + $0x1f0] sm:$0xff]
                  %595 = vst [vmem:[%s531 + $0xf8] sm:$0xff] %v594
                  %v596 = vld [vmem:[%s530 + $0x200] sm:$0xff]
                  %597 = vst [vmem:[%s531 + $0x100] sm:$0xff] %v596
                  %v598 = vld [vmem:[%s530 + $0x210] sm:$0xff]
                  %599 = vst [vmem:[%s531 + $0x108] sm:$0xff] %v598
                  %v600 = vld [vmem:[%s530 + $0x220] sm:$0xff]
                  %601 = vst [vmem:[%s531 + $0x110] sm:$0xff] %v600
                  %v602 = vld [vmem:[%s530 + $0x230] sm:$0xff]
                  %603 = vst [vmem:[%s531 + $0x118] sm:$0xff] %v602
                  %v604 = vld [vmem:[%s530 + $0x240] sm:$0xff]
                  %605 = vst [vmem:[%s531 + $0x120] sm:$0xff] %v604
                  %v606 = vld [vmem:[%s530 + $0x250] sm:$0xff]
                  %607 = vst [vmem:[%s531 + $0x128] sm:$0xff] %v606
                  %v608 = vld [vmem:[%s530 + $0x260] sm:$0xff]
                  %609 = vst [vmem:[%s531 + $0x130] sm:$0xff] %v608
                  %v610 = vld [vmem:[%s530 + $0x270] sm:$0xff]
                  %611 = vst [vmem:[%s531 + $0x138] sm:$0xff] %v610
                  %v612 = vld [vmem:[%s530 + $0x280] sm:$0xff]
                  %613 = vst [vmem:[%s531 + $0x140] sm:$0xff] %v612
                  %v614 = vld [vmem:[%s530 + $0x290] sm:$0xff]
                  %615 = vst [vmem:[%s531 + $0x148] sm:$0xff] %v614
                  %v616 = vld [vmem:[%s530 + $0x2a0] sm:$0xff]
                  %617 = vst [vmem:[%s531 + $0x150] sm:$0xff] %v616
                  %v618 = vld [vmem:[%s530 + $0x2b0] sm:$0xff]
                  %619 = vst [vmem:[%s531 + $0x158] sm:$0xff] %v618
                  %v620 = vld [vmem:[%s530 + $0x2c0] sm:$0xff]
                  %621 = vst [vmem:[%s531 + $0x160] sm:$0xff] %v620
                  %v622 = vld [vmem:[%s530 + $0x2d0] sm:$0xff]
                  %623 = vst [vmem:[%s531 + $0x168] sm:$0xff] %v622
                  %v624 = vld [vmem:[%s530 + $0x2e0] sm:$0xff]
                  %625 = vst [vmem:[%s531 + $0x170] sm:$0xff] %v624
                  %v626 = vld [vmem:[%s530 + $0x2f0] sm:$0xff]
                  %627 = vst [vmem:[%s531 + $0x178] sm:$0xff] %v626
                  %v628 = vld [vmem:[%s530 + $0x300] sm:$0xff]
                  %629 = vst [vmem:[%s531 + $0x180] sm:$0xff] %v628
                  %v630 = vld [vmem:[%s530 + $0x310] sm:$0xff]
                  %631 = vst [vmem:[%s531 + $0x188] sm:$0xff] %v630
                  %v632 = vld [vmem:[%s530 + $0x320] sm:$0xff]
                  %633 = vst [vmem:[%s531 + $0x190] sm:$0xff] %v632
                  %v634 = vld [vmem:[%s530 + $0x330] sm:$0xff]
                  %635 = vst [vmem:[%s531 + $0x198] sm:$0xff] %v634
                  %v636 = vld [vmem:[%s530 + $0x340] sm:$0xff]
                  %637 = vst [vmem:[%s531 + $0x1a0] sm:$0xff] %v636
                  %v638 = vld [vmem:[%s530 + $0x350] sm:$0xff]
                  %639 = vst [vmem:[%s531 + $0x1a8] sm:$0xff] %v638
                  %v640 = vld [vmem:[%s530 + $0x360] sm:$0xff]
                  %641 = vst [vmem:[%s531 + $0x1b0] sm:$0xff] %v640
                  %v642 = vld [vmem:[%s530 + $0x370] sm:$0xff]
                  %643 = vst [vmem:[%s531 + $0x1b8] sm:$0xff] %v642
                  %v644 = vld [vmem:[%s530 + $0x380] sm:$0xff]
                  %645 = vst [vmem:[%s531 + $0x1c0] sm:$0xff] %v644
                  %v646 = vld [vmem:[%s530 + $0x390] sm:$0xff]
                  %647 = vst [vmem:[%s531 + $0x1c8] sm:$0xff] %v646
                  %v648 = vld [vmem:[%s530 + $0x3a0] sm:$0xff]
                  %649 = vst [vmem:[%s531 + $0x1d0] sm:$0xff] %v648
                  %v650 = vld [vmem:[%s530 + $0x3b0] sm:$0xff]
                  %651 = vst [vmem:[%s531 + $0x1d8] sm:$0xff] %v650
                  %v652 = vld [vmem:[%s530 + $0x3c0] sm:$0xff]
                  %653 = vst [vmem:[%s531 + $0x1e0] sm:$0xff] %v652
                  %v654 = vld [vmem:[%s530 + $0x3d0] sm:$0xff]
                  %655 = vst [vmem:[%s531 + $0x1e8] sm:$0xff] %v654
                  %v656 = vld [vmem:[%s530 + $0x3e0] sm:$0xff]
                  %657 = vst [vmem:[%s531 + $0x1f0] sm:$0xff] %v656
                  %v658 = vld [vmem:[%s530 + $0x3f0] sm:$0xff]
                  %659 = vst [vmem:[%s531 + $0x1f8] sm:$0xff] %v658
                  %v660 = vld [vmem:[%s530 + $0x400] sm:$0xff]
                  %661 = vst [vmem:[%s531 + $0x200] sm:$0xff] %v660
                  %v662 = vld [vmem:[%s530 + $0x410] sm:$0xff]
                  %663 = vst [vmem:[%s531 + $0x208] sm:$0xff] %v662
                  %v664 = vld [vmem:[%s530 + $0x420] sm:$0xff]
                  %665 = vst [vmem:[%s531 + $0x210] sm:$0xff] %v664
                  %v666 = vld [vmem:[%s530 + $0x430] sm:$0xff]
                  %667 = vst [vmem:[%s531 + $0x218] sm:$0xff] %v666
                  %v668 = vld [vmem:[%s530 + $0x440] sm:$0xff]
                  %669 = vst [vmem:[%s531 + $0x220] sm:$0xff] %v668
                  %v670 = vld [vmem:[%s530 + $0x450] sm:$0xff]
                  %671 = vst [vmem:[%s531 + $0x228] sm:$0xff] %v670
                  %v672 = vld [vmem:[%s530 + $0x460] sm:$0xff]
                  %673 = vst [vmem:[%s531 + $0x230] sm:$0xff] %v672
                  %v674 = vld [vmem:[%s530 + $0x470] sm:$0xff]
                  %675 = vst [vmem:[%s531 + $0x238] sm:$0xff] %v674
                  %v676 = vld [vmem:[%s530 + $0x480] sm:$0xff]
                  %677 = vst [vmem:[%s531 + $0x240] sm:$0xff] %v676
                  %v678 = vld [vmem:[%s530 + $0x490] sm:$0xff]
                  %679 = vst [vmem:[%s531 + $0x248] sm:$0xff] %v678
                  %v680 = vld [vmem:[%s530 + $0x4a0] sm:$0xff]
                  %681 = vst [vmem:[%s531 + $0x250] sm:$0xff] %v680
                  %v682 = vld [vmem:[%s530 + $0x4b0] sm:$0xff]
                  %683 = vst [vmem:[%s531 + $0x258] sm:$0xff] %v682
                  %v684 = vld [vmem:[%s530 + $0x4c0] sm:$0xff]
                  %685 = vst [vmem:[%s531 + $0x260] sm:$0xff] %v684
                  %v686 = vld [vmem:[%s530 + $0x4d0] sm:$0xff]
                  %687 = vst [vmem:[%s531 + $0x268] sm:$0xff] %v686
                  %v688 = vld [vmem:[%s530 + $0x4e0] sm:$0xff]
                  %689 = vst [vmem:[%s531 + $0x270] sm:$0xff] %v688
                  %v690 = vld [vmem:[%s530 + $0x4f0] sm:$0xff]
                  %691 = vst [vmem:[%s531 + $0x278] sm:$0xff] %v690
                  %v692 = vld [vmem:[%s530 + $0x500] sm:$0xff]
                  %693 = vst [vmem:[%s531 + $0x280] sm:$0xff] %v692
                  %v694 = vld [vmem:[%s530 + $0x510] sm:$0xff]
                  %695 = vst [vmem:[%s531 + $0x288] sm:$0xff] %v694
                  %v696 = vld [vmem:[%s530 + $0x520] sm:$0xff]
                  %697 = vst [vmem:[%s531 + $0x290] sm:$0xff] %v696
                  %v698 = vld [vmem:[%s530 + $0x530] sm:$0xff]
                  %699 = vst [vmem:[%s531 + $0x298] sm:$0xff] %v698
                  %v700 = vld [vmem:[%s530 + $0x540] sm:$0xff]
                  %701 = vst [vmem:[%s531 + $0x2a0] sm:$0xff] %v700
                  %v702 = vld [vmem:[%s530 + $0x550] sm:$0xff]
                  %703 = vst [vmem:[%s531 + $0x2a8] sm:$0xff] %v702
                  %v704 = vld [vmem:[%s530 + $0x560] sm:$0xff]
                  %705 = vst [vmem:[%s531 + $0x2b0] sm:$0xff] %v704
                  %v706 = vld [vmem:[%s530 + $0x570] sm:$0xff]
                  %707 = vst [vmem:[%s531 + $0x2b8] sm:$0xff] %v706
                  %v708 = vld [vmem:[%s530 + $0x580] sm:$0xff]
                  %709 = vst [vmem:[%s531 + $0x2c0] sm:$0xff] %v708
                  %v710 = vld [vmem:[%s530 + $0x590] sm:$0xff]
                  %711 = vst [vmem:[%s531 + $0x2c8] sm:$0xff] %v710
                  %v712 = vld [vmem:[%s530 + $0x5a0] sm:$0xff]
                  %713 = vst [vmem:[%s531 + $0x2d0] sm:$0xff] %v712
                  %v714 = vld [vmem:[%s530 + $0x5b0] sm:$0xff]
                  %715 = vst [vmem:[%s531 + $0x2d8] sm:$0xff] %v714
                  %v716 = vld [vmem:[%s530 + $0x5c0] sm:$0xff]
                  %717 = vst [vmem:[%s531 + $0x2e0] sm:$0xff] %v716
                  %v718 = vld [vmem:[%s530 + $0x5d0] sm:$0xff]
                  %719 = vst [vmem:[%s531 + $0x2e8] sm:$0xff] %v718
                  %v720 = vld [vmem:[%s530 + $0x5e0] sm:$0xff]
                  %721 = vst [vmem:[%s531 + $0x2f0] sm:$0xff] %v720
                  %v722 = vld [vmem:[%s530 + $0x5f0] sm:$0xff]
                  %723 = vst [vmem:[%s531 + $0x2f8] sm:$0xff] %v722
                  %v724 = vld [vmem:[%s530 + $0x600] sm:$0xff]
                  %725 = vst [vmem:[%s531 + $0x300] sm:$0xff] %v724
                  %v726 = vld [vmem:[%s530 + $0x610] sm:$0xff]
                  %727 = vst [vmem:[%s531 + $0x308] sm:$0xff] %v726
                  %v728 = vld [vmem:[%s530 + $0x620] sm:$0xff]
                  %729 = vst [vmem:[%s531 + $0x310] sm:$0xff] %v728
                  %v730 = vld [vmem:[%s530 + $0x630] sm:$0xff]
                  %731 = vst [vmem:[%s531 + $0x318] sm:$0xff] %v730
                  %v732 = vld [vmem:[%s530 + $0x640] sm:$0xff]
                  %733 = vst [vmem:[%s531 + $0x320] sm:$0xff] %v732
                  %v734 = vld [vmem:[%s530 + $0x650] sm:$0xff]
                  %735 = vst [vmem:[%s531 + $0x328] sm:$0xff] %v734
                  %v736 = vld [vmem:[%s530 + $0x660] sm:$0xff]
                  %737 = vst [vmem:[%s531 + $0x330] sm:$0xff] %v736
                  %v738 = vld [vmem:[%s530 + $0x670] sm:$0xff]
                  %739 = vst [vmem:[%s531 + $0x338] sm:$0xff] %v738
                  %v740 = vld [vmem:[%s530 + $0x680] sm:$0xff]
                  %741 = vst [vmem:[%s531 + $0x340] sm:$0xff] %v740
                  %v742 = vld [vmem:[%s530 + $0x690] sm:$0xff]
                  %743 = vst [vmem:[%s531 + $0x348] sm:$0xff] %v742
                  %v744 = vld [vmem:[%s530 + $0x6a0] sm:$0xff]
                  %745 = vst [vmem:[%s531 + $0x350] sm:$0xff] %v744
                  %v746 = vld [vmem:[%s530 + $0x6b0] sm:$0xff]
                  %747 = vst [vmem:[%s531 + $0x358] sm:$0xff] %v746
                  %v748 = vld [vmem:[%s530 + $0x6c0] sm:$0xff]
                  %749 = vst [vmem:[%s531 + $0x360] sm:$0xff] %v748
                  %v750 = vld [vmem:[%s530 + $0x6d0] sm:$0xff]
                  %751 = vst [vmem:[%s531 + $0x368] sm:$0xff] %v750
                  %v752 = vld [vmem:[%s530 + $0x6e0] sm:$0xff]
                  %753 = vst [vmem:[%s531 + $0x370] sm:$0xff] %v752
                  %v754 = vld [vmem:[%s530 + $0x6f0] sm:$0xff]
                  %755 = vst [vmem:[%s531 + $0x378] sm:$0xff] %v754
                  %v756 = vld [vmem:[%s530 + $0x700] sm:$0xff]
                  %757 = vst [vmem:[%s531 + $0x380] sm:$0xff] %v756
                  %v758 = vld [vmem:[%s530 + $0x710] sm:$0xff]
                  %759 = vst [vmem:[%s531 + $0x388] sm:$0xff] %v758
                  %v760 = vld [vmem:[%s530 + $0x720] sm:$0xff]
                  %761 = vst [vmem:[%s531 + $0x390] sm:$0xff] %v760
                  %v762 = vld [vmem:[%s530 + $0x730] sm:$0xff]
                  %763 = vst [vmem:[%s531 + $0x398] sm:$0xff] %v762
                  %v764 = vld [vmem:[%s530 + $0x740] sm:$0xff]
                  %765 = vst [vmem:[%s531 + $0x3a0] sm:$0xff] %v764
                  %v766 = vld [vmem:[%s530 + $0x750] sm:$0xff]
                  %767 = vst [vmem:[%s531 + $0x3a8] sm:$0xff] %v766
                  %v768 = vld [vmem:[%s530 + $0x760] sm:$0xff]
                  %769 = vst [vmem:[%s531 + $0x3b0] sm:$0xff] %v768
                  %v770 = vld [vmem:[%s530 + $0x770] sm:$0xff]
                  %771 = vst [vmem:[%s531 + $0x3b8] sm:$0xff] %v770
                  %v772 = vld [vmem:[%s530 + $0x780] sm:$0xff]
                  %773 = vst [vmem:[%s531 + $0x3c0] sm:$0xff] %v772
                  %v774 = vld [vmem:[%s530 + $0x790] sm:$0xff]
                  %775 = vst [vmem:[%s531 + $0x3c8] sm:$0xff] %v774
                  %v776 = vld [vmem:[%s530 + $0x7a0] sm:$0xff]
                  %777 = vst [vmem:[%s531 + $0x3d0] sm:$0xff] %v776
                  %v778 = vld [vmem:[%s530 + $0x7b0] sm:$0xff]
                  %779 = vst [vmem:[%s531 + $0x3d8] sm:$0xff] %v778
                  %v780 = vld [vmem:[%s530 + $0x7c0] sm:$0xff]
                  %781 = vst [vmem:[%s531 + $0x3e0] sm:$0xff] %v780
                  %v782 = vld [vmem:[%s530 + $0x7d0] sm:$0xff]
                  %783 = vst [vmem:[%s531 + $0x3e8] sm:$0xff] %v782
                  %v784 = vld [vmem:[%s530 + $0x7e0] sm:$0xff]
                  %785 = vst [vmem:[%s531 + $0x3f0] sm:$0xff] %v784
                  %v786 = vld [vmem:[%s530 + $0x7f0] sm:$0xff]
                  %787 = vst [vmem:[%s531 + $0x3f8] sm:$0xff] %v786
                $region68: #{attention_forward.1} parent=62 // loop_footer
                  %s529 = sadd.s32 1, %s525
                $region69: #{attention_forward.1} parent=62 // loop_footer_branch
                  %524 = sbr.rel target = $region65
                $region70: #{attention_forward.1} parent=62 // loop_exit
                  _
              $region63: #{attention_forward.1} parent=47 // pred_fallthru
                _
              // Predicated region
              $region71: #{attention_forward.1} parent=47 // pred_check
                _
              $region72: #{attention_forward.1} parent=47 // pred_check_branch
                %789 = sbr.rel target = $region74
              $region73: #{attention_forward.1} parent=47 // pred_region
                _
              $region74: #{attention_forward.1} parent=47 // pred_fallthru
                _
            $region48: #{attention_forward.1} parent=43 // pred_fallthru
              _
            // Predicated region
            $region49: #{attention_forward.1} parent=43 // pred_check
              _
            $region50: #{attention_forward.1} parent=43 // pred_check_branch
              %256 = sbr.rel target = $region52
            $region51: #{attention_forward.1} parent=43 // pred_region
              loop: start=0, step=1, limit=1
              $region53: #{attention_forward.1} parent=51 // loop_pre_header
                _
              $region54: #{attention_forward.1} parent=51 // loop_header
                %s259 = sphi 0, %s263
                %p260 = scmp.ge.s32.totalorder %s259, 1
                %s264 = sphi %s250, %s250
                %s265 = sphi %s248, %s248
              $region55: #{attention_forward.1} parent=51 // loop_header_branch
                %262 = sbr.rel (%p260) target = $region59
              $region56: #{attention_forward.1} parent=51 // loop_body
                %v266 = vld [vmem:[%s264] sm:$0xff]
                %267 = vst [vmem:[%s265] sm:$0xff] %v266
                %v268 = vld [vmem:[%s264 + $0x10] sm:$0xff]
                %269 = vst [vmem:[%s265 + $0x8] sm:$0xff] %v268
                %v270 = vld [vmem:[%s264 + $0x20] sm:$0xff]
                %271 = vst [vmem:[%s265 + $0x10] sm:$0xff] %v270
                %v272 = vld [vmem:[%s264 + $0x30] sm:$0xff]
                %273 = vst [vmem:[%s265 + $0x18] sm:$0xff] %v272
                %v274 = vld [vmem:[%s264 + $0x40] sm:$0xff]
                %275 = vst [vmem:[%s265 + $0x20] sm:$0xff] %v274
                %v276 = vld [vmem:[%s264 + $0x50] sm:$0xff]
                %277 = vst [vmem:[%s265 + $0x28] sm:$0xff] %v276
                %v278 = vld [vmem:[%s264 + $0x60] sm:$0xff]
                %279 = vst [vmem:[%s265 + $0x30] sm:$0xff] %v278
                %v280 = vld [vmem:[%s264 + $0x70] sm:$0xff]
                %281 = vst [vmem:[%s265 + $0x38] sm:$0xff] %v280
                %v282 = vld [vmem:[%s264 + $0x80] sm:$0xff]
                %283 = vst [vmem:[%s265 + $0x40] sm:$0xff] %v282
                %v284 = vld [vmem:[%s264 + $0x90] sm:$0xff]
                %285 = vst [vmem:[%s265 + $0x48] sm:$0xff] %v284
                %v286 = vld [vmem:[%s264 + $0xa0] sm:$0xff]
                %287 = vst [vmem:[%s265 + $0x50] sm:$0xff] %v286
                %v288 = vld [vmem:[%s264 + $0xb0] sm:$0xff]
                %289 = vst [vmem:[%s265 + $0x58] sm:$0xff] %v288
                %v290 = vld [vmem:[%s264 + $0xc0] sm:$0xff]
                %291 = vst [vmem:[%s265 + $0x60] sm:$0xff] %v290
                %v292 = vld [vmem:[%s264 + $0xd0] sm:$0xff]
                %293 = vst [vmem:[%s265 + $0x68] sm:$0xff] %v292
                %v294 = vld [vmem:[%s264 + $0xe0] sm:$0xff]
                %295 = vst [vmem:[%s265 + $0x70] sm:$0xff] %v294
                %v296 = vld [vmem:[%s264 + $0xf0] sm:$0xff]
                %297 = vst [vmem:[%s265 + $0x78] sm:$0xff] %v296
                %v298 = vld [vmem:[%s264 + $0x100] sm:$0xff]
                %299 = vst [vmem:[%s265 + $0x80] sm:$0xff] %v298
                %v300 = vld [vmem:[%s264 + $0x110] sm:$0xff]
                %301 = vst [vmem:[%s265 + $0x88] sm:$0xff] %v300
                %v302 = vld [vmem:[%s264 + $0x120] sm:$0xff]
                %303 = vst [vmem:[%s265 + $0x90] sm:$0xff] %v302
                %v304 = vld [vmem:[%s264 + $0x130] sm:$0xff]
                %305 = vst [vmem:[%s265 + $0x98] sm:$0xff] %v304
                %v306 = vld [vmem:[%s264 + $0x140] sm:$0xff]
                %307 = vst [vmem:[%s265 + $0xa0] sm:$0xff] %v306
                %v308 = vld [vmem:[%s264 + $0x150] sm:$0xff]
                %309 = vst [vmem:[%s265 + $0xa8] sm:$0xff] %v308
                %v310 = vld [vmem:[%s264 + $0x160] sm:$0xff]
                %311 = vst [vmem:[%s265 + $0xb0] sm:$0xff] %v310
                %v312 = vld [vmem:[%s264 + $0x170] sm:$0xff]
                %313 = vst [vmem:[%s265 + $0xb8] sm:$0xff] %v312
                %v314 = vld [vmem:[%s264 + $0x180] sm:$0xff]
                %315 = vst [vmem:[%s265 + $0xc0] sm:$0xff] %v314
                %v316 = vld [vmem:[%s264 + $0x190] sm:$0xff]
                %317 = vst [vmem:[%s265 + $0xc8] sm:$0xff] %v316
                %v318 = vld [vmem:[%s264 + $0x1a0] sm:$0xff]
                %319 = vst [vmem:[%s265 + $0xd0] sm:$0xff] %v318
                %v320 = vld [vmem:[%s264 + $0x1b0] sm:$0xff]
                %321 = vst [vmem:[%s265 + $0xd8] sm:$0xff] %v320
                %v322 = vld [vmem:[%s264 + $0x1c0] sm:$0xff]
                %323 = vst [vmem:[%s265 + $0xe0] sm:$0xff] %v322
                %v324 = vld [vmem:[%s264 + $0x1d0] sm:$0xff]
                %325 = vst [vmem:[%s265 + $0xe8] sm:$0xff] %v324
                %v326 = vld [vmem:[%s264 + $0x1e0] sm:$0xff]
                %327 = vst [vmem:[%s265 + $0xf0] sm:$0xff] %v326
                %v328 = vld [vmem:[%s264 + $0x1f0] sm:$0xff]
                %329 = vst [vmem:[%s265 + $0xf8] sm:$0xff] %v328
                %v330 = vld [vmem:[%s264 + $0x200] sm:$0xff]
                %331 = vst [vmem:[%s265 + $0x100] sm:$0xff] %v330
                %v332 = vld [vmem:[%s264 + $0x210] sm:$0xff]
                %333 = vst [vmem:[%s265 + $0x108] sm:$0xff] %v332
                %v334 = vld [vmem:[%s264 + $0x220] sm:$0xff]
                %335 = vst [vmem:[%s265 + $0x110] sm:$0xff] %v334
                %v336 = vld [vmem:[%s264 + $0x230] sm:$0xff]
                %337 = vst [vmem:[%s265 + $0x118] sm:$0xff] %v336
                %v338 = vld [vmem:[%s264 + $0x240] sm:$0xff]
                %339 = vst [vmem:[%s265 + $0x120] sm:$0xff] %v338
                %v340 = vld [vmem:[%s264 + $0x250] sm:$0xff]
                %341 = vst [vmem:[%s265 + $0x128] sm:$0xff] %v340
                %v342 = vld [vmem:[%s264 + $0x260] sm:$0xff]
                %343 = vst [vmem:[%s265 + $0x130] sm:$0xff] %v342
                %v344 = vld [vmem:[%s264 + $0x270] sm:$0xff]
                %345 = vst [vmem:[%s265 + $0x138] sm:$0xff] %v344
                %v346 = vld [vmem:[%s264 + $0x280] sm:$0xff]
                %347 = vst [vmem:[%s265 + $0x140] sm:$0xff] %v346
                %v348 = vld [vmem:[%s264 + $0x290] sm:$0xff]
                %349 = vst [vmem:[%s265 + $0x148] sm:$0xff] %v348
                %v350 = vld [vmem:[%s264 + $0x2a0] sm:$0xff]
                %351 = vst [vmem:[%s265 + $0x150] sm:$0xff] %v350
                %v352 = vld [vmem:[%s264 + $0x2b0] sm:$0xff]
                %353 = vst [vmem:[%s265 + $0x158] sm:$0xff] %v352
                %v354 = vld [vmem:[%s264 + $0x2c0] sm:$0xff]
                %355 = vst [vmem:[%s265 + $0x160] sm:$0xff] %v354
                %v356 = vld [vmem:[%s264 + $0x2d0] sm:$0xff]
                %357 = vst [vmem:[%s265 + $0x168] sm:$0xff] %v356
                %v358 = vld [vmem:[%s264 + $0x2e0] sm:$0xff]
                %359 = vst [vmem:[%s265 + $0x170] sm:$0xff] %v358
                %v360 = vld [vmem:[%s264 + $0x2f0] sm:$0xff]
                %361 = vst [vmem:[%s265 + $0x178] sm:$0xff] %v360
                %v362 = vld [vmem:[%s264 + $0x300] sm:$0xff]
                %363 = vst [vmem:[%s265 + $0x180] sm:$0xff] %v362
                %v364 = vld [vmem:[%s264 + $0x310] sm:$0xff]
                %365 = vst [vmem:[%s265 + $0x188] sm:$0xff] %v364
                %v366 = vld [vmem:[%s264 + $0x320] sm:$0xff]
                %367 = vst [vmem:[%s265 + $0x190] sm:$0xff] %v366
                %v368 = vld [vmem:[%s264 + $0x330] sm:$0xff]
                %369 = vst [vmem:[%s265 + $0x198] sm:$0xff] %v368
                %v370 = vld [vmem:[%s264 + $0x340] sm:$0xff]
                %371 = vst [vmem:[%s265 + $0x1a0] sm:$0xff] %v370
                %v372 = vld [vmem:[%s264 + $0x350] sm:$0xff]
                %373 = vst [vmem:[%s265 + $0x1a8] sm:$0xff] %v372
                %v374 = vld [vmem:[%s264 + $0x360] sm:$0xff]
                %375 = vst [vmem:[%s265 + $0x1b0] sm:$0xff] %v374
                %v376 = vld [vmem:[%s264 + $0x370] sm:$0xff]
                %377 = vst [vmem:[%s265 + $0x1b8] sm:$0xff] %v376
                %v378 = vld [vmem:[%s264 + $0x380] sm:$0xff]
                %379 = vst [vmem:[%s265 + $0x1c0] sm:$0xff] %v378
                %v380 = vld [vmem:[%s264 + $0x390] sm:$0xff]
                %381 = vst [vmem:[%s265 + $0x1c8] sm:$0xff] %v380
                %v382 = vld [vmem:[%s264 + $0x3a0] sm:$0xff]
                %383 = vst [vmem:[%s265 + $0x1d0] sm:$0xff] %v382
                %v384 = vld [vmem:[%s264 + $0x3b0] sm:$0xff]
                %385 = vst [vmem:[%s265 + $0x1d8] sm:$0xff] %v384
                %v386 = vld [vmem:[%s264 + $0x3c0] sm:$0xff]
                %387 = vst [vmem:[%s265 + $0x1e0] sm:$0xff] %v386
                %v388 = vld [vmem:[%s264 + $0x3d0] sm:$0xff]
                %389 = vst [vmem:[%s265 + $0x1e8] sm:$0xff] %v388
                %v390 = vld [vmem:[%s264 + $0x3e0] sm:$0xff]
                %391 = vst [vmem:[%s265 + $0x1f0] sm:$0xff] %v390
                %v392 = vld [vmem:[%s264 + $0x3f0] sm:$0xff]
                %393 = vst [vmem:[%s265 + $0x1f8] sm:$0xff] %v392
                %v394 = vld [vmem:[%s264 + $0x400] sm:$0xff]
                %395 = vst [vmem:[%s265 + $0x200] sm:$0xff] %v394
                %v396 = vld [vmem:[%s264 + $0x410] sm:$0xff]
                %397 = vst [vmem:[%s265 + $0x208] sm:$0xff] %v396
                %v398 = vld [vmem:[%s264 + $0x420] sm:$0xff]
                %399 = vst [vmem:[%s265 + $0x210] sm:$0xff] %v398
                %v400 = vld [vmem:[%s264 + $0x430] sm:$0xff]
                %401 = vst [vmem:[%s265 + $0x218] sm:$0xff] %v400
                %v402 = vld [vmem:[%s264 + $0x440] sm:$0xff]
                %403 = vst [vmem:[%s265 + $0x220] sm:$0xff] %v402
                %v404 = vld [vmem:[%s264 + $0x450] sm:$0xff]
                %405 = vst [vmem:[%s265 + $0x228] sm:$0xff] %v404
                %v406 = vld [vmem:[%s264 + $0x460] sm:$0xff]
                %407 = vst [vmem:[%s265 + $0x230] sm:$0xff] %v406
                %v408 = vld [vmem:[%s264 + $0x470] sm:$0xff]
                %409 = vst [vmem:[%s265 + $0x238] sm:$0xff] %v408
                %v410 = vld [vmem:[%s264 + $0x480] sm:$0xff]
                %411 = vst [vmem:[%s265 + $0x240] sm:$0xff] %v410
                %v412 = vld [vmem:[%s264 + $0x490] sm:$0xff]
                %413 = vst [vmem:[%s265 + $0x248] sm:$0xff] %v412
                %v414 = vld [vmem:[%s264 + $0x4a0] sm:$0xff]
                %415 = vst [vmem:[%s265 + $0x250] sm:$0xff] %v414
                %v416 = vld [vmem:[%s264 + $0x4b0] sm:$0xff]
                %417 = vst [vmem:[%s265 + $0x258] sm:$0xff] %v416
                %v418 = vld [vmem:[%s264 + $0x4c0] sm:$0xff]
                %419 = vst [vmem:[%s265 + $0x260] sm:$0xff] %v418
                %v420 = vld [vmem:[%s264 + $0x4d0] sm:$0xff]
                %421 = vst [vmem:[%s265 + $0x268] sm:$0xff] %v420
                %v422 = vld [vmem:[%s264 + $0x4e0] sm:$0xff]
                %423 = vst [vmem:[%s265 + $0x270] sm:$0xff] %v422
                %v424 = vld [vmem:[%s264 + $0x4f0] sm:$0xff]
                %425 = vst [vmem:[%s265 + $0x278] sm:$0xff] %v424
                %v426 = vld [vmem:[%s264 + $0x500] sm:$0xff]
                %427 = vst [vmem:[%s265 + $0x280] sm:$0xff] %v426
                %v428 = vld [vmem:[%s264 + $0x510] sm:$0xff]
                %429 = vst [vmem:[%s265 + $0x288] sm:$0xff] %v428
                %v430 = vld [vmem:[%s264 + $0x520] sm:$0xff]
                %431 = vst [vmem:[%s265 + $0x290] sm:$0xff] %v430
                %v432 = vld [vmem:[%s264 + $0x530] sm:$0xff]
                %433 = vst [vmem:[%s265 + $0x298] sm:$0xff] %v432
                %v434 = vld [vmem:[%s264 + $0x540] sm:$0xff]
                %435 = vst [vmem:[%s265 + $0x2a0] sm:$0xff] %v434
                %v436 = vld [vmem:[%s264 + $0x550] sm:$0xff]
                %437 = vst [vmem:[%s265 + $0x2a8] sm:$0xff] %v436
                %v438 = vld [vmem:[%s264 + $0x560] sm:$0xff]
                %439 = vst [vmem:[%s265 + $0x2b0] sm:$0xff] %v438
                %v440 = vld [vmem:[%s264 + $0x570] sm:$0xff]
                %441 = vst [vmem:[%s265 + $0x2b8] sm:$0xff] %v440
                %v442 = vld [vmem:[%s264 + $0x580] sm:$0xff]
                %443 = vst [vmem:[%s265 + $0x2c0] sm:$0xff] %v442
                %v444 = vld [vmem:[%s264 + $0x590] sm:$0xff]
                %445 = vst [vmem:[%s265 + $0x2c8] sm:$0xff] %v444
                %v446 = vld [vmem:[%s264 + $0x5a0] sm:$0xff]
                %447 = vst [vmem:[%s265 + $0x2d0] sm:$0xff] %v446
                %v448 = vld [vmem:[%s264 + $0x5b0] sm:$0xff]
                %449 = vst [vmem:[%s265 + $0x2d8] sm:$0xff] %v448
                %v450 = vld [vmem:[%s264 + $0x5c0] sm:$0xff]
                %451 = vst [vmem:[%s265 + $0x2e0] sm:$0xff] %v450
                %v452 = vld [vmem:[%s264 + $0x5d0] sm:$0xff]
                %453 = vst [vmem:[%s265 + $0x2e8] sm:$0xff] %v452
                %v454 = vld [vmem:[%s264 + $0x5e0] sm:$0xff]
                %455 = vst [vmem:[%s265 + $0x2f0] sm:$0xff] %v454
                %v456 = vld [vmem:[%s264 + $0x5f0] sm:$0xff]
                %457 = vst [vmem:[%s265 + $0x2f8] sm:$0xff] %v456
                %v458 = vld [vmem:[%s264 + $0x600] sm:$0xff]
                %459 = vst [vmem:[%s265 + $0x300] sm:$0xff] %v458
                %v460 = vld [vmem:[%s264 + $0x610] sm:$0xff]
                %461 = vst [vmem:[%s265 + $0x308] sm:$0xff] %v460
                %v462 = vld [vmem:[%s264 + $0x620] sm:$0xff]
                %463 = vst [vmem:[%s265 + $0x310] sm:$0xff] %v462
                %v464 = vld [vmem:[%s264 + $0x630] sm:$0xff]
                %465 = vst [vmem:[%s265 + $0x318] sm:$0xff] %v464
                %v466 = vld [vmem:[%s264 + $0x640] sm:$0xff]
                %467 = vst [vmem:[%s265 + $0x320] sm:$0xff] %v466
                %v468 = vld [vmem:[%s264 + $0x650] sm:$0xff]
                %469 = vst [vmem:[%s265 + $0x328] sm:$0xff] %v468
                %v470 = vld [vmem:[%s264 + $0x660] sm:$0xff]
                %471 = vst [vmem:[%s265 + $0x330] sm:$0xff] %v470
                %v472 = vld [vmem:[%s264 + $0x670] sm:$0xff]
                %473 = vst [vmem:[%s265 + $0x338] sm:$0xff] %v472
                %v474 = vld [vmem:[%s264 + $0x680] sm:$0xff]
                %475 = vst [vmem:[%s265 + $0x340] sm:$0xff] %v474
                %v476 = vld [vmem:[%s264 + $0x690] sm:$0xff]
                %477 = vst [vmem:[%s265 + $0x348] sm:$0xff] %v476
                %v478 = vld [vmem:[%s264 + $0x6a0] sm:$0xff]
                %479 = vst [vmem:[%s265 + $0x350] sm:$0xff] %v478
                %v480 = vld [vmem:[%s264 + $0x6b0] sm:$0xff]
                %481 = vst [vmem:[%s265 + $0x358] sm:$0xff] %v480
                %v482 = vld [vmem:[%s264 + $0x6c0] sm:$0xff]
                %483 = vst [vmem:[%s265 + $0x360] sm:$0xff] %v482
                %v484 = vld [vmem:[%s264 + $0x6d0] sm:$0xff]
                %485 = vst [vmem:[%s265 + $0x368] sm:$0xff] %v484
                %v486 = vld [vmem:[%s264 + $0x6e0] sm:$0xff]
                %487 = vst [vmem:[%s265 + $0x370] sm:$0xff] %v486
                %v488 = vld [vmem:[%s264 + $0x6f0] sm:$0xff]
                %489 = vst [vmem:[%s265 + $0x378] sm:$0xff] %v488
                %v490 = vld [vmem:[%s264 + $0x700] sm:$0xff]
                %491 = vst [vmem:[%s265 + $0x380] sm:$0xff] %v490
                %v492 = vld [vmem:[%s264 + $0x710] sm:$0xff]
                %493 = vst [vmem:[%s265 + $0x388] sm:$0xff] %v492
                %v494 = vld [vmem:[%s264 + $0x720] sm:$0xff]
                %495 = vst [vmem:[%s265 + $0x390] sm:$0xff] %v494
                %v496 = vld [vmem:[%s264 + $0x730] sm:$0xff]
                %497 = vst [vmem:[%s265 + $0x398] sm:$0xff] %v496
                %v498 = vld [vmem:[%s264 + $0x740] sm:$0xff]
                %499 = vst [vmem:[%s265 + $0x3a0] sm:$0xff] %v498
                %v500 = vld [vmem:[%s264 + $0x750] sm:$0xff]
                %501 = vst [vmem:[%s265 + $0x3a8] sm:$0xff] %v500
                %v502 = vld [vmem:[%s264 + $0x760] sm:$0xff]
                %503 = vst [vmem:[%s265 + $0x3b0] sm:$0xff] %v502
                %v504 = vld [vmem:[%s264 + $0x770] sm:$0xff]
                %505 = vst [vmem:[%s265 + $0x3b8] sm:$0xff] %v504
                %v506 = vld [vmem:[%s264 + $0x780] sm:$0xff]
                %507 = vst [vmem:[%s265 + $0x3c0] sm:$0xff] %v506
                %v508 = vld [vmem:[%s264 + $0x790] sm:$0xff]
                %509 = vst [vmem:[%s265 + $0x3c8] sm:$0xff] %v508
                %v510 = vld [vmem:[%s264 + $0x7a0] sm:$0xff]
                %511 = vst [vmem:[%s265 + $0x3d0] sm:$0xff] %v510
                %v512 = vld [vmem:[%s264 + $0x7b0] sm:$0xff]
                %513 = vst [vmem:[%s265 + $0x3d8] sm:$0xff] %v512
                %v514 = vld [vmem:[%s264 + $0x7c0] sm:$0xff]
                %515 = vst [vmem:[%s265 + $0x3e0] sm:$0xff] %v514
                %v516 = vld [vmem:[%s264 + $0x7d0] sm:$0xff]
                %517 = vst [vmem:[%s265 + $0x3e8] sm:$0xff] %v516
                %v518 = vld [vmem:[%s264 + $0x7e0] sm:$0xff]
                %519 = vst [vmem:[%s265 + $0x3f0] sm:$0xff] %v518
                %v520 = vld [vmem:[%s264 + $0x7f0] sm:$0xff]
                %521 = vst [vmem:[%s265 + $0x3f8] sm:$0xff] %v520
              $region57: #{attention_forward.1} parent=51 // loop_footer
                %s263 = sadd.s32 1, %s259
              $region58: #{attention_forward.1} parent=51 // loop_footer_branch
                %258 = sbr.rel target = $region54
              $region59: #{attention_forward.1} parent=51 // loop_exit
                _
            $region52: #{attention_forward.1} parent=43 // pred_fallthru
              _
          $region44: #{attention_forward.1} parent=39 // pred_fallthru
            _
          %790 = vnop
        $region40: #{attention_forward.1} parent=31 // pred_fallthru
          _
        // Predicated region
        $region75: #{attention_forward.1} parent=31 // pred_check
          %p791 = pneg %p88
        $region76: #{attention_forward.1} parent=31 // pred_check_branch
          %793 = sbr.rel (%p791) target = $region78
        $region77: #{attention_forward.1} parent=31 // pred_region
          %p794 = scmp.lt.s32.totalorder %s16, 1
          %s795 = scalar_select %p794, %s16, 1
          %s796 = smul.addr %s795, 8
          %s797 = scalar_lea.vmem %s2, %s796
        $region78: #{attention_forward.1} parent=31 // pred_fallthru
          _
      $region32: #{attention_forward.1} parent=5 // pred_fallthru
        _
      %p798 = scmp.le.s32.totalorder 1, %s16
      %p799 = scmp.lt.s32.totalorder %s16, 3
      %p800 = pnand %p798, %p799
      %p801 = pneg %p800
      // Predicated region
      $region79: #{attention_forward.1} parent=5 // pred_check
        _
      $region80: #{attention_forward.1} parent=5 // pred_check_branch
        %803 = sbr.rel (%p800) target = $region82
      $region81: #{attention_forward.1} parent=5 // pred_region
        %s804 = ssub.s32 %s16, 1
        %s805 = sand.u32 %s55, 1
        %s806 = sand.u32 %s55, 1
        %s807 = smul.addr %s806, 1024
        %s808 = scalar_lea.vmem [#allocation2], %s807
        // Predicated region
        $region83: #{attention_forward.1} parent=81 // pred_check
          %p809 = pneg %p68
        $region84: #{attention_forward.1} parent=81 // pred_check_branch
          %811 = sbr.rel (%p809) target = $region86
        $region85: #{attention_forward.1} parent=81 // pred_region
          _
        $region86: #{attention_forward.1} parent=81 // pred_fallthru
          _
        %p812 = scmp.lt.s32.totalorder %s21, 1
        %s813 = scalar_select %p812, %s21, 1
        %s814 = smul.addr %s813, 8
        %s815 = scalar_lea.vmem %s0, %s814
        %p816 = pneg %p42
        %p817 = pneg %p39
        %s818 = sand.u32 %s55, 1
        %s819 = sand.u32 %s55, 1
        %s820 = smul.addr %s819, 1024
        %s821 = scalar_lea.vmem [#allocation2], %s820
        %p822 = pneg %p68
        %p823 = pneg %p65
        %p824 = scmp.lt.s32.totalorder %s21, 1
        %s825 = scalar_select %p824, %s21, 1
        %s826 = smul.addr %s825, 8
        %s827 = scalar_lea.vmem %s2, %s826
        %p828 = pneg %p94
        %p829 = pneg %p91
        %p830 = pneg %p115
        %p831 = pneg %p112
        %p832 = pneg %p136
        %p833 = pneg %p133
        %p834 = pneg %p157
        %p835 = pneg %p154
        %p836 = pneg %p178
        %p837 = pneg %p175
        %p838 = pneg %p204
        %p839 = pneg %p201
        %s840 = sand.u32 %s191, 1
        %s841 = scalar_lea.sflag [#allocation4], %s840
        %s842 = sand.u32 %s191, 1
        %s843 = smul.addr %s842, 8
        %s844 = scalar_lea.vmem [#allocation3], %s843
        %p845 = scmp.lt.s32.totalorder %s21, 1
        %s846 = scalar_select %p845, %s21, 1
        %s847 = smul.addr %s846, 8
        %s848 = scalar_lea.vmem %s0, %s847
        %p849 = scmp.lt.s32.totalorder %s21, 1
        %s850 = scalar_select %p849, %s21, 1
        %s851 = smul.addr %s850, 8
        %s852 = scalar_lea.vmem %s2, %s851
        %v853 = vld [vmem:[%s848] sm:$0xff]
        %v854 = vld [vmem:[%s3] sm:$0xff]
        %v855 = vld [vmem:[%s3 + $0x8] sm:$0xff]
        %v856 = vld [vmem:[%s3 + $0x10] sm:$0xff]
        %v857 = vld [vmem:[%s3 + $0x18] sm:$0xff]
        %vm858 = vcmask 261120
        %v860 = vsel %vm858, %v853, 0
        %862 = vmatprep.subr.mxu0 0.0
        %863 = vmatpush1.msra.mxu0 %v854
        %864 = vmatprep.subr.mxu0 0.0
        %865 = vmatpush1.msra.mxu0 %v855
        %866 = vmatprep.subr.mxu0 0.0
        %867 = vmatpush1.msra.mxu0 %v856
        %868 = vmatprep.subr.mxu0 0.0
        %869 = vmatpush1.msra.mxu0 %v857
        %870 = vmatprep.subr.mxu0 0.0
        %871 = vmatpush1.msra.mxu0 0.0
        %872 = vmatprep.subr.mxu0 0.0
        %873 = vmatpush1.msra.mxu0 0.0
        %874 = vmatprep.subr.mxu0 0.0
        %875 = vmatpush1.msra.mxu0 0.0
        %876 = vmatprep.subr.mxu0 0.0
        %877 = vmatpush1.msra.mxu0 0.0
        %878 = vmatprep.subr.mxu0 0.0
        %879 = vmatpush1.msra.mxu0 0.0
        %880 = vmatprep.subr.mxu0 0.0
        %881 = vmatpush1.msra.mxu0 0.0
        %882 = vmatprep.subr.mxu0 0.0
        %883 = vmatpush1.msra.mxu0 0.0
        %884 = vmatprep.subr.mxu0 0.0
        %885 = vmatpush1.msra.mxu0 0.0
        %886 = vmatprep.subr.mxu0 0.0
        %887 = vmatpush1.msra.mxu0 0.0
        %888 = vmatprep.subr.mxu0 0.0
        %889 = vmatpush1.msra.mxu0 0.0
        %890 = vmatprep.subr.mxu0 0.0
        %891 = vmatpush1.msra.mxu0 0.0
        %892 = vmatprep.subr.mxu0 0.0
        %893 = vmatpush1.msra.mxu0 0.0
        %894 = vmatprep.subr.mxu0 0.0
        %895 = vmatpush1.msra.mxu0 0.0
        %896 = vmatprep.subr.mxu0 0.0
        %897 = vmatpush1.msra.mxu0 0.0
        %898 = vmatprep.subr.mxu0 0.0
        %899 = vmatpush1.msra.mxu0 0.0
        %900 = vmatprep.subr.mxu0 0.0
        %901 = vmatpush1.msra.mxu0 0.0
        %902 = vmatprep.subr.mxu0 0.0
        %903 = vmatpush1.msra.mxu0 0.0
        %904 = vmatprep.subr.mxu0 0.0
        %905 = vmatpush1.msra.mxu0 0.0
        %906 = vmatprep.subr.mxu0 0.0
        %907 = vmatpush1.msra.mxu0 0.0
        %908 = vmatprep.subr.mxu0 0.0
        %909 = vmatpush1.msra.mxu0 0.0
        %910 = vmatprep.subr.mxu0 0.0
        %911 = vmatpush1.msra.mxu0 0.0
        %912 = vmatprep.subr.mxu0 0.0
        %913 = vmatpush1.msra.mxu0 0.0
        %914 = vmatprep.subr.mxu0 0.0
        %915 = vmatpush1.msra.mxu0 0.0
        %916 = vmatprep.subr.mxu0 0.0
        %917 = vmatpush1.msra.mxu0 0.0
        %918 = vmatprep.subr.mxu0 0.0
        %919 = vmatpush1.msra.mxu0 0.0
        %920 = vmatprep.subr.mxu0 0.0
        %921 = vmatpush1.msra.mxu0 0.0
        %922 = vmatprep.subr.mxu0 0.0
        %923 = vmatpush1.msra.mxu0 0.0
        %924 = vmatprep.subr.mxu0 0.0
        %925 = vmatpush1.msra.mxu0 0.0
        %926 = vmatprep.mubr.f32.mxu0 0.0
        %927 = vmatmul.mubr.f32.gmra.mrb[0].mxu0 %v860
        %v928 = vpop.f32.mrb[0].mxu0
        %v929 = vadd.f32 0.0, %v928
        %v930 = vpop.f32.mrb[0].mxu0
        %931 = vdwg.mxu0
        %v932 = vld [vmem:[%s808] sm:$0xff]
        %v933 = vld [vmem:[%s808 + $0x8] sm:$0xff]
        %v934 = vld [vmem:[%s808 + $0x10] sm:$0xff]
        %v935 = vld [vmem:[%s808 + $0x18] sm:$0xff]
        %v936 = vld [vmem:[%s808 + $0x20] sm:$0xff]
        %v937 = vld [vmem:[%s808 + $0x28] sm:$0xff]
        %v938 = vld [vmem:[%s808 + $0x30] sm:$0xff]
        %v939 = vld [vmem:[%s808 + $0x38] sm:$0xff]
        %v940 = vld [vmem:[%s808 + $0x40] sm:$0xff]
        %v941 = vld [vmem:[%s808 + $0x48] sm:$0xff]
        %v942 = vld [vmem:[%s808 + $0x50] sm:$0xff]
        %v943 = vld [vmem:[%s808 + $0x58] sm:$0xff]
        %v944 = vld [vmem:[%s808 + $0x60] sm:$0xff]
        %v945 = vld [vmem:[%s808 + $0x68] sm:$0xff]
        %v946 = vld [vmem:[%s808 + $0x70] sm:$0xff]
        %v947 = vld [vmem:[%s808 + $0x78] sm:$0xff]
        %v948 = vld [vmem:[%s808 + $0x80] sm:$0xff]
        %v949 = vld [vmem:[%s808 + $0x88] sm:$0xff]
        %v950 = vld [vmem:[%s808 + $0x90] sm:$0xff]
        %v951 = vld [vmem:[%s808 + $0x98] sm:$0xff]
        %v952 = vld [vmem:[%s808 + $0xa0] sm:$0xff]
        %v953 = vld [vmem:[%s808 + $0xa8] sm:$0xff]
        %v954 = vld [vmem:[%s808 + $0xb0] sm:$0xff]
        %v955 = vld [vmem:[%s808 + $0xb8] sm:$0xff]
        %v956 = vld [vmem:[%s808 + $0xc0] sm:$0xff]
        %v957 = vld [vmem:[%s808 + $0xc8] sm:$0xff]
        %v958 = vld [vmem:[%s808 + $0xd0] sm:$0xff]
        %v959 = vld [vmem:[%s808 + $0xd8] sm:$0xff]
        %v960 = vld [vmem:[%s808 + $0xe0] sm:$0xff]
        %v961 = vld [vmem:[%s808 + $0xe8] sm:$0xff]
        %v962 = vld [vmem:[%s808 + $0xf0] sm:$0xff]
        %v963 = vld [vmem:[%s808 + $0xf8] sm:$0xff]
        %v964 = vld [vmem:[%s808 + $0x100] sm:$0xff]
        %v965 = vld [vmem:[%s808 + $0x108] sm:$0xff]
        %v966 = vld [vmem:[%s808 + $0x110] sm:$0xff]
        %v967 = vld [vmem:[%s808 + $0x118] sm:$0xff]
        %v968 = vld [vmem:[%s808 + $0x120] sm:$0xff]
        %v969 = vld [vmem:[%s808 + $0x128] sm:$0xff]
        %v970 = vld [vmem:[%s808 + $0x130] sm:$0xff]
        %v971 = vld [vmem:[%s808 + $0x138] sm:$0xff]
        %v972 = vld [vmem:[%s808 + $0x140] sm:$0xff]
        %v973 = vld [vmem:[%s808 + $0x148] sm:$0xff]
        %v974 = vld [vmem:[%s808 + $0x150] sm:$0xff]
        %v975 = vld [vmem:[%s808 + $0x158] sm:$0xff]
        %v976 = vld [vmem:[%s808 + $0x160] sm:$0xff]
        %v977 = vld [vmem:[%s808 + $0x168] sm:$0xff]
        %v978 = vld [vmem:[%s808 + $0x170] sm:$0xff]
        %v979 = vld [vmem:[%s808 + $0x178] sm:$0xff]
        %v980 = vld [vmem:[%s808 + $0x180] sm:$0xff]
        %v981 = vld [vmem:[%s808 + $0x188] sm:$0xff]
        %v982 = vld [vmem:[%s808 + $0x190] sm:$0xff]
        %v983 = vld [vmem:[%s808 + $0x198] sm:$0xff]
        %v984 = vld [vmem:[%s808 + $0x1a0] sm:$0xff]
        %v985 = vld [vmem:[%s808 + $0x1a8] sm:$0xff]
        %v986 = vld [vmem:[%s808 + $0x1b0] sm:$0xff]
        %v987 = vld [vmem:[%s808 + $0x1b8] sm:$0xff]
        %v988 = vld [vmem:[%s808 + $0x1c0] sm:$0xff]
        %v989 = vld [vmem:[%s808 + $0x1c8] sm:$0xff]
        %v990 = vld [vmem:[%s808 + $0x1d0] sm:$0xff]
        %v991 = vld [vmem:[%s808 + $0x1d8] sm:$0xff]
        %v992 = vld [vmem:[%s808 + $0x1e0] sm:$0xff]
        %v993 = vld [vmem:[%s808 + $0x1e8] sm:$0xff]
        %v994 = vld [vmem:[%s808 + $0x1f0] sm:$0xff]
        %v995 = vld [vmem:[%s808 + $0x1f8] sm:$0xff]
        %v996 = vld [vmem:[%s808 + $0x200] sm:$0xff]
        %v997 = vld [vmem:[%s808 + $0x208] sm:$0xff]
        %v998 = vld [vmem:[%s808 + $0x210] sm:$0xff]
        %v999 = vld [vmem:[%s808 + $0x218] sm:$0xff]
        %v1000 = vld [vmem:[%s808 + $0x220] sm:$0xff]
        %v1001 = vld [vmem:[%s808 + $0x228] sm:$0xff]
        %v1002 = vld [vmem:[%s808 + $0x230] sm:$0xff]
        %v1003 = vld [vmem:[%s808 + $0x238] sm:$0xff]
        %v1004 = vld [vmem:[%s808 + $0x240] sm:$0xff]
        %v1005 = vld [vmem:[%s808 + $0x248] sm:$0xff]
        %v1006 = vld [vmem:[%s808 + $0x250] sm:$0xff]
        %v1007 = vld [vmem:[%s808 + $0x258] sm:$0xff]
        %v1008 = vld [vmem:[%s808 + $0x260] sm:$0xff]
        %v1009 = vld [vmem:[%s808 + $0x268] sm:$0xff]
        %v1010 = vld [vmem:[%s808 + $0x270] sm:$0xff]
        %v1011 = vld [vmem:[%s808 + $0x278] sm:$0xff]
        %v1012 = vld [vmem:[%s808 + $0x280] sm:$0xff]
        %v1013 = vld [vmem:[%s808 + $0x288] sm:$0xff]
        %v1014 = vld [vmem:[%s808 + $0x290] sm:$0xff]
        %v1015 = vld [vmem:[%s808 + $0x298] sm:$0xff]
        %v1016 = vld [vmem:[%s808 + $0x2a0] sm:$0xff]
        %v1017 = vld [vmem:[%s808 + $0x2a8] sm:$0xff]
        %v1018 = vld [vmem:[%s808 + $0x2b0] sm:$0xff]
        %v1019 = vld [vmem:[%s808 + $0x2b8] sm:$0xff]
        %v1020 = vld [vmem:[%s808 + $0x2c0] sm:$0xff]
        %v1021 = vld [vmem:[%s808 + $0x2c8] sm:$0xff]
        %v1022 = vld [vmem:[%s808 + $0x2d0] sm:$0xff]
        %v1023 = vld [vmem:[%s808 + $0x2d8] sm:$0xff]
        %v1024 = vld [vmem:[%s808 + $0x2e0] sm:$0xff]
        %v1025 = vld [vmem:[%s808 + $0x2e8] sm:$0xff]
        %v1026 = vld [vmem:[%s808 + $0x2f0] sm:$0xff]
        %v1027 = vld [vmem:[%s808 + $0x2f8] sm:$0xff]
        %v1028 = vld [vmem:[%s808 + $0x300] sm:$0xff]
        %v1029 = vld [vmem:[%s808 + $0x308] sm:$0xff]
        %v1030 = vld [vmem:[%s808 + $0x310] sm:$0xff]
        %v1031 = vld [vmem:[%s808 + $0x318] sm:$0xff]
        %v1032 = vld [vmem:[%s808 + $0x320] sm:$0xff]
        %v1033 = vld [vmem:[%s808 + $0x328] sm:$0xff]
        %v1034 = vld [vmem:[%s808 + $0x330] sm:$0xff]
        %v1035 = vld [vmem:[%s808 + $0x338] sm:$0xff]
        %v1036 = vld [vmem:[%s808 + $0x340] sm:$0xff]
        %v1037 = vld [vmem:[%s808 + $0x348] sm:$0xff]
        %v1038 = vld [vmem:[%s808 + $0x350] sm:$0xff]
        %v1039 = vld [vmem:[%s808 + $0x358] sm:$0xff]
        %v1040 = vld [vmem:[%s808 + $0x360] sm:$0xff]
        %v1041 = vld [vmem:[%s808 + $0x368] sm:$0xff]
        %v1042 = vld [vmem:[%s808 + $0x370] sm:$0xff]
        %v1043 = vld [vmem:[%s808 + $0x378] sm:$0xff]
        %v1044 = vld [vmem:[%s808 + $0x380] sm:$0xff]
        %v1045 = vld [vmem:[%s808 + $0x388] sm:$0xff]
        %v1046 = vld [vmem:[%s808 + $0x390] sm:$0xff]
        %v1047 = vld [vmem:[%s808 + $0x398] sm:$0xff]
        %v1048 = vld [vmem:[%s808 + $0x3a0] sm:$0xff]
        %v1049 = vld [vmem:[%s808 + $0x3a8] sm:$0xff]
        %v1050 = vld [vmem:[%s808 + $0x3b0] sm:$0xff]
        %v1051 = vld [vmem:[%s808 + $0x3b8] sm:$0xff]
        %v1052 = vld [vmem:[%s808 + $0x3c0] sm:$0xff]
        %v1053 = vld [vmem:[%s808 + $0x3c8] sm:$0xff]
        %v1054 = vld [vmem:[%s808 + $0x3d0] sm:$0xff]
        %v1055 = vld [vmem:[%s808 + $0x3d8] sm:$0xff]
        %v1056 = vld [vmem:[%s808 + $0x3e0] sm:$0xff]
        %v1057 = vld [vmem:[%s808 + $0x3e8] sm:$0xff]
        %v1058 = vld [vmem:[%s808 + $0x3f0] sm:$0xff]
        %v1059 = vld [vmem:[%s808 + $0x3f8] sm:$0xff]
        %v1060 = vld [vmem:[%s4] sm:$0xff]
        %v1061 = vld [vmem:[%s4 + $0x8] sm:$0xff]
        %v1062 = vld [vmem:[%s4 + $0x10] sm:$0xff]
        %v1063 = vld [vmem:[%s4 + $0x18] sm:$0xff]
        %v1065 = vsel %vm858, %v932, 0
        %v1068 = vsel %vm858, %v933, 0
        %v1071 = vsel %vm858, %v934, 0
        %v1074 = vsel %vm858, %v935, 0
        %v1077 = vsel %vm858, %v936, 0
        %v1080 = vsel %vm858, %v937, 0
        %v1083 = vsel %vm858, %v938, 0
        %v1086 = vsel %vm858, %v939, 0
        %v1089 = vsel %vm858, %v940, 0
        %v1092 = vsel %vm858, %v941, 0
        %v1095 = vsel %vm858, %v942, 0
        %v1098 = vsel %vm858, %v943, 0
        %v1101 = vsel %vm858, %v944, 0
        %v1104 = vsel %vm858, %v945, 0
        %v1107 = vsel %vm858, %v946, 0
        %v1110 = vsel %vm858, %v947, 0
        %v1113 = vsel %vm858, %v948, 0
        %v1116 = vsel %vm858, %v949, 0
        %v1119 = vsel %vm858, %v950, 0
        %v1122 = vsel %vm858, %v951, 0
        %v1125 = vsel %vm858, %v952, 0
        %v1128 = vsel %vm858, %v953, 0
        %v1131 = vsel %vm858, %v954, 0
        %v1134 = vsel %vm858, %v955, 0
        %v1137 = vsel %vm858, %v956, 0
        %v1140 = vsel %vm858, %v957, 0
        %v1143 = vsel %vm858, %v958, 0
        %v1146 = vsel %vm858, %v959, 0
        %v1149 = vsel %vm858, %v960, 0
        %v1152 = vsel %vm858, %v961, 0
        %v1155 = vsel %vm858, %v962, 0
        %v1158 = vsel %vm858, %v963, 0
        %v1161 = vsel %vm858, %v964, 0
        %v1164 = vsel %vm858, %v965, 0
        %v1167 = vsel %vm858, %v966, 0
        %v1170 = vsel %vm858, %v967, 0
        %v1173 = vsel %vm858, %v968, 0
        %v1176 = vsel %vm858, %v969, 0
        %v1179 = vsel %vm858, %v970, 0
        %v1182 = vsel %vm858, %v971, 0
        %v1185 = vsel %vm858, %v972, 0
        %v1188 = vsel %vm858, %v973, 0
        %v1191 = vsel %vm858, %v974, 0
        %v1194 = vsel %vm858, %v975, 0
        %v1197 = vsel %vm858, %v976, 0
        %v1200 = vsel %vm858, %v977, 0
        %v1203 = vsel %vm858, %v978, 0
        %v1206 = vsel %vm858, %v979, 0
        %v1209 = vsel %vm858, %v980, 0
        %v1212 = vsel %vm858, %v981, 0
        %v1215 = vsel %vm858, %v982, 0
        %v1218 = vsel %vm858, %v983, 0
        %v1221 = vsel %vm858, %v984, 0
        %v1224 = vsel %vm858, %v985, 0
        %v1227 = vsel %vm858, %v986, 0
        %v1230 = vsel %vm858, %v987, 0
        %v1233 = vsel %vm858, %v988, 0
        %v1236 = vsel %vm858, %v989, 0
        %v1239 = vsel %vm858, %v990, 0
        %v1242 = vsel %vm858, %v991, 0
        %v1245 = vsel %vm858, %v992, 0
        %v1248 = vsel %vm858, %v993, 0
        %v1251 = vsel %vm858, %v994, 0
        %v1254 = vsel %vm858, %v995, 0
        %v1257 = vsel %vm858, %v996, 0
        %v1260 = vsel %vm858, %v997, 0
        %v1263 = vsel %vm858, %v998, 0
        %v1266 = vsel %vm858, %v999, 0
        %v1269 = vsel %vm858, %v1000, 0
        %v1272 = vsel %vm858, %v1001, 0
        %v1275 = vsel %vm858, %v1002, 0
        %v1278 = vsel %vm858, %v1003, 0
        %v1281 = vsel %vm858, %v1004, 0
        %v1284 = vsel %vm858, %v1005, 0
        %v1287 = vsel %vm858, %v1006, 0
        %v1290 = vsel %vm858, %v1007, 0
        %v1293 = vsel %vm858, %v1008, 0
        %v1296 = vsel %vm858, %v1009, 0
        %v1299 = vsel %vm858, %v1010, 0
        %v1302 = vsel %vm858, %v1011, 0
        %v1305 = vsel %vm858, %v1012, 0
        %v1308 = vsel %vm858, %v1013, 0
        %v1311 = vsel %vm858, %v1014, 0
        %v1314 = vsel %vm858, %v1015, 0
        %v1317 = vsel %vm858, %v1016, 0
        %v1320 = vsel %vm858, %v1017, 0
        %v1323 = vsel %vm858, %v1018, 0
        %v1326 = vsel %vm858, %v1019, 0
        %v1329 = vsel %vm858, %v1020, 0
        %v1332 = vsel %vm858, %v1021, 0
        %v1335 = vsel %vm858, %v1022, 0
        %v1338 = vsel %vm858, %v1023, 0
        %v1341 = vsel %vm858, %v1024, 0
        %v1344 = vsel %vm858, %v1025, 0
        %v1347 = vsel %vm858, %v1026, 0
        %v1350 = vsel %vm858, %v1027, 0
        %v1353 = vsel %vm858, %v1028, 0
        %v1356 = vsel %vm858, %v1029, 0
        %v1359 = vsel %vm858, %v1030, 0
        %v1362 = vsel %vm858, %v1031, 0
        %v1365 = vsel %vm858, %v1032, 0
        %v1368 = vsel %vm858, %v1033, 0
        %v1371 = vsel %vm858, %v1034, 0
        %v1374 = vsel %vm858, %v1035, 0
        %v1377 = vsel %vm858, %v1036, 0
        %v1380 = vsel %vm858, %v1037, 0
        %v1383 = vsel %vm858, %v1038, 0
        %v1386 = vsel %vm858, %v1039, 0
        %v1389 = vsel %vm858, %v1040, 0
        %v1392 = vsel %vm858, %v1041, 0
        %v1395 = vsel %vm858, %v1042, 0
        %v1398 = vsel %vm858, %v1043, 0
        %v1401 = vsel %vm858, %v1044, 0
        %v1404 = vsel %vm858, %v1045, 0
        %v1407 = vsel %vm858, %v1046, 0
        %v1410 = vsel %vm858, %v1047, 0
        %v1413 = vsel %vm858, %v1048, 0
        %v1416 = vsel %vm858, %v1049, 0
        %v1419 = vsel %vm858, %v1050, 0
        %v1422 = vsel %vm858, %v1051, 0
        %v1425 = vsel %vm858, %v1052, 0
        %v1428 = vsel %vm858, %v1053, 0
        %v1431 = vsel %vm858, %v1054, 0
        %v1434 = vsel %vm858, %v1055, 0
        %v1437 = vsel %vm858, %v1056, 0
        %v1440 = vsel %vm858, %v1057, 0
        %v1443 = vsel %vm858, %v1058, 0
        %v1446 = vsel %vm858, %v1059, 0
        %1448 = vmatprep.subr.mxu0 0.0
        %1449 = vmatpush1.msra.mxu0 %v1060
        %1450 = vmatprep.subr.mxu0 0.0
        %1451 = vmatpush1.msra.mxu0 %v1061
        %1452 = vmatprep.subr.mxu0 0.0
        %1453 = vmatpush1.msra.mxu0 %v1062
        %1454 = vmatprep.subr.mxu0 0.0
        %1455 = vmatpush1.msra.mxu0 %v1063
        %1456 = vmatprep.subr.mxu0 0.0
        %1457 = vmatpush1.msra.mxu0 0.0
        %1458 = vmatprep.subr.mxu0 0.0
        %1459 = vmatpush1.msra.mxu0 0.0
        %1460 = vmatprep.subr.mxu0 0.0
        %1461 = vmatpush1.msra.mxu0 0.0
        %1462 = vmatprep.subr.mxu0 0.0
        %1463 = vmatpush1.msra.mxu0 0.0
        %1464 = vmatprep.subr.mxu0 0.0
        %1465 = vmatpush1.msra.mxu0 0.0
        %1466 = vmatprep.subr.mxu0 0.0
        %1467 = vmatpush1.msra.mxu0 0.0
        %1468 = vmatprep.subr.mxu0 0.0
        %1469 = vmatpush1.msra.mxu0 0.0
        %1470 = vmatprep.subr.mxu0 0.0
        %1471 = vmatpush1.msra.mxu0 0.0
        %1472 = vmatprep.subr.mxu0 0.0
        %1473 = vmatpush1.msra.mxu0 0.0
        %1474 = vmatprep.subr.mxu0 0.0
        %1475 = vmatpush1.msra.mxu0 0.0
        %1476 = vmatprep.subr.mxu0 0.0
        %1477 = vmatpush1.msra.mxu0 0.0
        %1478 = vmatprep.subr.mxu0 0.0
        %1479 = vmatpush1.msra.mxu0 0.0
        %1480 = vmatprep.subr.mxu0 0.0
        %1481 = vmatpush1.msra.mxu0 0.0
        %1482 = vmatprep.subr.mxu0 0.0
        %1483 = vmatpush1.msra.mxu0 0.0
        %1484 = vmatprep.subr.mxu0 0.0
        %1485 = vmatpush1.msra.mxu0 0.0
        %1486 = vmatprep.subr.mxu0 0.0
        %1487 = vmatpush1.msra.mxu0 0.0
        %1488 = vmatprep.subr.mxu0 0.0
        %1489 = vmatpush1.msra.mxu0 0.0
        %1490 = vmatprep.subr.mxu0 0.0
        %1491 = vmatpush1.msra.mxu0 0.0
        %1492 = vmatprep.subr.mxu0 0.0
        %1493 = vmatpush1.msra.mxu0 0.0
        %1494 = vmatprep.subr.mxu0 0.0
        %1495 = vmatpush1.msra.mxu0 0.0
        %1496 = vmatprep.subr.mxu0 0.0
        %1497 = vmatpush1.msra.mxu0 0.0
        %1498 = vmatprep.subr.mxu0 0.0
        %1499 = vmatpush1.msra.mxu0 0.0
        %1500 = vmatprep.subr.mxu0 0.0
        %1501 = vmatpush1.msra.mxu0 0.0
        %1502 = vmatprep.subr.mxu0 0.0
        %1503 = vmatpush1.msra.mxu0 0.0
        %1504 = vmatprep.subr.mxu0 0.0
        %1505 = vmatpush1.msra.mxu0 0.0
        %1506 = vmatprep.subr.mxu0 0.0
        %1507 = vmatpush1.msra.mxu0 0.0
        %1508 = vmatprep.subr.mxu0 0.0
        %1509 = vmatpush1.msra.mxu0 0.0
        %1510 = vmatprep.subr.mxu0 0.0
        %1511 = vmatpush1.msra.mxu0 0.0
        %1512 = vmatprep.mubr.f32.mxu0 0.0
        %1513 = vmatmul.mubr.f32.gmra.mrb[0].mxu0 %v1065
        %v1514 = vpop.f32.mrb[0].mxu0
        %v1515 = vadd.f32 0.0, %v1514
        %v1516 = vpop.f32.mrb[0].mxu0
        %1517 = vmatprep.mubr.f32.mxu0 0.0
        %1518 = vmatmul.mubr.f32.gmra.mrb[0].mxu0 %v1068
        %v1519 = vpop.f32.mrb[0].mxu0
        %v1520 = vadd.f32 0.0, %v1519
        %v1521 = vpop.f32.mrb[0].mxu0
        %1522 = vmatprep.mubr.f32.mxu0 0.0
        %1523 = vmatmul.mubr.f32.gmra.mrb[0].mxu0 %v1071
        %v1524 = vpop.f32.mrb[0].mxu0
        %v1525 = vadd.f32 0.0, %v1524
        %v1526 = vpop.f32.mrb[0].mxu0
        %1527 = vmatprep.mubr.f32.mxu0 0.0
        %1528 = vmatmul.mubr.f32.gmra.mrb[0].mxu0 %v1074
        %v1529 = vpop.f32.mrb[0].mxu0
        %v1530 = vadd.f32 0.0, %v1529
        %v1531 = vpop.f32.mrb[0].mxu0
        %1532 = vmatprep.mubr.f32.mxu0 0.0
        %1533 = vmatmul.mubr.f32.gmra.mrb[0].mxu0 %v1077
        %v1534 = vpop.f32.mrb[0].mxu0
        %v1535 = vadd.f32 0.0, %v1534
        %v1536 = vpop.f32.mrb[0].mxu0
        %1537 = vmatprep.mubr.f32.mxu0 0.0
        %1538 = vmatmul.mubr.f32.gmra.mrb[0].mxu0 %v1080
        %v1539 = vpop.f32.mrb[0].mxu0
        %v1540 = vadd.f32 0.0, %v1539
        %v1541 = vpop.f32.mrb[0].mxu0
        %1542 = vmatprep.mubr.f32.mxu0 0.0
        %1543 = vmatmul.mubr.f32.gmra.mrb[0].mxu0 %v1083
        %v1544 = vpop.f32.mrb[0].mxu0
        %v1545 = vadd.f32 0.0, %v1544
        %v1546 = vpop.f32.mrb[0].mxu0
        %1547 = vmatprep.mubr.f32.mxu0 0.0
        %1548 = vmatmul.mubr.f32.gmra.mrb[0].mxu0 %v1086
        %v1549 = vpop.f32.mrb[0].mxu0
        %v1550 = vadd.f32 0.0, %v1549
        %v1551 = vpop.f32.mrb[0].mxu0
        %1552 = vmatprep.mubr.f32.mxu0 0.0
        %1553 = vmatmul.mubr.f32.gmra.mrb[0].mxu0 %v1089
        %v1554 = vpop.f32.mrb[0].mxu0
        %v1555 = vadd.f32 0.0, %v1554
        %v1556 = vpop.f32.mrb[0].mxu0
        %1557 = vmatprep.mubr.f32.mxu0 0.0
        %1558 = vmatmul.mubr.f32.gmra.mrb[0].mxu0 %v1092
        %v1559 = vpop.f32.mrb[0].mxu0
        %v1560 = vadd.f32 0.0, %v1559
        %v1561 = vpop.f32.mrb[0].mxu0
        %1562 = vmatprep.mubr.f32.mxu0 0.0
        %1563 = vmatmul.mubr.f32.gmra.mrb[0].mxu0 %v1095
        %v1564 = vpop.f32.mrb[0].mxu0
        %v1565 = vadd.f32 0.0, %v1564
        %v1566 = vpop.f32.mrb[0].mxu0
        %1567 = vmatprep.mubr.f32.mxu0 0.0
        %1568 = vmatmul.mubr.f32.gmra.mrb[0].mxu0 %v1098
        %v1569 = vpop.f32.mrb[0].mxu0
        %v1570 = vadd.f32 0.0, %v1569
        %v1571 = vpop.f32.mrb[0].mxu0
        %1572 = vmatprep.mubr.f32.mxu0 0.0
        %1573 = vmatmul.mubr.f32.gmra.mrb[0].mxu0 %v1101
        %v1574 = vpop.f32.mrb[0].mxu0
        %v1575 = vadd.f32 0.0, %v1574
        %v1576 = vpop.f32.mrb[0].mxu0
        %1577 = vmatprep.mubr.f32.mxu0 0.0
        %1578 = vmatmul.mubr.f32.gmra.mrb[0].mxu0 %v1104
        %v1579 = vpop.f32.mrb[0].mxu0
        %v1580 = vadd.f32 0.0, %v1579
        %v1581 = vpop.f32.mrb[0].mxu0
        %1582 = vmatprep.mubr.f32.mxu0 0.0
        %1583 = vmatmul.mubr.f32.gmra.mrb[0].mxu0 %v1107
        %v1584 = vpop.f32.mrb[0].mxu0
        %v1585 = vadd.f32 0.0, %v1584
        %v1586 = vpop.f32.mrb[0].mxu0
        %1587 = vmatprep.mubr.f32.mxu0 0.0
        %1588 = vmatmul.mubr.f32.gmra.mrb[0].mxu0 %v1110
        %v1589 = vpop.f32.mrb[0].mxu0
        %v1590 = vadd.f32 0.0, %v1589
        %v1591 = vpop.f32.mrb[0].mxu0
        %1592 = vmatprep.mubr.f32.mxu0 0.0
        %1593 = vmatmul.mubr.f32.gmra.mrb[0].mxu0 %v1113
        %v1594 = vpop.f32.mrb[0].mxu0
        %v1595 = vadd.f32 0.0, %v1594
        %v1596 = vpop.f32.mrb[0].mxu0
        %1597 = vmatprep.mubr.f32.mxu0 0.0
        %1598 = vmatmul.mubr.f32.gmra.mrb[0].mxu0 %v1116
        %v1599 = vpop.f32.mrb[0].mxu0
        %v1600 = vadd.f32 0.0, %v1599
        %v1601 = vpop.f32.mrb[0].mxu0
        %1602 = vmatprep.mubr.f32.mxu0 0.0
        %1603 = vmatmul.mubr.f32.gmra.mrb[0].mxu0 %v1119
        %v1604 = vpop.f32.mrb[0].mxu0
        %v1605 = vadd.f32 0.0, %v1604
        %v1606 = vpop.f32.mrb[0].mxu0
        %1607 = vmatprep.mubr.f32.mxu0 0.0
        %1608 = vmatmul.mubr.f32.gmra.mrb[0].mxu0 %v1122
        %v1609 = vpop.f32.mrb[0].mxu0
        %v1610 = vadd.f32 0.0, %v1609
        %v1611 = vpop.f32.mrb[0].mxu0
        %1612 = vmatprep.mubr.f32.mxu0 0.0
        %1613 = vmatmul.mubr.f32.gmra.mrb[0].mxu0 %v1125
        %v1614 = vpop.f32.mrb[0].mxu0
        %v1615 = vadd.f32 0.0, %v1614
        %v1616 = vpop.f32.mrb[0].mxu0
        %1617 = vmatprep.mubr.f32.mxu0 0.0
        %1618 = vmatmul.mubr.f32.gmra.mrb[0].mxu0 %v1128
        %v1619 = vpop.f32.mrb[0].mxu0
        %v1620 = vadd.f32 0.0, %v1619
        %v1621 = vpop.f32.mrb[0].mxu0
        %1622 = vmatprep.mubr.f32.mxu0 0.0
        %1623 = vmatmul.mubr.f32.gmra.mrb[0].mxu0 %v1131
        %v1624 = vpop.f32.mrb[0].mxu0
        %v1625 = vadd.f32 0.0, %v1624
        %v1626 = vpop.f32.mrb[0].mxu0
        %1627 = vmatprep.mubr.f32.mxu0 0.0
        %1628 = vmatmul.mubr.f32.gmra.mrb[0].mxu0 %v1134
        %v1629 = vpop.f32.mrb[0].mxu0
        %v1630 = vadd.f32 0.0, %v1629
        %v1631 = vpop.f32.mrb[0].mxu0
        %1632 = vmatprep.mubr.f32.mxu0 0.0
        %1633 = vmatmul.mubr.f32.gmra.mrb[0].mxu0 %v1137
        %v1634 = vpop.f32.mrb[0].mxu0
        %v1635 = vadd.f32 0.0, %v1634
        %v1636 = vpop.f32.mrb[0].mxu0
        %1637 = vmatprep.mubr.f32.mxu0 0.0
        %1638 = vmatmul.mubr.f32.gmra.mrb[0].mxu0 %v1140
        %v1639 = vpop.f32.mrb[0].mxu0
        %v1640 = vadd.f32 0.0, %v1639
        %v1641 = vpop.f32.mrb[0].mxu0
        %1642 = vmatprep.mubr.f32.mxu0 0.0
        %1643 = vmatmul.mubr.f32.gmra.mrb[0].mxu0 %v1143
        %v1644 = vpop.f32.mrb[0].mxu0
        %v1645 = vadd.f32 0.0, %v1644
        %v1646 = vpop.f32.mrb[0].mxu0
        %1647 = vmatprep.mubr.f32.mxu0 0.0
        %1648 = vmatmul.mubr.f32.gmra.mrb[0].mxu0 %v1146
        %v1649 = vpop.f32.mrb[0].mxu0
        %v1650 = vadd.f32 0.0, %v1649
        %v1651 = vpop.f32.mrb[0].mxu0
        %1652 = vmatprep.mubr.f32.mxu0 0.0
        %1653 = vmatmul.mubr.f32.gmra.mrb[0].mxu0 %v1149
        %v1654 = vpop.f32.mrb[0].mxu0
        %v1655 = vadd.f32 0.0, %v1654
        %v1656 = vpop.f32.mrb[0].mxu0
        %1657 = vmatprep.mubr.f32.mxu0 0.0
        %1658 = vmatmul.mubr.f32.gmra.mrb[0].mxu0 %v1152
        %v1659 = vpop.f32.mrb[0].mxu0
        %v1660 = vadd.f32 0.0, %v1659
        %v1661 = vpop.f32.mrb[0].mxu0
        %1662 = vmatprep.mubr.f32.mxu0 0.0
        %1663 = vmatmul.mubr.f32.gmra.mrb[0].mxu0 %v1155
        %v1664 = vpop.f32.mrb[0].mxu0
        %v1665 = vadd.f32 0.0, %v1664
        %v1666 = vpop.f32.mrb[0].mxu0
        %1667 = vmatprep.mubr.f32.mxu0 0.0
        %1668 = vmatmul.mubr.f32.gmra.mrb[0].mxu0 %v1158
        %v1669 = vpop.f32.mrb[0].mxu0
        %v1670 = vadd.f32 0.0, %v1669
        %v1671 = vpop.f32.mrb[0].mxu0
        %1672 = vmatprep.mubr.f32.mxu0 0.0
        %1673 = vmatmul.mubr.f32.gmra.mrb[0].mxu0 %v1161
        %v1674 = vpop.f32.mrb[0].mxu0
        %v1675 = vadd.f32 0.0, %v1674
        %v1676 = vpop.f32.mrb[0].mxu0
        %1677 = vmatprep.mubr.f32.mxu0 0.0
        %1678 = vmatmul.mubr.f32.gmra.mrb[0].mxu0 %v1164
        %v1679 = vpop.f32.mrb[0].mxu0
        %v1680 = vadd.f32 0.0, %v1679
        %v1681 = vpop.f32.mrb[0].mxu0
        %1682 = vmatprep.mubr.f32.mxu0 0.0
        %1683 = vmatmul.mubr.f32.gmra.mrb[0].mxu0 %v1167
        %v1684 = vpop.f32.mrb[0].mxu0
        %v1685 = vadd.f32 0.0, %v1684
        %v1686 = vpop.f32.mrb[0].mxu0
        %1687 = vmatprep.mubr.f32.mxu0 0.0
        %1688 = vmatmul.mubr.f32.gmra.mrb[0].mxu0 %v1170
        %v1689 = vpop.f32.mrb[0].mxu0
        %v1690 = vadd.f32 0.0, %v1689
        %v1691 = vpop.f32.mrb[0].mxu0
        %1692 = vmatprep.mubr.f32.mxu0 0.0
        %1693 = vmatmul.mubr.f32.gmra.mrb[0].mxu0 %v1173
        %v1694 = vpop.f32.mrb[0].mxu0
        %v1695 = vadd.f32 0.0, %v1694
        %v1696 = vpop.f32.mrb[0].mxu0
        %1697 = vmatprep.mubr.f32.mxu0 0.0
        %1698 = vmatmul.mubr.f32.gmra.mrb[0].mxu0 %v1176
        %v1699 = vpop.f32.mrb[0].mxu0
        %v1700 = vadd.f32 0.0, %v1699
        %v1701 = vpop.f32.mrb[0].mxu0
        %1702 = vmatprep.mubr.f32.mxu0 0.0
        %1703 = vmatmul.mubr.f32.gmra.mrb[0].mxu0 %v1179
        %v1704 = vpop.f32.mrb[0].mxu0
        %v1705 = vadd.f32 0.0, %v1704
        %v1706 = vpop.f32.mrb[0].mxu0
        %1707 = vmatprep.mubr.f32.mxu0 0.0
        %1708 = vmatmul.mubr.f32.gmra.mrb[0].mxu0 %v1182
        %v1709 = vpop.f32.mrb[0].mxu0
        %v1710 = vadd.f32 0.0, %v1709
        %v1711 = vpop.f32.mrb[0].mxu0
        %1712 = vmatprep.mubr.f32.mxu0 0.0
        %1713 = vmatmul.mubr.f32.gmra.mrb[0].mxu0 %v1185
        %v1714 = vpop.f32.mrb[0].mxu0
        %v1715 = vadd.f32 0.0, %v1714
        %v1716 = vpop.f32.mrb[0].mxu0
        %1717 = vmatprep.mubr.f32.mxu0 0.0
        %1718 = vmatmul.mubr.f32.gmra.mrb[0].mxu0 %v1188
        %v1719 = vpop.f32.mrb[0].mxu0
        %v1720 = vadd.f32 0.0, %v1719
        %v1721 = vpop.f32.mrb[0].mxu0
        %1722 = vmatprep.mubr.f32.mxu0 0.0
        %1723 = vmatmul.mubr.f32.gmra.mrb[0].mxu0 %v1191
        %v1724 = vpop.f32.mrb[0].mxu0
        %v1725 = vadd.f32 0.0, %v1724
        %v1726 = vpop.f32.mrb[0].mxu0
        %1727 = vmatprep.mubr.f32.mxu0 0.0
        %1728 = vmatmul.mubr.f32.gmra.mrb[0].mxu0 %v1194
        %v1729 = vpop.f32.mrb[0].mxu0
        %v1730 = vadd.f32 0.0, %v1729
        %v1731 = vpop.f32.mrb[0].mxu0
        %1732 = vmatprep.mubr.f32.mxu0 0.0
        %1733 = vmatmul.mubr.f32.gmra.mrb[0].mxu0 %v1197
        %v1734 = vpop.f32.mrb[0].mxu0
        %v1735 = vadd.f32 0.0, %v1734
        %v1736 = vpop.f32.mrb[0].mxu0
        %1737 = vmatprep.mubr.f32.mxu0 0.0
        %1738 = vmatmul.mubr.f32.gmra.mrb[0].mxu0 %v1200
        %v1739 = vpop.f32.mrb[0].mxu0
        %v1740 = vadd.f32 0.0, %v1739
        %v1741 = vpop.f32.mrb[0].mxu0
        %1742 = vmatprep.mubr.f32.mxu0 0.0
        %1743 = vmatmul.mubr.f32.gmra.mrb[0].mxu0 %v1203
        %v1744 = vpop.f32.mrb[0].mxu0
        %v1745 = vadd.f32 0.0, %v1744
        %v1746 = vpop.f32.mrb[0].mxu0
        %1747 = vmatprep.mubr.f32.mxu0 0.0
        %1748 = vmatmul.mubr.f32.gmra.mrb[0].mxu0 %v1206
        %v1749 = vpop.f32.mrb[0].mxu0
        %v1750 = vadd.f32 0.0, %v1749
        %v1751 = vpop.f32.mrb[0].mxu0
        %1752 = vmatprep.mubr.f32.mxu0 0.0
        %1753 = vmatmul.mubr.f32.gmra.mrb[0].mxu0 %v1209
        %v1754 = vpop.f32.mrb[0].mxu0
        %v1755 = vadd.f32 0.0, %v1754
        %v1756 = vpop.f32.mrb[0].mxu0
        %1757 = vmatprep.mubr.f32.mxu0 0.0
        %1758 = vmatmul.mubr.f32.gmra.mrb[0].mxu0 %v1212
        %v1759 = vpop.f32.mrb[0].mxu0
        %v1760 = vadd.f32 0.0, %v1759
        %v1761 = vpop.f32.mrb[0].mxu0
        %1762 = vmatprep.mubr.f32.mxu0 0.0
        %1763 = vmatmul.mubr.f32.gmra.mrb[0].mxu0 %v1215
        %v1764 = vpop.f32.mrb[0].mxu0
        %v1765 = vadd.f32 0.0, %v1764
        %v1766 = vpop.f32.mrb[0].mxu0
        %1767 = vmatprep.mubr.f32.mxu0 0.0
        %1768 = vmatmul.mubr.f32.gmra.mrb[0].mxu0 %v1218
        %v1769 = vpop.f32.mrb[0].mxu0
        %v1770 = vadd.f32 0.0, %v1769
        %v1771 = vpop.f32.mrb[0].mxu0
        %1772 = vmatprep.mubr.f32.mxu0 0.0
        %1773 = vmatmul.mubr.f32.gmra.mrb[0].mxu0 %v1221
        %v1774 = vpop.f32.mrb[0].mxu0
        %v1775 = vadd.f32 0.0, %v1774
        %v1776 = vpop.f32.mrb[0].mxu0
        %1777 = vmatprep.mubr.f32.mxu0 0.0
        %1778 = vmatmul.mubr.f32.gmra.mrb[0].mxu0 %v1224
        %v1779 = vpop.f32.mrb[0].mxu0
        %v1780 = vadd.f32 0.0, %v1779
        %v1781 = vpop.f32.mrb[0].mxu0
        %1782 = vmatprep.mubr.f32.mxu0 0.0
        %1783 = vmatmul.mubr.f32.gmra.mrb[0].mxu0 %v1227
        %v1784 = vpop.f32.mrb[0].mxu0
        %v1785 = vadd.f32 0.0, %v1784
        %v1786 = vpop.f32.mrb[0].mxu0
        %1787 = vmatprep.mubr.f32.mxu0 0.0
        %1788 = vmatmul.mubr.f32.gmra.mrb[0].mxu0 %v1230
        %v1789 = vpop.f32.mrb[0].mxu0
        %v1790 = vadd.f32 0.0, %v1789
        %v1791 = vpop.f32.mrb[0].mxu0
        %1792 = vmatprep.mubr.f32.mxu0 0.0
        %1793 = vmatmul.mubr.f32.gmra.mrb[0].mxu0 %v1233
        %v1794 = vpop.f32.mrb[0].mxu0
        %v1795 = vadd.f32 0.0, %v1794
        %v1796 = vpop.f32.mrb[0].mxu0
        %1797 = vmatprep.mubr.f32.mxu0 0.0
        %1798 = vmatmul.mubr.f32.gmra.mrb[0].mxu0 %v1236
        %v1799 = vpop.f32.mrb[0].mxu0
        %v1800 = vadd.f32 0.0, %v1799
        %v1801 = vpop.f32.mrb[0].mxu0
        %1802 = vmatprep.mubr.f32.mxu0 0.0
        %1803 = vmatmul.mubr.f32.gmra.mrb[0].mxu0 %v1239
        %v1804 = vpop.f32.mrb[0].mxu0
        %v1805 = vadd.f32 0.0, %v1804
        %v1806 = vpop.f32.mrb[0].mxu0
        %1807 = vmatprep.mubr.f32.mxu0 0.0
        %1808 = vmatmul.mubr.f32.gmra.mrb[0].mxu0 %v1242
        %v1809 = vpop.f32.mrb[0].mxu0
        %v1810 = vadd.f32 0.0, %v1809
        %v1811 = vpop.f32.mrb[0].mxu0
        %1812 = vmatprep.mubr.f32.mxu0 0.0
        %1813 = vmatmul.mubr.f32.gmra.mrb[0].mxu0 %v1245
        %v1814 = vpop.f32.mrb[0].mxu0
        %v1815 = vadd.f32 0.0, %v1814
        %v1816 = vpop.f32.mrb[0].mxu0
        %1817 = vmatprep.mubr.f32.mxu0 0.0
        %1818 = vmatmul.mubr.f32.gmra.mrb[0].mxu0 %v1248
        %v1819 = vpop.f32.mrb[0].mxu0
        %v1820 = vadd.f32 0.0, %v1819
        %v1821 = vpop.f32.mrb[0].mxu0
        %1822 = vmatprep.mubr.f32.mxu0 0.0
        %1823 = vmatmul.mubr.f32.gmra.mrb[0].mxu0 %v1251
        %v1824 = vpop.f32.mrb[0].mxu0
        %v1825 = vadd.f32 0.0, %v1824
        %v1826 = vpop.f32.mrb[0].mxu0
        %1827 = vmatprep.mubr.f32.mxu0 0.0
        %1828 = vmatmul.mubr.f32.gmra.mrb[0].mxu0 %v1254
        %v1829 = vpop.f32.mrb[0].mxu0
        %v1830 = vadd.f32 0.0, %v1829
        %v1831 = vpop.f32.mrb[0].mxu0
        %1832 = vmatprep.mubr.f32.mxu0 0.0
        %1833 = vmatmul.mubr.f32.gmra.mrb[0].mxu0 %v1257
        %v1834 = vpop.f32.mrb[0].mxu0
        %v1835 = vadd.f32 0.0, %v1834
        %v1836 = vpop.f32.mrb[0].mxu0
        %1837 = vmatprep.mubr.f32.mxu0 0.0
        %1838 = vmatmul.mubr.f32.gmra.mrb[0].mxu0 %v1260
        %v1839 = vpop.f32.mrb[0].mxu0
        %v1840 = vadd.f32 0.0, %v1839
        %v1841 = vpop.f32.mrb[0].mxu0
        %1842 = vmatprep.mubr.f32.mxu0 0.0
        %1843 = vmatmul.mubr.f32.gmra.mrb[0].mxu0 %v1263
        %v1844 = vpop.f32.mrb[0].mxu0
        %v1845 = vadd.f32 0.0, %v1844
        %v1846 = vpop.f32.mrb[0].mxu0
        %1847 = vmatprep.mubr.f32.mxu0 0.0
        %1848 = vmatmul.mubr.f32.gmra.mrb[0].mxu0 %v1266
        %v1849 = vpop.f32.mrb[0].mxu0
        %v1850 = vadd.f32 0.0, %v1849
        %v1851 = vpop.f32.mrb[0].mxu0
        %1852 = vmatprep.mubr.f32.mxu0 0.0
        %1853 = vmatmul.mubr.f32.gmra.mrb[0].mxu0 %v1269
        %v1854 = vpop.f32.mrb[0].mxu0
        %v1855 = vadd.f32 0.0, %v1854
        %v1856 = vpop.f32.mrb[0].mxu0
        %1857 = vmatprep.mubr.f32.mxu0 0.0
        %1858 = vmatmul.mubr.f32.gmra.mrb[0].mxu0 %v1272
        %v1859 = vpop.f32.mrb[0].mxu0
        %v1860 = vadd.f32 0.0, %v1859
        %v1861 = vpop.f32.mrb[0].mxu0
        %1862 = vmatprep.mubr.f32.mxu0 0.0
        %1863 = vmatmul.mubr.f32.gmra.mrb[0].mxu0 %v1275
        %v1864 = vpop.f32.mrb[0].mxu0
        %v1865 = vadd.f32 0.0, %v1864
        %v1866 = vpop.f32.mrb[0].mxu0
        %1867 = vmatprep.mubr.f32.mxu0 0.0
        %1868 = vmatmul.mubr.f32.gmra.mrb[0].mxu0 %v1278
        %v1869 = vpop.f32.mrb[0].mxu0
        %v1870 = vadd.f32 0.0, %v1869
        %v1871 = vpop.f32.mrb[0].mxu0
        %1872 = vmatprep.mubr.f32.mxu0 0.0
        %1873 = vmatmul.mubr.f32.gmra.mrb[0].mxu0 %v1281
        %v1874 = vpop.f32.mrb[0].mxu0
        %v1875 = vadd.f32 0.0, %v1874
        %v1876 = vpop.f32.mrb[0].mxu0
        %1877 = vmatprep.mubr.f32.mxu0 0.0
        %1878 = vmatmul.mubr.f32.gmra.mrb[0].mxu0 %v1284
        %v1879 = vpop.f32.mrb[0].mxu0
        %v1880 = vadd.f32 0.0, %v1879
        %v1881 = vpop.f32.mrb[0].mxu0
        %1882 = vmatprep.mubr.f32.mxu0 0.0
        %1883 = vmatmul.mubr.f32.gmra.mrb[0].mxu0 %v1287
        %v1884 = vpop.f32.mrb[0].mxu0
        %v1885 = vadd.f32 0.0, %v1884
        %v1886 = vpop.f32.mrb[0].mxu0
        %1887 = vmatprep.mubr.f32.mxu0 0.0
        %1888 = vmatmul.mubr.f32.gmra.mrb[0].mxu0 %v1290
        %v1889 = vpop.f32.mrb[0].mxu0
        %v1890 = vadd.f32 0.0, %v1889
        %v1891 = vpop.f32.mrb[0].mxu0
        %1892 = vmatprep.mubr.f32.mxu0 0.0
        %1893 = vmatmul.mubr.f32.gmra.mrb[0].mxu0 %v1293
        %v1894 = vpop.f32.mrb[0].mxu0
        %v1895 = vadd.f32 0.0, %v1894
        %v1896 = vpop.f32.mrb[0].mxu0
        %1897 = vmatprep.mubr.f32.mxu0 0.0
        %1898 = vmatmul.mubr.f32.gmra.mrb[0].mxu0 %v1296
        %v1899 = vpop.f32.mrb[0].mxu0
        %v1900 = vadd.f32 0.0, %v1899
        %v1901 = vpop.f32.mrb[0].mxu0
        %1902 = vmatprep.mubr.f32.mxu0 0.0
        %1903 = vmatmul.mubr.f32.gmra.mrb[0].mxu0 %v1299
        %v1904 = vpop.f32.mrb[0].mxu0
        %v1905 = vadd.f32 0.0, %v1904
        %v1906 = vpop.f32.mrb[0].mxu0
        %1907 = vmatprep.mubr.f32.mxu0 0.0
        %1908 = vmatmul.mubr.f32.gmra.mrb[0].mxu0 %v1302
        %v1909 = vpop.f32.mrb[0].mxu0
        %v1910 = vadd.f32 0.0, %v1909
        %v1911 = vpop.f32.mrb[0].mxu0
        %1912 = vmatprep.mubr.f32.mxu0 0.0
        %1913 = vmatmul.mubr.f32.gmra.mrb[0].mxu0 %v1305
        %v1914 = vpop.f32.mrb[0].mxu0
        %v1915 = vadd.f32 0.0, %v1914
        %v1916 = vpop.f32.mrb[0].mxu0
        %1917 = vmatprep.mubr.f32.mxu0 0.0
        %1918 = vmatmul.mubr.f32.gmra.mrb[0].mxu0 %v1308
        %v1919 = vpop.f32.mrb[0].mxu0
        %v1920 = vadd.f32 0.0, %v1919
        %v1921 = vpop.f32.mrb[0].mxu0
        %1922 = vmatprep.mubr.f32.mxu0 0.0
        %1923 = vmatmul.mubr.f32.gmra.mrb[0].mxu0 %v1311
        %v1924 = vpop.f32.mrb[0].mxu0
        %v1925 = vadd.f32 0.0, %v1924
        %v1926 = vpop.f32.mrb[0].mxu0
        %1927 = vmatprep.mubr.f32.mxu0 0.0
        %1928 = vmatmul.mubr.f32.gmra.mrb[0].mxu0 %v1314
        %v1929 = vpop.f32.mrb[0].mxu0
        %v1930 = vadd.f32 0.0, %v1929
        %v1931 = vpop.f32.mrb[0].mxu0
        %1932 = vmatprep.mubr.f32.mxu0 0.0
        %1933 = vmatmul.mubr.f32.gmra.mrb[0].mxu0 %v1317
        %v1934 = vpop.f32.mrb[0].mxu0
        %v1935 = vadd.f32 0.0, %v1934
        %v1936 = vpop.f32.mrb[0].mxu0
        %1937 = vmatprep.mubr.f32.mxu0 0.0
        %1938 = vmatmul.mubr.f32.gmra.mrb[0].mxu0 %v1320
        %v1939 = vpop.f32.mrb[0].mxu0
        %v1940 = vadd.f32 0.0, %v1939
        %v1941 = vpop.f32.mrb[0].mxu0
        %1942 = vmatprep.mubr.f32.mxu0 0.0
        %1943 = vmatmul.mubr.f32.gmra.mrb[0].mxu0 %v1323
        %v1944 = vpop.f32.mrb[0].mxu0
        %v1945 = vadd.f32 0.0, %v1944
        %v1946 = vpop.f32.mrb[0].mxu0
        %1947 = vmatprep.mubr.f32.mxu0 0.0
        %1948 = vmatmul.mubr.f32.gmra.mrb[0].mxu0 %v1326
        %v1949 = vpop.f32.mrb[0].mxu0
        %v1950 = vadd.f32 0.0, %v1949
        %v1951 = vpop.f32.mrb[0].mxu0
        %1952 = vmatprep.mubr.f32.mxu0 0.0
        %1953 = vmatmul.mubr.f32.gmra.mrb[0].mxu0 %v1329
        %v1954 = vpop.f32.mrb[0].mxu0
        %v1955 = vadd.f32 0.0, %v1954
        %v1956 = vpop.f32.mrb[0].mxu0
        %1957 = vmatprep.mubr.f32.mxu0 0.0
        %1958 = vmatmul.mubr.f32.gmra.mrb[0].mxu0 %v1332
        %v1959 = vpop.f32.mrb[0].mxu0
        %v1960 = vadd.f32 0.0, %v1959
        %v1961 = vpop.f32.mrb[0].mxu0
        %1962 = vmatprep.mubr.f32.mxu0 0.0
        %1963 = vmatmul.mubr.f32.gmra.mrb[0].mxu0 %v1335
        %v1964 = vpop.f32.mrb[0].mxu0
        %v1965 = vadd.f32 0.0, %v1964
        %v1966 = vpop.f32.mrb[0].mxu0
        %1967 = vmatprep.mubr.f32.mxu0 0.0
        %1968 = vmatmul.mubr.f32.gmra.mrb[0].mxu0 %v1338
        %v1969 = vpop.f32.mrb[0].mxu0
        %v1970 = vadd.f32 0.0, %v1969
        %v1971 = vpop.f32.mrb[0].mxu0
        %1972 = vmatprep.mubr.f32.mxu0 0.0
        %1973 = vmatmul.mubr.f32.gmra.mrb[0].mxu0 %v1341
        %v1974 = vpop.f32.mrb[0].mxu0
        %v1975 = vadd.f32 0.0, %v1974
        %v1976 = vpop.f32.mrb[0].mxu0
        %1977 = vmatprep.mubr.f32.mxu0 0.0
        %1978 = vmatmul.mubr.f32.gmra.mrb[0].mxu0 %v1344
        %v1979 = vpop.f32.mrb[0].mxu0
        %v1980 = vadd.f32 0.0, %v1979
        %v1981 = vpop.f32.mrb[0].mxu0
        %1982 = vmatprep.mubr.f32.mxu0 0.0
        %1983 = vmatmul.mubr.f32.gmra.mrb[0].mxu0 %v1347
        %v1984 = vpop.f32.mrb[0].mxu0
        %v1985 = vadd.f32 0.0, %v1984
        %v1986 = vpop.f32.mrb[0].mxu0
        %1987 = vmatprep.mubr.f32.mxu0 0.0
        %1988 = vmatmul.mubr.f32.gmra.mrb[0].mxu0 %v1350
        %v1989 = vpop.f32.mrb[0].mxu0
        %v1990 = vadd.f32 0.0, %v1989
        %v1991 = vpop.f32.mrb[0].mxu0
        %1992 = vmatprep.mubr.f32.mxu0 0.0
        %1993 = vmatmul.mubr.f32.gmra.mrb[0].mxu0 %v1353
        %v1994 = vpop.f32.mrb[0].mxu0
        %v1995 = vadd.f32 0.0, %v1994
        %v1996 = vpop.f32.mrb[0].mxu0
        %1997 = vmatprep.mubr.f32.mxu0 0.0
        %1998 = vmatmul.mubr.f32.gmra.mrb[0].mxu0 %v1356
        %v1999 = vpop.f32.mrb[0].mxu0
        %v2000 = vadd.f32 0.0, %v1999
        %v2001 = vpop.f32.mrb[0].mxu0
        %2002 = vmatprep.mubr.f32.mxu0 0.0
        %2003 = vmatmul.mubr.f32.gmra.mrb[0].mxu0 %v1359
        %v2004 = vpop.f32.mrb[0].mxu0
        %v2005 = vadd.f32 0.0, %v2004
        %v2006 = vpop.f32.mrb[0].mxu0
        %2007 = vmatprep.mubr.f32.mxu0 0.0
        %2008 = vmatmul.mubr.f32.gmra.mrb[0].mxu0 %v1362
        %v2009 = vpop.f32.mrb[0].mxu0
        %v2010 = vadd.f32 0.0, %v2009
        %v2011 = vpop.f32.mrb[0].mxu0
        %2012 = vmatprep.mubr.f32.mxu0 0.0
        %2013 = vmatmul.mubr.f32.gmra.mrb[0].mxu0 %v1365
        %v2014 = vpop.f32.mrb[0].mxu0
        %v2015 = vadd.f32 0.0, %v2014
        %v2016 = vpop.f32.mrb[0].mxu0
        %2017 = vmatprep.mubr.f32.mxu0 0.0
        %2018 = vmatmul.mubr.f32.gmra.mrb[0].mxu0 %v1368
        %v2019 = vpop.f32.mrb[0].mxu0
        %v2020 = vadd.f32 0.0, %v2019
        %v2021 = vpop.f32.mrb[0].mxu0
        %2022 = vmatprep.mubr.f32.mxu0 0.0
        %2023 = vmatmul.mubr.f32.gmra.mrb[0].mxu0 %v1371
        %v2024 = vpop.f32.mrb[0].mxu0
        %v2025 = vadd.f32 0.0, %v2024
        %v2026 = vpop.f32.mrb[0].mxu0
        %2027 = vmatprep.mubr.f32.mxu0 0.0
        %2028 = vmatmul.mubr.f32.gmra.mrb[0].mxu0 %v1374
        %v2029 = vpop.f32.mrb[0].mxu0
        %v2030 = vadd.f32 0.0, %v2029
        %v2031 = vpop.f32.mrb[0].mxu0
        %2032 = vmatprep.mubr.f32.mxu0 0.0
        %2033 = vmatmul.mubr.f32.gmra.mrb[0].mxu0 %v1377
        %v2034 = vpop.f32.mrb[0].mxu0
        %v2035 = vadd.f32 0.0, %v2034
        %v2036 = vpop.f32.mrb[0].mxu0
        %2037 = vmatprep.mubr.f32.mxu0 0.0
        %2038 = vmatmul.mubr.f32.gmra.mrb[0].mxu0 %v1380
        %v2039 = vpop.f32.mrb[0].mxu0
        %v2040 = vadd.f32 0.0, %v2039
        %v2041 = vpop.f32.mrb[0].mxu0
        %2042 = vmatprep.mubr.f32.mxu0 0.0
        %2043 = vmatmul.mubr.f32.gmra.mrb[0].mxu0 %v1383
        %v2044 = vpop.f32.mrb[0].mxu0
        %v2045 = vadd.f32 0.0, %v2044
        %v2046 = vpop.f32.mrb[0].mxu0
        %2047 = vmatprep.mubr.f32.mxu0 0.0
        %2048 = vmatmul.mubr.f32.gmra.mrb[0].mxu0 %v1386
        %v2049 = vpop.f32.mrb[0].mxu0
        %v2050 = vadd.f32 0.0, %v2049
        %v2051 = vpop.f32.mrb[0].mxu0
        %2052 = vmatprep.mubr.f32.mxu0 0.0
        %2053 = vmatmul.mubr.f32.gmra.mrb[0].mxu0 %v1389
        %v2054 = vpop.f32.mrb[0].mxu0
        %v2055 = vadd.f32 0.0, %v2054
        %v2056 = vpop.f32.mrb[0].mxu0
        %2057 = vmatprep.mubr.f32.mxu0 0.0
        %2058 = vmatmul.mubr.f32.gmra.mrb[0].mxu0 %v1392
        %v2059 = vpop.f32.mrb[0].mxu0
        %v2060 = vadd.f32 0.0, %v2059
        %v2061 = vpop.f32.mrb[0].mxu0
        %2062 = vmatprep.mubr.f32.mxu0 0.0
        %2063 = vmatmul.mubr.f32.gmra.mrb[0].mxu0 %v1395
        %v2064 = vpop.f32.mrb[0].mxu0
        %v2065 = vadd.f32 0.0, %v2064
        %v2066 = vpop.f32.mrb[0].mxu0
        %2067 = vmatprep.mubr.f32.mxu0 0.0
        %2068 = vmatmul.mubr.f32.gmra.mrb[0].mxu0 %v1398
        %v2069 = vpop.f32.mrb[0].mxu0
        %v2070 = vadd.f32 0.0, %v2069
        %v2071 = vpop.f32.mrb[0].mxu0
        %2072 = vmatprep.mubr.f32.mxu0 0.0
        %2073 = vmatmul.mubr.f32.gmra.mrb[0].mxu0 %v1401
        %v2074 = vpop.f32.mrb[0].mxu0
        %v2075 = vadd.f32 0.0, %v2074
        %v2076 = vpop.f32.mrb[0].mxu0
        %2077 = vmatprep.mubr.f32.mxu0 0.0
        %2078 = vmatmul.mubr.f32.gmra.mrb[0].mxu0 %v1404
        %v2079 = vpop.f32.mrb[0].mxu0
        %v2080 = vadd.f32 0.0, %v2079
        %v2081 = vpop.f32.mrb[0].mxu0
        %2082 = vmatprep.mubr.f32.mxu0 0.0
        %2083 = vmatmul.mubr.f32.gmra.mrb[0].mxu0 %v1407
        %v2084 = vpop.f32.mrb[0].mxu0
        %v2085 = vadd.f32 0.0, %v2084
        %v2086 = vpop.f32.mrb[0].mxu0
        %2087 = vmatprep.mubr.f32.mxu0 0.0
        %2088 = vmatmul.mubr.f32.gmra.mrb[0].mxu0 %v1410
        %v2089 = vpop.f32.mrb[0].mxu0
        %v2090 = vadd.f32 0.0, %v2089
        %v2091 = vpop.f32.mrb[0].mxu0
        %2092 = vmatprep.mubr.f32.mxu0 0.0
        %2093 = vmatmul.mubr.f32.gmra.mrb[0].mxu0 %v1413
        %v2094 = vpop.f32.mrb[0].mxu0
        %v2095 = vadd.f32 0.0, %v2094
        %v2096 = vpop.f32.mrb[0].mxu0
        %2097 = vmatprep.mubr.f32.mxu0 0.0
        %2098 = vmatmul.mubr.f32.gmra.mrb[0].mxu0 %v1416
        %v2099 = vpop.f32.mrb[0].mxu0
        %v2100 = vadd.f32 0.0, %v2099
        %v2101 = vpop.f32.mrb[0].mxu0
        %2102 = vmatprep.mubr.f32.mxu0 0.0
        %2103 = vmatmul.mubr.f32.gmra.mrb[0].mxu0 %v1419
        %v2104 = vpop.f32.mrb[0].mxu0
        %v2105 = vadd.f32 0.0, %v2104
        %v2106 = vpop.f32.mrb[0].mxu0
        %2107 = vmatprep.mubr.f32.mxu0 0.0
        %2108 = vmatmul.mubr.f32.gmra.mrb[0].mxu0 %v1422
        %v2109 = vpop.f32.mrb[0].mxu0
        %v2110 = vadd.f32 0.0, %v2109
        %v2111 = vpop.f32.mrb[0].mxu0
        %2112 = vmatprep.mubr.f32.mxu0 0.0
        %2113 = vmatmul.mubr.f32.gmra.mrb[0].mxu0 %v1425
        %v2114 = vpop.f32.mrb[0].mxu0
        %v2115 = vadd.f32 0.0, %v2114
        %v2116 = vpop.f32.mrb[0].mxu0
        %2117 = vmatprep.mubr.f32.mxu0 0.0
        %2118 = vmatmul.mubr.f32.gmra.mrb[0].mxu0 %v1428
        %v2119 = vpop.f32.mrb[0].mxu0
        %v2120 = vadd.f32 0.0, %v2119
        %v2121 = vpop.f32.mrb[0].mxu0
        %2122 = vmatprep.mubr.f32.mxu0 0.0
        %2123 = vmatmul.mubr.f32.gmra.mrb[0].mxu0 %v1431
        %v2124 = vpop.f32.mrb[0].mxu0
        %v2125 = vadd.f32 0.0, %v2124
        %v2126 = vpop.f32.mrb[0].mxu0
        %2127 = vmatprep.mubr.f32.mxu0 0.0
        %2128 = vmatmul.mubr.f32.gmra.mrb[0].mxu0 %v1434
        %v2129 = vpop.f32.mrb[0].mxu0
        %v2130 = vadd.f32 0.0, %v2129
        %v2131 = vpop.f32.mrb[0].mxu0
        %2132 = vmatprep.mubr.f32.mxu0 0.0
        %2133 = vmatmul.mubr.f32.gmra.mrb[0].mxu0 %v1437
        %v2134 = vpop.f32.mrb[0].mxu0
        %v2135 = vadd.f32 0.0, %v2134
        %v2136 = vpop.f32.mrb[0].mxu0
        %2137 = vmatprep.mubr.f32.mxu0 0.0
        %2138 = vmatmul.mubr.f32.gmra.mrb[0].mxu0 %v1440
        %v2139 = vpop.f32.mrb[0].mxu0
        %v2140 = vadd.f32 0.0, %v2139
        %v2141 = vpop.f32.mrb[0].mxu0
        %2142 = vmatprep.mubr.f32.mxu0 0.0
        %2143 = vmatmul.mubr.f32.gmra.mrb[0].mxu0 %v1443
        %v2144 = vpop.f32.mrb[0].mxu0
        %v2145 = vadd.f32 0.0, %v2144
        %v2146 = vpop.f32.mrb[0].mxu0
        %2147 = vmatprep.mubr.f32.mxu0 0.0
        %2148 = vmatmul.mubr.f32.gmra.mrb[0].mxu0 %v1446
        %v2149 = vpop.f32.mrb[0].mxu0
        %v2150 = vadd.f32 0.0, %v2149
        %v2151 = vpop.f32.mrb[0].mxu0
        %2152 = vdwg.mxu0
        %v2153 = vadd.f32 %v1515, %v929
        %v2154 = vadd.f32 %v1520, %v929
        %v2155 = vadd.f32 %v1525, %v929
        %v2156 = vadd.f32 %v1530, %v929
        %v2157 = vadd.f32 %v1535, %v929
        %v2158 = vadd.f32 %v1540, %v929
        %v2159 = vadd.f32 %v1545, %v929
        %v2160 = vadd.f32 %v1550, %v929
        %v2161 = vadd.f32 %v1555, %v929
        %v2162 = vadd.f32 %v1560, %v929
        %v2163 = vadd.f32 %v1565, %v929
        %v2164 = vadd.f32 %v1570, %v929
        %v2165 = vadd.f32 %v1575, %v929
        %v2166 = vadd.f32 %v1580, %v929
        %v2167 = vadd.f32 %v1585, %v929
        %v2168 = vadd.f32 %v1590, %v929
        %v2169 = vadd.f32 %v1595, %v929
        %v2170 = vadd.f32 %v1600, %v929
        %v2171 = vadd.f32 %v1605, %v929
        %v2172 = vadd.f32 %v1610, %v929
        %v2173 = vadd.f32 %v1615, %v929
        %v2174 = vadd.f32 %v1620, %v929
        %v2175 = vadd.f32 %v1625, %v929
        %v2176 = vadd.f32 %v1630, %v929
        %v2177 = vadd.f32 %v1635, %v929
        %v2178 = vadd.f32 %v1640, %v929
        %v2179 = vadd.f32 %v1645, %v929
        %v2180 = vadd.f32 %v1650, %v929
        %v2181 = vadd.f32 %v1655, %v929
        %v2182 = vadd.f32 %v1660, %v929
        %v2183 = vadd.f32 %v1665, %v929
        %v2184 = vadd.f32 %v1670, %v929
        %v2185 = vadd.f32 %v1675, %v929
        %v2186 = vadd.f32 %v1680, %v929
        %v2187 = vadd.f32 %v1685, %v929
        %v2188 = vadd.f32 %v1690, %v929
        %v2189 = vadd.f32 %v1695, %v929
        %v2190 = vadd.f32 %v1700, %v929
        %v2191 = vadd.f32 %v1705, %v929
        %v2192 = vadd.f32 %v1710, %v929
        %v2193 = vadd.f32 %v1715, %v929
        %v2194 = vadd.f32 %v1720, %v929
        %v2195 = vadd.f32 %v1725, %v929
        %v2196 = vadd.f32 %v1730, %v929
        %v2197 = vadd.f32 %v1735, %v929
        %v2198 = vadd.f32 %v1740, %v929
        %v2199 = vadd.f32 %v1745, %v929
        %v2200 = vadd.f32 %v1750, %v929
        %v2201 = vadd.f32 %v1755, %v929
        %v2202 = vadd.f32 %v1760, %v929
        %v2203 = vadd.f32 %v1765, %v929
        %v2204 = vadd.f32 %v1770, %v929
        %v2205 = vadd.f32 %v1775, %v929
        %v2206 = vadd.f32 %v1780, %v929
        %v2207 = vadd.f32 %v1785, %v929
        %v2208 = vadd.f32 %v1790, %v929
        %v2209 = vadd.f32 %v1795, %v929
        %v2210 = vadd.f32 %v1800, %v929
        %v2211 = vadd.f32 %v1805, %v929
        %v2212 = vadd.f32 %v1810, %v929
        %v2213 = vadd.f32 %v1815, %v929
        %v2214 = vadd.f32 %v1820, %v929
        %v2215 = vadd.f32 %v1825, %v929
        %v2216 = vadd.f32 %v1830, %v929
        %v2217 = vadd.f32 %v1835, %v929
        %v2218 = vadd.f32 %v1840, %v929
        %v2219 = vadd.f32 %v1845, %v929
        %v2220 = vadd.f32 %v1850, %v929
        %v2221 = vadd.f32 %v1855, %v929
        %v2222 = vadd.f32 %v1860, %v929
        %v2223 = vadd.f32 %v1865, %v929
        %v2224 = vadd.f32 %v1870, %v929
        %v2225 = vadd.f32 %v1875, %v929
        %v2226 = vadd.f32 %v1880, %v929
        %v2227 = vadd.f32 %v1885, %v929
        %v2228 = vadd.f32 %v1890, %v929
        %v2229 = vadd.f32 %v1895, %v929
        %v2230 = vadd.f32 %v1900, %v929
        %v2231 = vadd.f32 %v1905, %v929
        %v2232 = vadd.f32 %v1910, %v929
        %v2233 = vadd.f32 %v1915, %v929
        %v2234 = vadd.f32 %v1920, %v929
        %v2235 = vadd.f32 %v1925, %v929
        %v2236 = vadd.f32 %v1930, %v929
        %v2237 = vadd.f32 %v1935, %v929
        %v2238 = vadd.f32 %v1940, %v929
        %v2239 = vadd.f32 %v1945, %v929
        %v2240 = vadd.f32 %v1950, %v929
        %v2241 = vadd.f32 %v1955, %v929
        %v2242 = vadd.f32 %v1960, %v929
        %v2243 = vadd.f32 %v1965, %v929
        %v2244 = vadd.f32 %v1970, %v929
        %v2245 = vadd.f32 %v1975, %v929
        %v2246 = vadd.f32 %v1980, %v929
        %v2247 = vadd.f32 %v1985, %v929
        %v2248 = vadd.f32 %v1990, %v929
        %v2249 = vadd.f32 %v1995, %v929
        %v2250 = vadd.f32 %v2000, %v929
        %v2251 = vadd.f32 %v2005, %v929
        %v2252 = vadd.f32 %v2010, %v929
        %v2253 = vadd.f32 %v2015, %v929
        %v2254 = vadd.f32 %v2020, %v929
        %v2255 = vadd.f32 %v2025, %v929
        %v2256 = vadd.f32 %v2030, %v929
        %v2257 = vadd.f32 %v2035, %v929
        %v2258 = vadd.f32 %v2040, %v929
        %v2259 = vadd.f32 %v2045, %v929
        %v2260 = vadd.f32 %v2050, %v929
        %v2261 = vadd.f32 %v2055, %v929
        %v2262 = vadd.f32 %v2060, %v929
        %v2263 = vadd.f32 %v2065, %v929
        %v2264 = vadd.f32 %v2070, %v929
        %v2265 = vadd.f32 %v2075, %v929
        %v2266 = vadd.f32 %v2080, %v929
        %v2267 = vadd.f32 %v2085, %v929
        %v2268 = vadd.f32 %v2090, %v929
        %v2269 = vadd.f32 %v2095, %v929
        %v2270 = vadd.f32 %v2100, %v929
        %v2271 = vadd.f32 %v2105, %v929
        %v2272 = vadd.f32 %v2110, %v929
        %v2273 = vadd.f32 %v2115, %v929
        %v2274 = vadd.f32 %v2120, %v929
        %v2275 = vadd.f32 %v2125, %v929
        %v2276 = vadd.f32 %v2130, %v929
        %v2277 = vadd.f32 %v2135, %v929
        %v2278 = vadd.f32 %v2140, %v929
        %v2279 = vadd.f32 %v2145, %v929
        %v2280 = vadd.f32 %v2150, %v929
        %v2281 = vld [vmem:[%s5] sm:$0x1]
        %v2283 = vlaneseq
        %v2284 = vshrl.u32 %v2283, 7
        %v2285 = vsub.s32 0, %v2284
        %v2286 = vrot.slane %v2281, %v2285
        %v2288 = vadd.f32 %v2153, %v2286
        %v2289 = vadd.f32 %v2154, %v2286
        %v2290 = vadd.f32 %v2155, %v2286
        %v2291 = vadd.f32 %v2156, %v2286
        %v2292 = vadd.f32 %v2157, %v2286
        %v2293 = vadd.f32 %v2158, %v2286
        %v2294 = vadd.f32 %v2159, %v2286
        %v2295 = vadd.f32 %v2160, %v2286
        %v2296 = vadd.f32 %v2161, %v2286
        %v2297 = vadd.f32 %v2162, %v2286
        %v2298 = vadd.f32 %v2163, %v2286
        %v2299 = vadd.f32 %v2164, %v2286
        %v2300 = vadd.f32 %v2165, %v2286
        %v2301 = vadd.f32 %v2166, %v2286
        %v2302 = vadd.f32 %v2167, %v2286
        %v2303 = vadd.f32 %v2168, %v2286
        %v2304 = vadd.f32 %v2169, %v2286
        %v2305 = vadd.f32 %v2170, %v2286
        %v2306 = vadd.f32 %v2171, %v2286
        %v2307 = vadd.f32 %v2172, %v2286
        %v2308 = vadd.f32 %v2173, %v2286
        %v2309 = vadd.f32 %v2174, %v2286
        %v2310 = vadd.f32 %v2175, %v2286
        %v2311 = vadd.f32 %v2176, %v2286
        %v2312 = vadd.f32 %v2177, %v2286
        %v2313 = vadd.f32 %v2178, %v2286
        %v2314 = vadd.f32 %v2179, %v2286
        %v2315 = vadd.f32 %v2180, %v2286
        %v2316 = vadd.f32 %v2181, %v2286
        %v2317 = vadd.f32 %v2182, %v2286
        %v2318 = vadd.f32 %v2183, %v2286
        %v2319 = vadd.f32 %v2184, %v2286
        %v2320 = vadd.f32 %v2185, %v2286
        %v2321 = vadd.f32 %v2186, %v2286
        %v2322 = vadd.f32 %v2187, %v2286
        %v2323 = vadd.f32 %v2188, %v2286
        %v2324 = vadd.f32 %v2189, %v2286
        %v2325 = vadd.f32 %v2190, %v2286
        %v2326 = vadd.f32 %v2191, %v2286
        %v2327 = vadd.f32 %v2192, %v2286
        %v2328 = vadd.f32 %v2193, %v2286
        %v2329 = vadd.f32 %v2194, %v2286
        %v2330 = vadd.f32 %v2195, %v2286
        %v2331 = vadd.f32 %v2196, %v2286
        %v2332 = vadd.f32 %v2197, %v2286
        %v2333 = vadd.f32 %v2198, %v2286
        %v2334 = vadd.f32 %v2199, %v2286
        %v2335 = vadd.f32 %v2200, %v2286
        %v2336 = vadd.f32 %v2201, %v2286
        %v2337 = vadd.f32 %v2202, %v2286
        %v2338 = vadd.f32 %v2203, %v2286
        %v2339 = vadd.f32 %v2204, %v2286
        %v2340 = vadd.f32 %v2205, %v2286
        %v2341 = vadd.f32 %v2206, %v2286
        %v2342 = vadd.f32 %v2207, %v2286
        %v2343 = vadd.f32 %v2208, %v2286
        %v2344 = vadd.f32 %v2209, %v2286
        %v2345 = vadd.f32 %v2210, %v2286
        %v2346 = vadd.f32 %v2211, %v2286
        %v2347 = vadd.f32 %v2212, %v2286
        %v2348 = vadd.f32 %v2213, %v2286
        %v2349 = vadd.f32 %v2214, %v2286
        %v2350 = vadd.f32 %v2215, %v2286
        %v2351 = vadd.f32 %v2216, %v2286
        %v2352 = vadd.f32 %v2217, %v2286
        %v2353 = vadd.f32 %v2218, %v2286
        %v2354 = vadd.f32 %v2219, %v2286
        %v2355 = vadd.f32 %v2220, %v2286
        %v2356 = vadd.f32 %v2221, %v2286
        %v2357 = vadd.f32 %v2222, %v2286
        %v2358 = vadd.f32 %v2223, %v2286
        %v2359 = vadd.f32 %v2224, %v2286
        %v2360 = vadd.f32 %v2225, %v2286
        %v2361 = vadd.f32 %v2226, %v2286
        %v2362 = vadd.f32 %v2227, %v2286
        %v2363 = vadd.f32 %v2228, %v2286
        %v2364 = vadd.f32 %v2229, %v2286
        %v2365 = vadd.f32 %v2230, %v2286
        %v2366 = vadd.f32 %v2231, %v2286
        %v2367 = vadd.f32 %v2232, %v2286
        %v2368 = vadd.f32 %v2233, %v2286
        %v2369 = vadd.f32 %v2234, %v2286
        %v2370 = vadd.f32 %v2235, %v2286
        %v2371 = vadd.f32 %v2236, %v2286
        %v2372 = vadd.f32 %v2237, %v2286
        %v2373 = vadd.f32 %v2238, %v2286
        %v2374 = vadd.f32 %v2239, %v2286
        %v2375 = vadd.f32 %v2240, %v2286
        %v2376 = vadd.f32 %v2241, %v2286
        %v2377 = vadd.f32 %v2242, %v2286
        %v2378 = vadd.f32 %v2243, %v2286
        %v2379 = vadd.f32 %v2244, %v2286
        %v2380 = vadd.f32 %v2245, %v2286
        %v2381 = vadd.f32 %v2246, %v2286
        %v2382 = vadd.f32 %v2247, %v2286
        %v2383 = vadd.f32 %v2248, %v2286
        %v2384 = vadd.f32 %v2249, %v2286
        %v2385 = vadd.f32 %v2250, %v2286
        %v2386 = vadd.f32 %v2251, %v2286
        %v2387 = vadd.f32 %v2252, %v2286
        %v2388 = vadd.f32 %v2253, %v2286
        %v2389 = vadd.f32 %v2254, %v2286
        %v2390 = vadd.f32 %v2255, %v2286
        %v2391 = vadd.f32 %v2256, %v2286
        %v2392 = vadd.f32 %v2257, %v2286
        %v2393 = vadd.f32 %v2258, %v2286
        %v2394 = vadd.f32 %v2259, %v2286
        %v2395 = vadd.f32 %v2260, %v2286
        %v2396 = vadd.f32 %v2261, %v2286
        %v2397 = vadd.f32 %v2262, %v2286
        %v2398 = vadd.f32 %v2263, %v2286
        %v2399 = vadd.f32 %v2264, %v2286
        %v2400 = vadd.f32 %v2265, %v2286
        %v2401 = vadd.f32 %v2266, %v2286
        %v2402 = vadd.f32 %v2267, %v2286
        %v2403 = vadd.f32 %v2268, %v2286
        %v2404 = vadd.f32 %v2269, %v2286
        %v2405 = vadd.f32 %v2270, %v2286
        %v2406 = vadd.f32 %v2271, %v2286
        %v2407 = vadd.f32 %v2272, %v2286
        %v2408 = vadd.f32 %v2273, %v2286
        %v2409 = vadd.f32 %v2274, %v2286
        %v2410 = vadd.f32 %v2275, %v2286
        %v2411 = vadd.f32 %v2276, %v2286
        %v2412 = vadd.f32 %v2277, %v2286
        %v2413 = vadd.f32 %v2278, %v2286
        %v2414 = vadd.f32 %v2279, %v2286
        %v2415 = vadd.f32 %v2280, %v2286
        %v2416 = vtanh.pop %v2288
        %v2417 = vtanh.pop %v2289
        %v2418 = vtanh.pop %v2290
        %v2419 = vtanh.pop %v2291
        %v2420 = vtanh.pop %v2292
        %v2421 = vtanh.pop %v2293
        %v2422 = vtanh.pop %v2294
        %v2423 = vtanh.pop %v2295
        %v2424 = vtanh.pop %v2296
        %v2425 = vtanh.pop %v2297
        %v2426 = vtanh.pop %v2298
        %v2427 = vtanh.pop %v2299
        %v2428 = vtanh.pop %v2300
        %v2429 = vtanh.pop %v2301
        %v2430 = vtanh.pop %v2302
        %v2431 = vtanh.pop %v2303
        %v2432 = vtanh.pop %v2304
        %v2433 = vtanh.pop %v2305
        %v2434 = vtanh.pop %v2306
        %v2435 = vtanh.pop %v2307
        %v2436 = vtanh.pop %v2308
        %v2437 = vtanh.pop %v2309
        %v2438 = vtanh.pop %v2310
        %v2439 = vtanh.pop %v2311
        %v2440 = vtanh.pop %v2312
        %v2441 = vtanh.pop %v2313
        %v2442 = vtanh.pop %v2314
        %v2443 = vtanh.pop %v2315
        %v2444 = vtanh.pop %v2316
        %v2445 = vtanh.pop %v2317
        %v2446 = vtanh.pop %v2318
        %v2447 = vtanh.pop %v2319
        %v2448 = vtanh.pop %v2320
        %v2449 = vtanh.pop %v2321
        %v2450 = vtanh.pop %v2322
        %v2451 = vtanh.pop %v2323
        %v2452 = vtanh.pop %v2324
        %v2453 = vtanh.pop %v2325
        %v2454 = vtanh.pop %v2326
        %v2455 = vtanh.pop %v2327
        %v2456 = vtanh.pop %v2328
        %v2457 = vtanh.pop %v2329
        %v2458 = vtanh.pop %v2330
        %v2459 = vtanh.pop %v2331
        %v2460 = vtanh.pop %v2332
        %v2461 = vtanh.pop %v2333
        %v2462 = vtanh.pop %v2334
        %v2463 = vtanh.pop %v2335
        %v2464 = vtanh.pop %v2336
        %v2465 = vtanh.pop %v2337
        %v2466 = vtanh.pop %v2338
        %v2467 = vtanh.pop %v2339
        %v2468 = vtanh.pop %v2340
        %v2469 = vtanh.pop %v2341
        %v2470 = vtanh.pop %v2342
        %v2471 = vtanh.pop %v2343
        %v2472 = vtanh.pop %v2344
        %v2473 = vtanh.pop %v2345
        %v2474 = vtanh.pop %v2346
        %v2475 = vtanh.pop %v2347
        %v2476 = vtanh.pop %v2348
        %v2477 = vtanh.pop %v2349
        %v2478 = vtanh.pop %v2350
        %v2479 = vtanh.pop %v2351
        %v2480 = vtanh.pop %v2352
        %v2481 = vtanh.pop %v2353
        %v2482 = vtanh.pop %v2354
        %v2483 = vtanh.pop %v2355
        %v2484 = vtanh.pop %v2356
        %v2485 = vtanh.pop %v2357
        %v2486 = vtanh.pop %v2358
        %v2487 = vtanh.pop %v2359
        %v2488 = vtanh.pop %v2360
        %v2489 = vtanh.pop %v2361
        %v2490 = vtanh.pop %v2362
        %v2491 = vtanh.pop %v2363
        %v2492 = vtanh.pop %v2364
        %v2493 = vtanh.pop %v2365
        %v2494 = vtanh.pop %v2366
        %v2495 = vtanh.pop %v2367
        %v2496 = vtanh.pop %v2368
        %v2497 = vtanh.pop %v2369
        %v2498 = vtanh.pop %v2370
        %v2499 = vtanh.pop %v2371
        %v2500 = vtanh.pop %v2372
        %v2501 = vtanh.pop %v2373
        %v2502 = vtanh.pop %v2374
        %v2503 = vtanh.pop %v2375
        %v2504 = vtanh.pop %v2376
        %v2505 = vtanh.pop %v2377
        %v2506 = vtanh.pop %v2378
        %v2507 = vtanh.pop %v2379
        %v2508 = vtanh.pop %v2380
        %v2509 = vtanh.pop %v2381
        %v2510 = vtanh.pop %v2382
        %v2511 = vtanh.pop %v2383
        %v2512 = vtanh.pop %v2384
        %v2513 = vtanh.pop %v2385
        %v2514 = vtanh.pop %v2386
        %v2515 = vtanh.pop %v2387
        %v2516 = vtanh.pop %v2388
        %v2517 = vtanh.pop %v2389
        %v2518 = vtanh.pop %v2390
        %v2519 = vtanh.pop %v2391
        %v2520 = vtanh.pop %v2392
        %v2521 = vtanh.pop %v2393
        %v2522 = vtanh.pop %v2394
        %v2523 = vtanh.pop %v2395
        %v2524 = vtanh.pop %v2396
        %v2525 = vtanh.pop %v2397
        %v2526 = vtanh.pop %v2398
        %v2527 = vtanh.pop %v2399
        %v2528 = vtanh.pop %v2400
        %v2529 = vtanh.pop %v2401
        %v2530 = vtanh.pop %v2402
        %v2531 = vtanh.pop %v2403
        %v2532 = vtanh.pop %v2404
        %v2533 = vtanh.pop %v2405
        %v2534 = vtanh.pop %v2406
        %v2535 = vtanh.pop %v2407
        %v2536 = vtanh.pop %v2408
        %v2537 = vtanh.pop %v2409
        %v2538 = vtanh.pop %v2410
        %v2539 = vtanh.pop %v2411
        %v2540 = vtanh.pop %v2412
        %v2541 = vtanh.pop %v2413
        %v2542 = vtanh.pop %v2414
        %v2543 = vtanh.pop %v2415
        %v2544 = vld [vmem:[%s6] sm:$0x1]
        %v2546 = vlaneseq
        %v2547 = vshrl.u32 %v2546, 7
        %v2548 = vsub.s32 0, %v2547
        %v2549 = vrot.slane %v2544, %v2548
        %v2551 = vmul.f32 %v2416, %v2549
        %v2552 = vmul.f32 %v2417, %v2549
        %v2553 = vmul.f32 %v2418, %v2549
        %v2554 = vmul.f32 %v2419, %v2549
        %v2555 = vmul.f32 %v2420, %v2549
        %v2556 = vmul.f32 %v2421, %v2549
        %v2557 = vmul.f32 %v2422, %v2549
        %v2558 = vmul.f32 %v2423, %v2549
        %v2559 = vmul.f32 %v2424, %v2549
        %v2560 = vmul.f32 %v2425, %v2549
        %v2561 = vmul.f32 %v2426, %v2549
        %v2562 = vmul.f32 %v2427, %v2549
        %v2563 = vmul.f32 %v2428, %v2549
        %v2564 = vmul.f32 %v2429, %v2549
        %v2565 = vmul.f32 %v2430, %v2549
        %v2566 = vmul.f32 %v2431, %v2549
        %v2567 = vmul.f32 %v2432, %v2549
        %v2568 = vmul.f32 %v2433, %v2549
        %v2569 = vmul.f32 %v2434, %v2549
        %v2570 = vmul.f32 %v2435, %v2549
        %v2571 = vmul.f32 %v2436, %v2549
        %v2572 = vmul.f32 %v2437, %v2549
        %v2573 = vmul.f32 %v2438, %v2549
        %v2574 = vmul.f32 %v2439, %v2549
        %v2575 = vmul.f32 %v2440, %v2549
        %v2576 = vmul.f32 %v2441, %v2549
        %v2577 = vmul.f32 %v2442, %v2549
        %v2578 = vmul.f32 %v2443, %v2549
        %v2579 = vmul.f32 %v2444, %v2549
        %v2580 = vmul.f32 %v2445, %v2549
        %v2581 = vmul.f32 %v2446, %v2549
        %v2582 = vmul.f32 %v2447, %v2549
        %v2583 = vmul.f32 %v2448, %v2549
        %v2584 = vmul.f32 %v2449, %v2549
        %v2585 = vmul.f32 %v2450, %v2549
        %v2586 = vmul.f32 %v2451, %v2549
        %v2587 = vmul.f32 %v2452, %v2549
        %v2588 = vmul.f32 %v2453, %v2549
        %v2589 = vmul.f32 %v2454, %v2549
        %v2590 = vmul.f32 %v2455, %v2549
        %v2591 = vmul.f32 %v2456, %v2549
        %v2592 = vmul.f32 %v2457, %v2549
        %v2593 = vmul.f32 %v2458, %v2549
        %v2594 = vmul.f32 %v2459, %v2549
        %v2595 = vmul.f32 %v2460, %v2549
        %v2596 = vmul.f32 %v2461, %v2549
        %v2597 = vmul.f32 %v2462, %v2549
        %v2598 = vmul.f32 %v2463, %v2549
        %v2599 = vmul.f32 %v2464, %v2549
        %v2600 = vmul.f32 %v2465, %v2549
        %v2601 = vmul.f32 %v2466, %v2549
        %v2602 = vmul.f32 %v2467, %v2549
        %v2603 = vmul.f32 %v2468, %v2549
        %v2604 = vmul.f32 %v2469, %v2549
        %v2605 = vmul.f32 %v2470, %v2549
        %v2606 = vmul.f32 %v2471, %v2549
        %v2607 = vmul.f32 %v2472, %v2549
        %v2608 = vmul.f32 %v2473, %v2549
        %v2609 = vmul.f32 %v2474, %v2549
        %v2610 = vmul.f32 %v2475, %v2549
        %v2611 = vmul.f32 %v2476, %v2549
        %v2612 = vmul.f32 %v2477, %v2549
        %v2613 = vmul.f32 %v2478, %v2549
        %v2614 = vmul.f32 %v2479, %v2549
        %v2615 = vmul.f32 %v2480, %v2549
        %v2616 = vmul.f32 %v2481, %v2549
        %v2617 = vmul.f32 %v2482, %v2549
        %v2618 = vmul.f32 %v2483, %v2549
        %v2619 = vmul.f32 %v2484, %v2549
        %v2620 = vmul.f32 %v2485, %v2549
        %v2621 = vmul.f32 %v2486, %v2549
        %v2622 = vmul.f32 %v2487, %v2549
        %v2623 = vmul.f32 %v2488, %v2549
        %v2624 = vmul.f32 %v2489, %v2549
        %v2625 = vmul.f32 %v2490, %v2549
        %v2626 = vmul.f32 %v2491, %v2549
        %v2627 = vmul.f32 %v2492, %v2549
        %v2628 = vmul.f32 %v2493, %v2549
        %v2629 = vmul.f32 %v2494, %v2549
        %v2630 = vmul.f32 %v2495, %v2549
        %v2631 = vmul.f32 %v2496, %v2549
        %v2632 = vmul.f32 %v2497, %v2549
        %v2633 = vmul.f32 %v2498, %v2549
        %v2634 = vmul.f32 %v2499, %v2549
        %v2635 = vmul.f32 %v2500, %v2549
        %v2636 = vmul.f32 %v2501, %v2549
        %v2637 = vmul.f32 %v2502, %v2549
        %v2638 = vmul.f32 %v2503, %v2549
        %v2639 = vmul.f32 %v2504, %v2549
        %v2640 = vmul.f32 %v2505, %v2549
        %v2641 = vmul.f32 %v2506, %v2549
        %v2642 = vmul.f32 %v2507, %v2549
        %v2643 = vmul.f32 %v2508, %v2549
        %v2644 = vmul.f32 %v2509, %v2549
        %v2645 = vmul.f32 %v2510, %v2549
        %v2646 = vmul.f32 %v2511, %v2549
        %v2647 = vmul.f32 %v2512, %v2549
        %v2648 = vmul.f32 %v2513, %v2549
        %v2649 = vmul.f32 %v2514, %v2549
        %v2650 = vmul.f32 %v2515, %v2549
        %v2651 = vmul.f32 %v2516, %v2549
        %v2652 = vmul.f32 %v2517, %v2549
        %v2653 = vmul.f32 %v2518, %v2549
        %v2654 = vmul.f32 %v2519, %v2549
        %v2655 = vmul.f32 %v2520, %v2549
        %v2656 = vmul.f32 %v2521, %v2549
        %v2657 = vmul.f32 %v2522, %v2549
        %v2658 = vmul.f32 %v2523, %v2549
        %v2659 = vmul.f32 %v2524, %v2549
        %v2660 = vmul.f32 %v2525, %v2549
        %v2661 = vmul.f32 %v2526, %v2549
        %v2662 = vmul.f32 %v2527, %v2549
        %v2663 = vmul.f32 %v2528, %v2549
        %v2664 = vmul.f32 %v2529, %v2549
        %v2665 = vmul.f32 %v2530, %v2549
        %v2666 = vmul.f32 %v2531, %v2549
        %v2667 = vmul.f32 %v2532, %v2549
        %v2668 = vmul.f32 %v2533, %v2549
        %v2669 = vmul.f32 %v2534, %v2549
        %v2670 = vmul.f32 %v2535, %v2549
        %v2671 = vmul.f32 %v2536, %v2549
        %v2672 = vmul.f32 %v2537, %v2549
        %v2673 = vmul.f32 %v2538, %v2549
        %v2674 = vmul.f32 %v2539, %v2549
        %v2675 = vmul.f32 %v2540, %v2549
        %v2676 = vmul.f32 %v2541, %v2549
        %v2677 = vmul.f32 %v2542, %v2549
        %v2678 = vmul.f32 %v2543, %v2549
        %v2679 = vsel %vm858, %v2551, 0.0
        %2680 = vadd.xlane.f32.xlu0 %v2679
        %v2681 = vpop.xlane.xlu0 %2680
        %v2682 = vsel %vm858, %v2552, 0.0
        %2683 = vadd.xlane.f32.xlu0 %v2682
        %v2684 = vpop.xlane.xlu0 %2683
        %v2685 = vsel %vm858, %v2553, 0.0
        %2686 = vadd.xlane.f32.xlu0 %v2685
        %v2687 = vpop.xlane.xlu0 %2686
        %v2688 = vsel %vm858, %v2554, 0.0
        %2689 = vadd.xlane.f32.xlu0 %v2688
        %v2690 = vpop.xlane.xlu0 %2689
        %v2691 = vsel %vm858, %v2555, 0.0
        %2692 = vadd.xlane.f32.xlu0 %v2691
        %v2693 = vpop.xlane.xlu0 %2692
        %v2694 = vsel %vm858, %v2556, 0.0
        %2695 = vadd.xlane.f32.xlu0 %v2694
        %v2696 = vpop.xlane.xlu0 %2695
        %v2697 = vsel %vm858, %v2557, 0.0
        %2698 = vadd.xlane.f32.xlu0 %v2697
        %v2699 = vpop.xlane.xlu0 %2698
        %v2700 = vsel %vm858, %v2558, 0.0
        %2701 = vadd.xlane.f32.xlu0 %v2700
        %v2702 = vpop.xlane.xlu0 %2701
        %v2703 = vsel %vm858, %v2559, 0.0
        %2704 = vadd.xlane.f32.xlu0 %v2703
        %v2705 = vpop.xlane.xlu0 %2704
        %v2706 = vsel %vm858, %v2560, 0.0
        %2707 = vadd.xlane.f32.xlu0 %v2706
        %v2708 = vpop.xlane.xlu0 %2707
        %v2709 = vsel %vm858, %v2561, 0.0
        %2710 = vadd.xlane.f32.xlu0 %v2709
        %v2711 = vpop.xlane.xlu0 %2710
        %v2712 = vsel %vm858, %v2562, 0.0
        %2713 = vadd.xlane.f32.xlu0 %v2712
        %v2714 = vpop.xlane.xlu0 %2713
        %v2715 = vsel %vm858, %v2563, 0.0
        %2716 = vadd.xlane.f32.xlu0 %v2715
        %v2717 = vpop.xlane.xlu0 %2716
        %v2718 = vsel %vm858, %v2564, 0.0
        %2719 = vadd.xlane.f32.xlu0 %v2718
        %v2720 = vpop.xlane.xlu0 %2719
        %v2721 = vsel %vm858, %v2565, 0.0
        %2722 = vadd.xlane.f32.xlu0 %v2721
        %v2723 = vpop.xlane.xlu0 %2722
        %v2724 = vsel %vm858, %v2566, 0.0
        %2725 = vadd.xlane.f32.xlu0 %v2724
        %v2726 = vpop.xlane.xlu0 %2725
        %v2727 = vsel %vm858, %v2567, 0.0
        %2728 = vadd.xlane.f32.xlu0 %v2727
        %v2729 = vpop.xlane.xlu0 %2728
        %v2730 = vsel %vm858, %v2568, 0.0
        %2731 = vadd.xlane.f32.xlu0 %v2730
        %v2732 = vpop.xlane.xlu0 %2731
        %v2733 = vsel %vm858, %v2569, 0.0
        %2734 = vadd.xlane.f32.xlu0 %v2733
        %v2735 = vpop.xlane.xlu0 %2734
        %v2736 = vsel %vm858, %v2570, 0.0
        %2737 = vadd.xlane.f32.xlu0 %v2736
        %v2738 = vpop.xlane.xlu0 %2737
        %v2739 = vsel %vm858, %v2571, 0.0
        %2740 = vadd.xlane.f32.xlu0 %v2739
        %v2741 = vpop.xlane.xlu0 %2740
        %v2742 = vsel %vm858, %v2572, 0.0
        %2743 = vadd.xlane.f32.xlu0 %v2742
        %v2744 = vpop.xlane.xlu0 %2743
        %v2745 = vsel %vm858, %v2573, 0.0
        %2746 = vadd.xlane.f32.xlu0 %v2745
        %v2747 = vpop.xlane.xlu0 %2746
        %v2748 = vsel %vm858, %v2574, 0.0
        %2749 = vadd.xlane.f32.xlu0 %v2748
        %v2750 = vpop.xlane.xlu0 %2749
        %v2751 = vsel %vm858, %v2575, 0.0
        %2752 = vadd.xlane.f32.xlu0 %v2751
        %v2753 = vpop.xlane.xlu0 %2752
        %v2754 = vsel %vm858, %v2576, 0.0
        %2755 = vadd.xlane.f32.xlu0 %v2754
        %v2756 = vpop.xlane.xlu0 %2755
        %v2757 = vsel %vm858, %v2577, 0.0
        %2758 = vadd.xlane.f32.xlu0 %v2757
        %v2759 = vpop.xlane.xlu0 %2758
        %v2760 = vsel %vm858, %v2578, 0.0
        %2761 = vadd.xlane.f32.xlu0 %v2760
        %v2762 = vpop.xlane.xlu0 %2761
        %v2763 = vsel %vm858, %v2579, 0.0
        %2764 = vadd.xlane.f32.xlu0 %v2763
        %v2765 = vpop.xlane.xlu0 %2764
        %v2766 = vsel %vm858, %v2580, 0.0
        %2767 = vadd.xlane.f32.xlu0 %v2766
        %v2768 = vpop.xlane.xlu0 %2767
        %v2769 = vsel %vm858, %v2581, 0.0
        %2770 = vadd.xlane.f32.xlu0 %v2769
        %v2771 = vpop.xlane.xlu0 %2770
        %v2772 = vsel %vm858, %v2582, 0.0
        %2773 = vadd.xlane.f32.xlu0 %v2772
        %v2774 = vpop.xlane.xlu0 %2773
        %v2775 = vsel %vm858, %v2583, 0.0
        %2776 = vadd.xlane.f32.xlu0 %v2775
        %v2777 = vpop.xlane.xlu0 %2776
        %v2778 = vsel %vm858, %v2584, 0.0
        %2779 = vadd.xlane.f32.xlu0 %v2778
        %v2780 = vpop.xlane.xlu0 %2779
        %v2781 = vsel %vm858, %v2585, 0.0
        %2782 = vadd.xlane.f32.xlu0 %v2781
        %v2783 = vpop.xlane.xlu0 %2782
        %v2784 = vsel %vm858, %v2586, 0.0
        %2785 = vadd.xlane.f32.xlu0 %v2784
        %v2786 = vpop.xlane.xlu0 %2785
        %v2787 = vsel %vm858, %v2587, 0.0
        %2788 = vadd.xlane.f32.xlu0 %v2787
        %v2789 = vpop.xlane.xlu0 %2788
        %v2790 = vsel %vm858, %v2588, 0.0
        %2791 = vadd.xlane.f32.xlu0 %v2790
        %v2792 = vpop.xlane.xlu0 %2791
        %v2793 = vsel %vm858, %v2589, 0.0
        %2794 = vadd.xlane.f32.xlu0 %v2793
        %v2795 = vpop.xlane.xlu0 %2794
        %v2796 = vsel %vm858, %v2590, 0.0
        %2797 = vadd.xlane.f32.xlu0 %v2796
        %v2798 = vpop.xlane.xlu0 %2797
        %v2799 = vsel %vm858, %v2591, 0.0
        %2800 = vadd.xlane.f32.xlu0 %v2799
        %v2801 = vpop.xlane.xlu0 %2800
        %v2802 = vsel %vm858, %v2592, 0.0
        %2803 = vadd.xlane.f32.xlu0 %v2802
        %v2804 = vpop.xlane.xlu0 %2803
        %v2805 = vsel %vm858, %v2593, 0.0
        %2806 = vadd.xlane.f32.xlu0 %v2805
        %v2807 = vpop.xlane.xlu0 %2806
        %v2808 = vsel %vm858, %v2594, 0.0
        %2809 = vadd.xlane.f32.xlu0 %v2808
        %v2810 = vpop.xlane.xlu0 %2809
        %v2811 = vsel %vm858, %v2595, 0.0
        %2812 = vadd.xlane.f32.xlu0 %v2811
        %v2813 = vpop.xlane.xlu0 %2812
        %v2814 = vsel %vm858, %v2596, 0.0
        %2815 = vadd.xlane.f32.xlu0 %v2814
        %v2816 = vpop.xlane.xlu0 %2815
        %v2817 = vsel %vm858, %v2597, 0.0
        %2818 = vadd.xlane.f32.xlu0 %v2817
        %v2819 = vpop.xlane.xlu0 %2818
        %v2820 = vsel %vm858, %v2598, 0.0
        %2821 = vadd.xlane.f32.xlu0 %v2820
        %v2822 = vpop.xlane.xlu0 %2821
        %v2823 = vsel %vm858, %v2599, 0.0
        %2824 = vadd.xlane.f32.xlu0 %v2823
        %v2825 = vpop.xlane.xlu0 %2824
        %v2826 = vsel %vm858, %v2600, 0.0
        %2827 = vadd.xlane.f32.xlu0 %v2826
        %v2828 = vpop.xlane.xlu0 %2827
        %v2829 = vsel %vm858, %v2601, 0.0
        %2830 = vadd.xlane.f32.xlu0 %v2829
        %v2831 = vpop.xlane.xlu0 %2830
        %v2832 = vsel %vm858, %v2602, 0.0
        %2833 = vadd.xlane.f32.xlu0 %v2832
        %v2834 = vpop.xlane.xlu0 %2833
        %v2835 = vsel %vm858, %v2603, 0.0
        %2836 = vadd.xlane.f32.xlu0 %v2835
        %v2837 = vpop.xlane.xlu0 %2836
        %v2838 = vsel %vm858, %v2604, 0.0
        %2839 = vadd.xlane.f32.xlu0 %v2838
        %v2840 = vpop.xlane.xlu0 %2839
        %v2841 = vsel %vm858, %v2605, 0.0
        %2842 = vadd.xlane.f32.xlu0 %v2841
        %v2843 = vpop.xlane.xlu0 %2842
        %v2844 = vsel %vm858, %v2606, 0.0
        %2845 = vadd.xlane.f32.xlu0 %v2844
        %v2846 = vpop.xlane.xlu0 %2845
        %v2847 = vsel %vm858, %v2607, 0.0
        %2848 = vadd.xlane.f32.xlu0 %v2847
        %v2849 = vpop.xlane.xlu0 %2848
        %v2850 = vsel %vm858, %v2608, 0.0
        %2851 = vadd.xlane.f32.xlu0 %v2850
        %v2852 = vpop.xlane.xlu0 %2851
        %v2853 = vsel %vm858, %v2609, 0.0
        %2854 = vadd.xlane.f32.xlu0 %v2853
        %v2855 = vpop.xlane.xlu0 %2854
        %v2856 = vsel %vm858, %v2610, 0.0
        %2857 = vadd.xlane.f32.xlu0 %v2856
        %v2858 = vpop.xlane.xlu0 %2857
        %v2859 = vsel %vm858, %v2611, 0.0
        %2860 = vadd.xlane.f32.xlu0 %v2859
        %v2861 = vpop.xlane.xlu0 %2860
        %v2862 = vsel %vm858, %v2612, 0.0
        %2863 = vadd.xlane.f32.xlu0 %v2862
        %v2864 = vpop.xlane.xlu0 %2863
        %v2865 = vsel %vm858, %v2613, 0.0
        %2866 = vadd.xlane.f32.xlu0 %v2865
        %v2867 = vpop.xlane.xlu0 %2866
        %v2868 = vsel %vm858, %v2614, 0.0
        %2869 = vadd.xlane.f32.xlu0 %v2868
        %v2870 = vpop.xlane.xlu0 %2869
        %v2871 = vsel %vm858, %v2615, 0.0
        %2872 = vadd.xlane.f32.xlu0 %v2871
        %v2873 = vpop.xlane.xlu0 %2872
        %v2874 = vsel %vm858, %v2616, 0.0
        %2875 = vadd.xlane.f32.xlu0 %v2874
        %v2876 = vpop.xlane.xlu0 %2875
        %v2877 = vsel %vm858, %v2617, 0.0
        %2878 = vadd.xlane.f32.xlu0 %v2877
        %v2879 = vpop.xlane.xlu0 %2878
        %v2880 = vsel %vm858, %v2618, 0.0
        %2881 = vadd.xlane.f32.xlu0 %v2880
        %v2882 = vpop.xlane.xlu0 %2881
        %v2883 = vsel %vm858, %v2619, 0.0
        %2884 = vadd.xlane.f32.xlu0 %v2883
        %v2885 = vpop.xlane.xlu0 %2884
        %v2886 = vsel %vm858, %v2620, 0.0
        %2887 = vadd.xlane.f32.xlu0 %v2886
        %v2888 = vpop.xlane.xlu0 %2887
        %v2889 = vsel %vm858, %v2621, 0.0
        %2890 = vadd.xlane.f32.xlu0 %v2889
        %v2891 = vpop.xlane.xlu0 %2890
        %v2892 = vsel %vm858, %v2622, 0.0
        %2893 = vadd.xlane.f32.xlu0 %v2892
        %v2894 = vpop.xlane.xlu0 %2893
        %v2895 = vsel %vm858, %v2623, 0.0
        %2896 = vadd.xlane.f32.xlu0 %v2895
        %v2897 = vpop.xlane.xlu0 %2896
        %v2898 = vsel %vm858, %v2624, 0.0
        %2899 = vadd.xlane.f32.xlu0 %v2898
        %v2900 = vpop.xlane.xlu0 %2899
        %v2901 = vsel %vm858, %v2625, 0.0
        %2902 = vadd.xlane.f32.xlu0 %v2901
        %v2903 = vpop.xlane.xlu0 %2902
        %v2904 = vsel %vm858, %v2626, 0.0
        %2905 = vadd.xlane.f32.xlu0 %v2904
        %v2906 = vpop.xlane.xlu0 %2905
        %v2907 = vsel %vm858, %v2627, 0.0
        %2908 = vadd.xlane.f32.xlu0 %v2907
        %v2909 = vpop.xlane.xlu0 %2908
        %v2910 = vsel %vm858, %v2628, 0.0
        %2911 = vadd.xlane.f32.xlu0 %v2910
        %v2912 = vpop.xlane.xlu0 %2911
        %v2913 = vsel %vm858, %v2629, 0.0
        %2914 = vadd.xlane.f32.xlu0 %v2913
        %v2915 = vpop.xlane.xlu0 %2914
        %v2916 = vsel %vm858, %v2630, 0.0
        %2917 = vadd.xlane.f32.xlu0 %v2916
        %v2918 = vpop.xlane.xlu0 %2917
        %v2919 = vsel %vm858, %v2631, 0.0
        %2920 = vadd.xlane.f32.xlu0 %v2919
        %v2921 = vpop.xlane.xlu0 %2920
        %v2922 = vsel %vm858, %v2632, 0.0
        %2923 = vadd.xlane.f32.xlu0 %v2922
        %v2924 = vpop.xlane.xlu0 %2923
        %v2925 = vsel %vm858, %v2633, 0.0
        %2926 = vadd.xlane.f32.xlu0 %v2925
        %v2927 = vpop.xlane.xlu0 %2926
        %v2928 = vsel %vm858, %v2634, 0.0
        %2929 = vadd.xlane.f32.xlu0 %v2928
        %v2930 = vpop.xlane.xlu0 %2929
        %v2931 = vsel %vm858, %v2635, 0.0
        %2932 = vadd.xlane.f32.xlu0 %v2931
        %v2933 = vpop.xlane.xlu0 %2932
        %v2934 = vsel %vm858, %v2636, 0.0
        %2935 = vadd.xlane.f32.xlu0 %v2934
        %v2936 = vpop.xlane.xlu0 %2935
        %v2937 = vsel %vm858, %v2637, 0.0
        %2938 = vadd.xlane.f32.xlu0 %v2937
        %v2939 = vpop.xlane.xlu0 %2938
        %v2940 = vsel %vm858, %v2638, 0.0
        %2941 = vadd.xlane.f32.xlu0 %v2940
        %v2942 = vpop.xlane.xlu0 %2941
        %v2943 = vsel %vm858, %v2639, 0.0
        %2944 = vadd.xlane.f32.xlu0 %v2943
        %v2945 = vpop.xlane.xlu0 %2944
        %v2946 = vsel %vm858, %v2640, 0.0
        %2947 = vadd.xlane.f32.xlu0 %v2946
        %v2948 = vpop.xlane.xlu0 %2947
        %v2949 = vsel %vm858, %v2641, 0.0
        %2950 = vadd.xlane.f32.xlu0 %v2949
        %v2951 = vpop.xlane.xlu0 %2950
        %v2952 = vsel %vm858, %v2642, 0.0
        %2953 = vadd.xlane.f32.xlu0 %v2952
        %v2954 = vpop.xlane.xlu0 %2953
        %v2955 = vsel %vm858, %v2643, 0.0
        %2956 = vadd.xlane.f32.xlu0 %v2955
        %v2957 = vpop.xlane.xlu0 %2956
        %v2958 = vsel %vm858, %v2644, 0.0
        %2959 = vadd.xlane.f32.xlu0 %v2958
        %v2960 = vpop.xlane.xlu0 %2959
        %v2961 = vsel %vm858, %v2645, 0.0
        %2962 = vadd.xlane.f32.xlu0 %v2961
        %v2963 = vpop.xlane.xlu0 %2962
        %v2964 = vsel %vm858, %v2646, 0.0
        %2965 = vadd.xlane.f32.xlu0 %v2964
        %v2966 = vpop.xlane.xlu0 %2965
        %v2967 = vsel %vm858, %v2647, 0.0
        %2968 = vadd.xlane.f32.xlu0 %v2967
        %v2969 = vpop.xlane.xlu0 %2968
        %v2970 = vsel %vm858, %v2648, 0.0
        %2971 = vadd.xlane.f32.xlu0 %v2970
        %v2972 = vpop.xlane.xlu0 %2971
        %v2973 = vsel %vm858, %v2649, 0.0
        %2974 = vadd.xlane.f32.xlu0 %v2973
        %v2975 = vpop.xlane.xlu0 %2974
        %v2976 = vsel %vm858, %v2650, 0.0
        %2977 = vadd.xlane.f32.xlu0 %v2976
        %v2978 = vpop.xlane.xlu0 %2977
        %v2979 = vsel %vm858, %v2651, 0.0
        %2980 = vadd.xlane.f32.xlu0 %v2979
        %v2981 = vpop.xlane.xlu0 %2980
        %v2982 = vsel %vm858, %v2652, 0.0
        %2983 = vadd.xlane.f32.xlu0 %v2982
        %v2984 = vpop.xlane.xlu0 %2983
        %v2985 = vsel %vm858, %v2653, 0.0
        %2986 = vadd.xlane.f32.xlu0 %v2985
        %v2987 = vpop.xlane.xlu0 %2986
        %v2988 = vsel %vm858, %v2654, 0.0
        %2989 = vadd.xlane.f32.xlu0 %v2988
        %v2990 = vpop.xlane.xlu0 %2989
        %v2991 = vsel %vm858, %v2655, 0.0
        %2992 = vadd.xlane.f32.xlu0 %v2991
        %v2993 = vpop.xlane.xlu0 %2992
        %v2994 = vsel %vm858, %v2656, 0.0
        %2995 = vadd.xlane.f32.xlu0 %v2994
        %v2996 = vpop.xlane.xlu0 %2995
        %v2997 = vsel %vm858, %v2657, 0.0
        %2998 = vadd.xlane.f32.xlu0 %v2997
        %v2999 = vpop.xlane.xlu0 %2998
        %v3000 = vsel %vm858, %v2658, 0.0
        %3001 = vadd.xlane.f32.xlu0 %v3000
        %v3002 = vpop.xlane.xlu0 %3001
        %v3003 = vsel %vm858, %v2659, 0.0
        %3004 = vadd.xlane.f32.xlu0 %v3003
        %v3005 = vpop.xlane.xlu0 %3004
        %v3006 = vsel %vm858, %v2660, 0.0
        %3007 = vadd.xlane.f32.xlu0 %v3006
        %v3008 = vpop.xlane.xlu0 %3007
        %v3009 = vsel %vm858, %v2661, 0.0
        %3010 = vadd.xlane.f32.xlu0 %v3009
        %v3011 = vpop.xlane.xlu0 %3010
        %v3012 = vsel %vm858, %v2662, 0.0
        %3013 = vadd.xlane.f32.xlu0 %v3012
        %v3014 = vpop.xlane.xlu0 %3013
        %v3015 = vsel %vm858, %v2663, 0.0
        %3016 = vadd.xlane.f32.xlu0 %v3015
        %v3017 = vpop.xlane.xlu0 %3016
        %v3018 = vsel %vm858, %v2664, 0.0
        %3019 = vadd.xlane.f32.xlu0 %v3018
        %v3020 = vpop.xlane.xlu0 %3019
        %v3021 = vsel %vm858, %v2665, 0.0
        %3022 = vadd.xlane.f32.xlu0 %v3021
        %v3023 = vpop.xlane.xlu0 %3022
        %v3024 = vsel %vm858, %v2666, 0.0
        %3025 = vadd.xlane.f32.xlu0 %v3024
        %v3026 = vpop.xlane.xlu0 %3025
        %v3027 = vsel %vm858, %v2667, 0.0
        %3028 = vadd.xlane.f32.xlu0 %v3027
        %v3029 = vpop.xlane.xlu0 %3028
        %v3030 = vsel %vm858, %v2668, 0.0
        %3031 = vadd.xlane.f32.xlu0 %v3030
        %v3032 = vpop.xlane.xlu0 %3031
        %v3033 = vsel %vm858, %v2669, 0.0
        %3034 = vadd.xlane.f32.xlu0 %v3033
        %v3035 = vpop.xlane.xlu0 %3034
        %v3036 = vsel %vm858, %v2670, 0.0
        %3037 = vadd.xlane.f32.xlu0 %v3036
        %v3038 = vpop.xlane.xlu0 %3037
        %v3039 = vsel %vm858, %v2671, 0.0
        %3040 = vadd.xlane.f32.xlu0 %v3039
        %v3041 = vpop.xlane.xlu0 %3040
        %v3042 = vsel %vm858, %v2672, 0.0
        %3043 = vadd.xlane.f32.xlu0 %v3042
        %v3044 = vpop.xlane.xlu0 %3043
        %v3045 = vsel %vm858, %v2673, 0.0
        %3046 = vadd.xlane.f32.xlu0 %v3045
        %v3047 = vpop.xlane.xlu0 %3046
        %v3048 = vsel %vm858, %v2674, 0.0
        %3049 = vadd.xlane.f32.xlu0 %v3048
        %v3050 = vpop.xlane.xlu0 %3049
        %v3051 = vsel %vm858, %v2675, 0.0
        %3052 = vadd.xlane.f32.xlu0 %v3051
        %v3053 = vpop.xlane.xlu0 %3052
        %v3054 = vsel %vm858, %v2676, 0.0
        %3055 = vadd.xlane.f32.xlu0 %v3054
        %v3056 = vpop.xlane.xlu0 %3055
        %v3057 = vsel %vm858, %v2677, 0.0
        %3058 = vadd.xlane.f32.xlu0 %v3057
        %v3059 = vpop.xlane.xlu0 %3058
        %v3060 = vsel %vm858, %v2678, 0.0
        %3061 = vadd.xlane.f32.xlu0 %v3060
        %v3062 = vpop.xlane.xlu0 %3061
        %v3191 = vlaneseq
        %v3192 = vand.u32 %v3191, 127
        %v3193 = vlaneseq
        %v3194 = vshrl.u32 %v3193, 7
        %v3195 = vsub.s32 %v3192, %v3194
        %v3196 = vrot.slane %v2681, %v3195
        %v3197 = vlaneseq
        %v3198 = vshrl.u32 %v3197, 7
        %v3199 = vsub.s32 %v3192, %v3198
        %v3200 = vrot.slane %v2684, %v3199
        %v3201 = vlaneseq
        %v3202 = vshrl.u32 %v3201, 7
        %v3203 = vsub.s32 %v3192, %v3202
        %v3204 = vrot.slane %v2687, %v3203
        %v3205 = vlaneseq
        %v3206 = vshrl.u32 %v3205, 7
        %v3207 = vsub.s32 %v3192, %v3206
        %v3208 = vrot.slane %v2690, %v3207
        %v3209 = vlaneseq
        %v3210 = vshrl.u32 %v3209, 7
        %v3211 = vsub.s32 %v3192, %v3210
        %v3212 = vrot.slane %v2693, %v3211
        %v3213 = vlaneseq
        %v3214 = vshrl.u32 %v3213, 7
        %v3215 = vsub.s32 %v3192, %v3214
        %v3216 = vrot.slane %v2696, %v3215
        %v3217 = vlaneseq
        %v3218 = vshrl.u32 %v3217, 7
        %v3219 = vsub.s32 %v3192, %v3218
        %v3220 = vrot.slane %v2699, %v3219
        %v3221 = vlaneseq
        %v3222 = vshrl.u32 %v3221, 7
        %v3223 = vsub.s32 %v3192, %v3222
        %v3224 = vrot.slane %v2702, %v3223
        %v3225 = vlaneseq
        %v3226 = vshrl.u32 %v3225, 7
        %v3227 = vsub.s32 %v3192, %v3226
        %v3228 = vrot.slane %v2705, %v3227
        %v3229 = vlaneseq
        %v3230 = vshrl.u32 %v3229, 7
        %v3231 = vsub.s32 %v3192, %v3230
        %v3232 = vrot.slane %v2708, %v3231
        %v3233 = vlaneseq
        %v3234 = vshrl.u32 %v3233, 7
        %v3235 = vsub.s32 %v3192, %v3234
        %v3236 = vrot.slane %v2711, %v3235
        %v3237 = vlaneseq
        %v3238 = vshrl.u32 %v3237, 7
        %v3239 = vsub.s32 %v3192, %v3238
        %v3240 = vrot.slane %v2714, %v3239
        %v3241 = vlaneseq
        %v3242 = vshrl.u32 %v3241, 7
        %v3243 = vsub.s32 %v3192, %v3242
        %v3244 = vrot.slane %v2717, %v3243
        %v3245 = vlaneseq
        %v3246 = vshrl.u32 %v3245, 7
        %v3247 = vsub.s32 %v3192, %v3246
        %v3248 = vrot.slane %v2720, %v3247
        %v3249 = vlaneseq
        %v3250 = vshrl.u32 %v3249, 7
        %v3251 = vsub.s32 %v3192, %v3250
        %v3252 = vrot.slane %v2723, %v3251
        %v3253 = vlaneseq
        %v3254 = vshrl.u32 %v3253, 7
        %v3255 = vsub.s32 %v3192, %v3254
        %v3256 = vrot.slane %v2726, %v3255
        %v3257 = vlaneseq
        %v3258 = vshrl.u32 %v3257, 7
        %v3259 = vsub.s32 %v3192, %v3258
        %v3260 = vrot.slane %v2729, %v3259
        %v3261 = vlaneseq
        %v3262 = vshrl.u32 %v3261, 7
        %v3263 = vsub.s32 %v3192, %v3262
        %v3264 = vrot.slane %v2732, %v3263
        %v3265 = vlaneseq
        %v3266 = vshrl.u32 %v3265, 7
        %v3267 = vsub.s32 %v3192, %v3266
        %v3268 = vrot.slane %v2735, %v3267
        %v3269 = vlaneseq
        %v3270 = vshrl.u32 %v3269, 7
        %v3271 = vsub.s32 %v3192, %v3270
        %v3272 = vrot.slane %v2738, %v3271
        %v3273 = vlaneseq
        %v3274 = vshrl.u32 %v3273, 7
        %v3275 = vsub.s32 %v3192, %v3274
        %v3276 = vrot.slane %v2741, %v3275
        %v3277 = vlaneseq
        %v3278 = vshrl.u32 %v3277, 7
        %v3279 = vsub.s32 %v3192, %v3278
        %v3280 = vrot.slane %v2744, %v3279
        %v3281 = vlaneseq
        %v3282 = vshrl.u32 %v3281, 7
        %v3283 = vsub.s32 %v3192, %v3282
        %v3284 = vrot.slane %v2747, %v3283
        %v3285 = vlaneseq
        %v3286 = vshrl.u32 %v3285, 7
        %v3287 = vsub.s32 %v3192, %v3286
        %v3288 = vrot.slane %v2750, %v3287
        %v3289 = vlaneseq
        %v3290 = vshrl.u32 %v3289, 7
        %v3291 = vsub.s32 %v3192, %v3290
        %v3292 = vrot.slane %v2753, %v3291
        %v3293 = vlaneseq
        %v3294 = vshrl.u32 %v3293, 7
        %v3295 = vsub.s32 %v3192, %v3294
        %v3296 = vrot.slane %v2756, %v3295
        %v3297 = vlaneseq
        %v3298 = vshrl.u32 %v3297, 7
        %v3299 = vsub.s32 %v3192, %v3298
        %v3300 = vrot.slane %v2759, %v3299
        %v3301 = vlaneseq
        %v3302 = vshrl.u32 %v3301, 7
        %v3303 = vsub.s32 %v3192, %v3302
        %v3304 = vrot.slane %v2762, %v3303
        %v3305 = vlaneseq
        %v3306 = vshrl.u32 %v3305, 7
        %v3307 = vsub.s32 %v3192, %v3306
        %v3308 = vrot.slane %v2765, %v3307
        %v3309 = vlaneseq
        %v3310 = vshrl.u32 %v3309, 7
        %v3311 = vsub.s32 %v3192, %v3310
        %v3312 = vrot.slane %v2768, %v3311
        %v3313 = vlaneseq
        %v3314 = vshrl.u32 %v3313, 7
        %v3315 = vsub.s32 %v3192, %v3314
        %v3316 = vrot.slane %v2771, %v3315
        %v3317 = vlaneseq
        %v3318 = vshrl.u32 %v3317, 7
        %v3319 = vsub.s32 %v3192, %v3318
        %v3320 = vrot.slane %v2774, %v3319
        %v3321 = vlaneseq
        %v3322 = vshrl.u32 %v3321, 7
        %v3323 = vsub.s32 %v3192, %v3322
        %v3324 = vrot.slane %v2777, %v3323
        %v3325 = vlaneseq
        %v3326 = vshrl.u32 %v3325, 7
        %v3327 = vsub.s32 %v3192, %v3326
        %v3328 = vrot.slane %v2780, %v3327
        %v3329 = vlaneseq
        %v3330 = vshrl.u32 %v3329, 7
        %v3331 = vsub.s32 %v3192, %v3330
        %v3332 = vrot.slane %v2783, %v3331
        %v3333 = vlaneseq
        %v3334 = vshrl.u32 %v3333, 7
        %v3335 = vsub.s32 %v3192, %v3334
        %v3336 = vrot.slane %v2786, %v3335
        %v3337 = vlaneseq
        %v3338 = vshrl.u32 %v3337, 7
        %v3339 = vsub.s32 %v3192, %v3338
        %v3340 = vrot.slane %v2789, %v3339
        %v3341 = vlaneseq
        %v3342 = vshrl.u32 %v3341, 7
        %v3343 = vsub.s32 %v3192, %v3342
        %v3344 = vrot.slane %v2792, %v3343
        %v3345 = vlaneseq
        %v3346 = vshrl.u32 %v3345, 7
        %v3347 = vsub.s32 %v3192, %v3346
        %v3348 = vrot.slane %v2795, %v3347
        %v3349 = vlaneseq
        %v3350 = vshrl.u32 %v3349, 7
        %v3351 = vsub.s32 %v3192, %v3350
        %v3352 = vrot.slane %v2798, %v3351
        %v3353 = vlaneseq
        %v3354 = vshrl.u32 %v3353, 7
        %v3355 = vsub.s32 %v3192, %v3354
        %v3356 = vrot.slane %v2801, %v3355
        %v3357 = vlaneseq
        %v3358 = vshrl.u32 %v3357, 7
        %v3359 = vsub.s32 %v3192, %v3358
        %v3360 = vrot.slane %v2804, %v3359
        %v3361 = vlaneseq
        %v3362 = vshrl.u32 %v3361, 7
        %v3363 = vsub.s32 %v3192, %v3362
        %v3364 = vrot.slane %v2807, %v3363
        %v3365 = vlaneseq
        %v3366 = vshrl.u32 %v3365, 7
        %v3367 = vsub.s32 %v3192, %v3366
        %v3368 = vrot.slane %v2810, %v3367
        %v3369 = vlaneseq
        %v3370 = vshrl.u32 %v3369, 7
        %v3371 = vsub.s32 %v3192, %v3370
        %v3372 = vrot.slane %v2813, %v3371
        %v3373 = vlaneseq
        %v3374 = vshrl.u32 %v3373, 7
        %v3375 = vsub.s32 %v3192, %v3374
        %v3376 = vrot.slane %v2816, %v3375
        %v3377 = vlaneseq
        %v3378 = vshrl.u32 %v3377, 7
        %v3379 = vsub.s32 %v3192, %v3378
        %v3380 = vrot.slane %v2819, %v3379
        %v3381 = vlaneseq
        %v3382 = vshrl.u32 %v3381, 7
        %v3383 = vsub.s32 %v3192, %v3382
        %v3384 = vrot.slane %v2822, %v3383
        %v3385 = vlaneseq
        %v3386 = vshrl.u32 %v3385, 7
        %v3387 = vsub.s32 %v3192, %v3386
        %v3388 = vrot.slane %v2825, %v3387
        %v3389 = vlaneseq
        %v3390 = vshrl.u32 %v3389, 7
        %v3391 = vsub.s32 %v3192, %v3390
        %v3392 = vrot.slane %v2828, %v3391
        %v3393 = vlaneseq
        %v3394 = vshrl.u32 %v3393, 7
        %v3395 = vsub.s32 %v3192, %v3394
        %v3396 = vrot.slane %v2831, %v3395
        %v3397 = vlaneseq
        %v3398 = vshrl.u32 %v3397, 7
        %v3399 = vsub.s32 %v3192, %v3398
        %v3400 = vrot.slane %v2834, %v3399
        %v3401 = vlaneseq
        %v3402 = vshrl.u32 %v3401, 7
        %v3403 = vsub.s32 %v3192, %v3402
        %v3404 = vrot.slane %v2837, %v3403
        %v3405 = vlaneseq
        %v3406 = vshrl.u32 %v3405, 7
        %v3407 = vsub.s32 %v3192, %v3406
        %v3408 = vrot.slane %v2840, %v3407
        %v3409 = vlaneseq
        %v3410 = vshrl.u32 %v3409, 7
        %v3411 = vsub.s32 %v3192, %v3410
        %v3412 = vrot.slane %v2843, %v3411
        %v3413 = vlaneseq
        %v3414 = vshrl.u32 %v3413, 7
        %v3415 = vsub.s32 %v3192, %v3414
        %v3416 = vrot.slane %v2846, %v3415
        %v3417 = vlaneseq
        %v3418 = vshrl.u32 %v3417, 7
        %v3419 = vsub.s32 %v3192, %v3418
        %v3420 = vrot.slane %v2849, %v3419
        %v3421 = vlaneseq
        %v3422 = vshrl.u32 %v3421, 7
        %v3423 = vsub.s32 %v3192, %v3422
        %v3424 = vrot.slane %v2852, %v3423
        %v3425 = vlaneseq
        %v3426 = vshrl.u32 %v3425, 7
        %v3427 = vsub.s32 %v3192, %v3426
        %v3428 = vrot.slane %v2855, %v3427
        %v3429 = vlaneseq
        %v3430 = vshrl.u32 %v3429, 7
        %v3431 = vsub.s32 %v3192, %v3430
        %v3432 = vrot.slane %v2858, %v3431
        %v3433 = vlaneseq
        %v3434 = vshrl.u32 %v3433, 7
        %v3435 = vsub.s32 %v3192, %v3434
        %v3436 = vrot.slane %v2861, %v3435
        %v3437 = vlaneseq
        %v3438 = vshrl.u32 %v3437, 7
        %v3439 = vsub.s32 %v3192, %v3438
        %v3440 = vrot.slane %v2864, %v3439
        %v3441 = vlaneseq
        %v3442 = vshrl.u32 %v3441, 7
        %v3443 = vsub.s32 %v3192, %v3442
        %v3444 = vrot.slane %v2867, %v3443
        %v3445 = vlaneseq
        %v3446 = vshrl.u32 %v3445, 7
        %v3447 = vsub.s32 %v3192, %v3446
        %v3448 = vrot.slane %v2870, %v3447
        %v3449 = vlaneseq
        %v3450 = vshrl.u32 %v3449, 7
        %v3451 = vsub.s32 %v3192, %v3450
        %v3452 = vrot.slane %v2873, %v3451
        %v3453 = vlaneseq
        %v3454 = vshrl.u32 %v3453, 7
        %v3455 = vsub.s32 %v3192, %v3454
        %v3456 = vrot.slane %v2876, %v3455
        %v3457 = vlaneseq
        %v3458 = vshrl.u32 %v3457, 7
        %v3459 = vsub.s32 %v3192, %v3458
        %v3460 = vrot.slane %v2879, %v3459
        %v3461 = vlaneseq
        %v3462 = vshrl.u32 %v3461, 7
        %v3463 = vsub.s32 %v3192, %v3462
        %v3464 = vrot.slane %v2882, %v3463
        %v3465 = vlaneseq
        %v3466 = vshrl.u32 %v3465, 7
        %v3467 = vsub.s32 %v3192, %v3466
        %v3468 = vrot.slane %v2885, %v3467
        %v3469 = vlaneseq
        %v3470 = vshrl.u32 %v3469, 7
        %v3471 = vsub.s32 %v3192, %v3470
        %v3472 = vrot.slane %v2888, %v3471
        %v3473 = vlaneseq
        %v3474 = vshrl.u32 %v3473, 7
        %v3475 = vsub.s32 %v3192, %v3474
        %v3476 = vrot.slane %v2891, %v3475
        %v3477 = vlaneseq
        %v3478 = vshrl.u32 %v3477, 7
        %v3479 = vsub.s32 %v3192, %v3478
        %v3480 = vrot.slane %v2894, %v3479
        %v3481 = vlaneseq
        %v3482 = vshrl.u32 %v3481, 7
        %v3483 = vsub.s32 %v3192, %v3482
        %v3484 = vrot.slane %v2897, %v3483
        %v3485 = vlaneseq
        %v3486 = vshrl.u32 %v3485, 7
        %v3487 = vsub.s32 %v3192, %v3486
        %v3488 = vrot.slane %v2900, %v3487
        %v3489 = vlaneseq
        %v3490 = vshrl.u32 %v3489, 7
        %v3491 = vsub.s32 %v3192, %v3490
        %v3492 = vrot.slane %v2903, %v3491
        %v3493 = vlaneseq
        %v3494 = vshrl.u32 %v3493, 7
        %v3495 = vsub.s32 %v3192, %v3494
        %v3496 = vrot.slane %v2906, %v3495
        %v3497 = vlaneseq
        %v3498 = vshrl.u32 %v3497, 7
        %v3499 = vsub.s32 %v3192, %v3498
        %v3500 = vrot.slane %v2909, %v3499
        %v3501 = vlaneseq
        %v3502 = vshrl.u32 %v3501, 7
        %v3503 = vsub.s32 %v3192, %v3502
        %v3504 = vrot.slane %v2912, %v3503
        %v3505 = vlaneseq
        %v3506 = vshrl.u32 %v3505, 7
        %v3507 = vsub.s32 %v3192, %v3506
        %v3508 = vrot.slane %v2915, %v3507
        %v3509 = vlaneseq
        %v3510 = vshrl.u32 %v3509, 7
        %v3511 = vsub.s32 %v3192, %v3510
        %v3512 = vrot.slane %v2918, %v3511
        %v3513 = vlaneseq
        %v3514 = vshrl.u32 %v3513, 7
        %v3515 = vsub.s32 %v3192, %v3514
        %v3516 = vrot.slane %v2921, %v3515
        %v3517 = vlaneseq
        %v3518 = vshrl.u32 %v3517, 7
        %v3519 = vsub.s32 %v3192, %v3518
        %v3520 = vrot.slane %v2924, %v3519
        %v3521 = vlaneseq
        %v3522 = vshrl.u32 %v3521, 7
        %v3523 = vsub.s32 %v3192, %v3522
        %v3524 = vrot.slane %v2927, %v3523
        %v3525 = vlaneseq
        %v3526 = vshrl.u32 %v3525, 7
        %v3527 = vsub.s32 %v3192, %v3526
        %v3528 = vrot.slane %v2930, %v3527
        %v3529 = vlaneseq
        %v3530 = vshrl.u32 %v3529, 7
        %v3531 = vsub.s32 %v3192, %v3530
        %v3532 = vrot.slane %v2933, %v3531
        %v3533 = vlaneseq
        %v3534 = vshrl.u32 %v3533, 7
        %v3535 = vsub.s32 %v3192, %v3534
        %v3536 = vrot.slane %v2936, %v3535
        %v3537 = vlaneseq
        %v3538 = vshrl.u32 %v3537, 7
        %v3539 = vsub.s32 %v3192, %v3538
        %v3540 = vrot.slane %v2939, %v3539
        %v3541 = vlaneseq
        %v3542 = vshrl.u32 %v3541, 7
        %v3543 = vsub.s32 %v3192, %v3542
        %v3544 = vrot.slane %v2942, %v3543
        %v3545 = vlaneseq
        %v3546 = vshrl.u32 %v3545, 7
        %v3547 = vsub.s32 %v3192, %v3546
        %v3548 = vrot.slane %v2945, %v3547
        %v3549 = vlaneseq
        %v3550 = vshrl.u32 %v3549, 7
        %v3551 = vsub.s32 %v3192, %v3550
        %v3552 = vrot.slane %v2948, %v3551
        %v3553 = vlaneseq
        %v3554 = vshrl.u32 %v3553, 7
        %v3555 = vsub.s32 %v3192, %v3554
        %v3556 = vrot.slane %v2951, %v3555
        %v3557 = vlaneseq
        %v3558 = vshrl.u32 %v3557, 7
        %v3559 = vsub.s32 %v3192, %v3558
        %v3560 = vrot.slane %v2954, %v3559
        %v3561 = vlaneseq
        %v3562 = vshrl.u32 %v3561, 7
        %v3563 = vsub.s32 %v3192, %v3562
        %v3564 = vrot.slane %v2957, %v3563
        %v3565 = vlaneseq
        %v3566 = vshrl.u32 %v3565, 7
        %v3567 = vsub.s32 %v3192, %v3566
        %v3568 = vrot.slane %v2960, %v3567
        %v3569 = vlaneseq
        %v3570 = vshrl.u32 %v3569, 7
        %v3571 = vsub.s32 %v3192, %v3570
        %v3572 = vrot.slane %v2963, %v3571
        %v3573 = vlaneseq
        %v3574 = vshrl.u32 %v3573, 7
        %v3575 = vsub.s32 %v3192, %v3574
        %v3576 = vrot.slane %v2966, %v3575
        %v3577 = vlaneseq
        %v3578 = vshrl.u32 %v3577, 7
        %v3579 = vsub.s32 %v3192, %v3578
        %v3580 = vrot.slane %v2969, %v3579
        %v3581 = vlaneseq
        %v3582 = vshrl.u32 %v3581, 7
        %v3583 = vsub.s32 %v3192, %v3582
        %v3584 = vrot.slane %v2972, %v3583
        %v3585 = vlaneseq
        %v3586 = vshrl.u32 %v3585, 7
        %v3587 = vsub.s32 %v3192, %v3586
        %v3588 = vrot.slane %v2975, %v3587
        %v3589 = vlaneseq
        %v3590 = vshrl.u32 %v3589, 7
        %v3591 = vsub.s32 %v3192, %v3590
        %v3592 = vrot.slane %v2978, %v3591
        %v3593 = vlaneseq
        %v3594 = vshrl.u32 %v3593, 7
        %v3595 = vsub.s32 %v3192, %v3594
        %v3596 = vrot.slane %v2981, %v3595
        %v3597 = vlaneseq
        %v3598 = vshrl.u32 %v3597, 7
        %v3599 = vsub.s32 %v3192, %v3598
        %v3600 = vrot.slane %v2984, %v3599
        %v3601 = vlaneseq
        %v3602 = vshrl.u32 %v3601, 7
        %v3603 = vsub.s32 %v3192, %v3602
        %v3604 = vrot.slane %v2987, %v3603
        %v3605 = vlaneseq
        %v3606 = vshrl.u32 %v3605, 7
        %v3607 = vsub.s32 %v3192, %v3606
        %v3608 = vrot.slane %v2990, %v3607
        %v3609 = vlaneseq
        %v3610 = vshrl.u32 %v3609, 7
        %v3611 = vsub.s32 %v3192, %v3610
        %v3612 = vrot.slane %v2993, %v3611
        %v3613 = vlaneseq
        %v3614 = vshrl.u32 %v3613, 7
        %v3615 = vsub.s32 %v3192, %v3614
        %v3616 = vrot.slane %v2996, %v3615
        %v3617 = vlaneseq
        %v3618 = vshrl.u32 %v3617, 7
        %v3619 = vsub.s32 %v3192, %v3618
        %v3620 = vrot.slane %v2999, %v3619
        %v3621 = vlaneseq
        %v3622 = vshrl.u32 %v3621, 7
        %v3623 = vsub.s32 %v3192, %v3622
        %v3624 = vrot.slane %v3002, %v3623
        %v3625 = vlaneseq
        %v3626 = vshrl.u32 %v3625, 7
        %v3627 = vsub.s32 %v3192, %v3626
        %v3628 = vrot.slane %v3005, %v3627
        %v3629 = vlaneseq
        %v3630 = vshrl.u32 %v3629, 7
        %v3631 = vsub.s32 %v3192, %v3630
        %v3632 = vrot.slane %v3008, %v3631
        %v3633 = vlaneseq
        %v3634 = vshrl.u32 %v3633, 7
        %v3635 = vsub.s32 %v3192, %v3634
        %v3636 = vrot.slane %v3011, %v3635
        %v3637 = vlaneseq
        %v3638 = vshrl.u32 %v3637, 7
        %v3639 = vsub.s32 %v3192, %v3638
        %v3640 = vrot.slane %v3014, %v3639
        %v3641 = vlaneseq
        %v3642 = vshrl.u32 %v3641, 7
        %v3643 = vsub.s32 %v3192, %v3642
        %v3644 = vrot.slane %v3017, %v3643
        %v3645 = vlaneseq
        %v3646 = vshrl.u32 %v3645, 7
        %v3647 = vsub.s32 %v3192, %v3646
        %v3648 = vrot.slane %v3020, %v3647
        %v3649 = vlaneseq
        %v3650 = vshrl.u32 %v3649, 7
        %v3651 = vsub.s32 %v3192, %v3650
        %v3652 = vrot.slane %v3023, %v3651
        %v3653 = vlaneseq
        %v3654 = vshrl.u32 %v3653, 7
        %v3655 = vsub.s32 %v3192, %v3654
        %v3656 = vrot.slane %v3026, %v3655
        %v3657 = vlaneseq
        %v3658 = vshrl.u32 %v3657, 7
        %v3659 = vsub.s32 %v3192, %v3658
        %v3660 = vrot.slane %v3029, %v3659
        %v3661 = vlaneseq
        %v3662 = vshrl.u32 %v3661, 7
        %v3663 = vsub.s32 %v3192, %v3662
        %v3664 = vrot.slane %v3032, %v3663
        %v3665 = vlaneseq
        %v3666 = vshrl.u32 %v3665, 7
        %v3667 = vsub.s32 %v3192, %v3666
        %v3668 = vrot.slane %v3035, %v3667
        %v3669 = vlaneseq
        %v3670 = vshrl.u32 %v3669, 7
        %v3671 = vsub.s32 %v3192, %v3670
        %v3672 = vrot.slane %v3038, %v3671
        %v3673 = vlaneseq
        %v3674 = vshrl.u32 %v3673, 7
        %v3675 = vsub.s32 %v3192, %v3674
        %v3676 = vrot.slane %v3041, %v3675
        %v3677 = vlaneseq
        %v3678 = vshrl.u32 %v3677, 7
        %v3679 = vsub.s32 %v3192, %v3678
        %v3680 = vrot.slane %v3044, %v3679
        %v3681 = vlaneseq
        %v3682 = vshrl.u32 %v3681, 7
        %v3683 = vsub.s32 %v3192, %v3682
        %v3684 = vrot.slane %v3047, %v3683
        %v3685 = vlaneseq
        %v3686 = vshrl.u32 %v3685, 7
        %v3687 = vsub.s32 %v3192, %v3686
        %v3688 = vrot.slane %v3050, %v3687
        %v3689 = vlaneseq
        %v3690 = vshrl.u32 %v3689, 7
        %v3691 = vsub.s32 %v3192, %v3690
        %v3692 = vrot.slane %v3053, %v3691
        %v3693 = vlaneseq
        %v3694 = vshrl.u32 %v3693, 7
        %v3695 = vsub.s32 %v3192, %v3694
        %v3696 = vrot.slane %v3056, %v3695
        %v3697 = vlaneseq
        %v3698 = vshrl.u32 %v3697, 7
        %v3699 = vsub.s32 %v3192, %v3698
        %v3700 = vrot.slane %v3059, %v3699
        %v3701 = vlaneseq
        %v3702 = vshrl.u32 %v3701, 7
        %v3703 = vsub.s32 %v3192, %v3702
        %v3704 = vrot.slane %v3062, %v3703
        %vm3705 = vcmask 1041409
        %v3706 = vsel %vm3705, %v3200, %v3196
        %vm3707 = vcmask 1042434
        %v3708 = vsel %vm3707, %v3204, %v3706
        %vm3709 = vcmask 1043459
        %v3710 = vsel %vm3709, %v3208, %v3708
        %vm3711 = vcmask 1044484
        %v3712 = vsel %vm3711, %v3212, %v3710
        %vm3713 = vcmask 1045509
        %v3714 = vsel %vm3713, %v3216, %v3712
        %vm3715 = vcmask 1046534
        %v3716 = vsel %vm3715, %v3220, %v3714
        %vm3717 = vcmask 1047559
        %v3718 = vsel %vm3717, %v3224, %v3716
        %v3719 = vsel %vm3705, %v3232, %v3228
        %v3720 = vsel %vm3707, %v3236, %v3719
        %v3721 = vsel %vm3709, %v3240, %v3720
        %v3722 = vsel %vm3711, %v3244, %v3721
        %v3723 = vsel %vm3713, %v3248, %v3722
        %v3724 = vsel %vm3715, %v3252, %v3723
        %v3725 = vsel %vm3717, %v3256, %v3724
        %v3726 = vsel %vm3705, %v3264, %v3260
        %v3727 = vsel %vm3707, %v3268, %v3726
        %v3728 = vsel %vm3709, %v3272, %v3727
        %v3729 = vsel %vm3711, %v3276, %v3728
        %v3730 = vsel %vm3713, %v3280, %v3729
        %v3731 = vsel %vm3715, %v3284, %v3730
        %v3732 = vsel %vm3717, %v3288, %v3731
        %v3733 = vsel %vm3705, %v3296, %v3292
        %v3734 = vsel %vm3707, %v3300, %v3733
        %v3735 = vsel %vm3709, %v3304, %v3734
        %v3736 = vsel %vm3711, %v3308, %v3735
        %v3737 = vsel %vm3713, %v3312, %v3736
        %v3738 = vsel %vm3715, %v3316, %v3737
        %v3739 = vsel %vm3717, %v3320, %v3738
        %v3740 = vsel %vm3705, %v3328, %v3324
        %v3741 = vsel %vm3707, %v3332, %v3740
        %v3742 = vsel %vm3709, %v3336, %v3741
        %v3743 = vsel %vm3711, %v3340, %v3742
        %v3744 = vsel %vm3713, %v3344, %v3743
        %v3745 = vsel %vm3715, %v3348, %v3744
        %v3746 = vsel %vm3717, %v3352, %v3745
        %v3747 = vsel %vm3705, %v3360, %v3356
        %v3748 = vsel %vm3707, %v3364, %v3747
        %v3749 = vsel %vm3709, %v3368, %v3748
        %v3750 = vsel %vm3711, %v3372, %v3749
        %v3751 = vsel %vm3713, %v3376, %v3750
        %v3752 = vsel %vm3715, %v3380, %v3751
        %v3753 = vsel %vm3717, %v3384, %v3752
        %v3754 = vsel %vm3705, %v3392, %v3388
        %v3755 = vsel %vm3707, %v3396, %v3754
        %v3756 = vsel %vm3709, %v3400, %v3755
        %v3757 = vsel %vm3711, %v3404, %v3756
        %v3758 = vsel %vm3713, %v3408, %v3757
        %v3759 = vsel %vm3715, %v3412, %v3758
        %v3760 = vsel %vm3717, %v3416, %v3759
        %v3761 = vsel %vm3705, %v3424, %v3420
        %v3762 = vsel %vm3707, %v3428, %v3761
        %v3763 = vsel %vm3709, %v3432, %v3762
        %v3764 = vsel %vm3711, %v3436, %v3763
        %v3765 = vsel %vm3713, %v3440, %v3764
        %v3766 = vsel %vm3715, %v3444, %v3765
        %v3767 = vsel %vm3717, %v3448, %v3766
        %v3768 = vsel %vm3705, %v3456, %v3452
        %v3769 = vsel %vm3707, %v3460, %v3768
        %v3770 = vsel %vm3709, %v3464, %v3769
        %v3771 = vsel %vm3711, %v3468, %v3770
        %v3772 = vsel %vm3713, %v3472, %v3771
        %v3773 = vsel %vm3715, %v3476, %v3772
        %v3774 = vsel %vm3717, %v3480, %v3773
        %v3775 = vsel %vm3705, %v3488, %v3484
        %v3776 = vsel %vm3707, %v3492, %v3775
        %v3777 = vsel %vm3709, %v3496, %v3776
        %v3778 = vsel %vm3711, %v3500, %v3777
        %v3779 = vsel %vm3713, %v3504, %v3778
        %v3780 = vsel %vm3715, %v3508, %v3779
        %v3781 = vsel %vm3717, %v3512, %v3780
        %v3782 = vsel %vm3705, %v3520, %v3516
        %v3783 = vsel %vm3707, %v3524, %v3782
        %v3784 = vsel %vm3709, %v3528, %v3783
        %v3785 = vsel %vm3711, %v3532, %v3784
        %v3786 = vsel %vm3713, %v3536, %v3785
        %v3787 = vsel %vm3715, %v3540, %v3786
        %v3788 = vsel %vm3717, %v3544, %v3787
        %v3789 = vsel %vm3705, %v3552, %v3548
        %v3790 = vsel %vm3707, %v3556, %v3789
        %v3791 = vsel %vm3709, %v3560, %v3790
        %v3792 = vsel %vm3711, %v3564, %v3791
        %v3793 = vsel %vm3713, %v3568, %v3792
        %v3794 = vsel %vm3715, %v3572, %v3793
        %v3795 = vsel %vm3717, %v3576, %v3794
        %v3796 = vsel %vm3705, %v3584, %v3580
        %v3797 = vsel %vm3707, %v3588, %v3796
        %v3798 = vsel %vm3709, %v3592, %v3797
        %v3799 = vsel %vm3711, %v3596, %v3798
        %v3800 = vsel %vm3713, %v3600, %v3799
        %v3801 = vsel %vm3715, %v3604, %v3800
        %v3802 = vsel %vm3717, %v3608, %v3801
        %v3803 = vsel %vm3705, %v3616, %v3612
        %v3804 = vsel %vm3707, %v3620, %v3803
        %v3805 = vsel %vm3709, %v3624, %v3804
        %v3806 = vsel %vm3711, %v3628, %v3805
        %v3807 = vsel %vm3713, %v3632, %v3806
        %v3808 = vsel %vm3715, %v3636, %v3807
        %v3809 = vsel %vm3717, %v3640, %v3808
        %v3810 = vsel %vm3705, %v3648, %v3644
        %v3811 = vsel %vm3707, %v3652, %v3810
        %v3812 = vsel %vm3709, %v3656, %v3811
        %v3813 = vsel %vm3711, %v3660, %v3812
        %v3814 = vsel %vm3713, %v3664, %v3813
        %v3815 = vsel %vm3715, %v3668, %v3814
        %v3816 = vsel %vm3717, %v3672, %v3815
        %v3817 = vsel %vm3705, %v3680, %v3676
        %v3818 = vsel %vm3707, %v3684, %v3817
        %v3819 = vsel %vm3709, %v3688, %v3818
        %v3820 = vsel %vm3711, %v3692, %v3819
        %v3821 = vsel %vm3713, %v3696, %v3820
        %v3822 = vsel %vm3715, %v3700, %v3821
        %v3823 = vsel %vm3717, %v3704, %v3822
        %3840 = vxpose.xlu0.b32.start [1/16] %v3718, 128
        %3841 = vxpose.xlu0.b32.cont [2/16] %v3725, 128
        %3842 = vxpose.xlu0.b32.cont [3/16] %v3732, 128
        %3843 = vxpose.xlu0.b32.cont [4/16] %v3739, 128
        %3844 = vxpose.xlu0.b32.cont [5/16] %v3746, 128
        %3845 = vxpose.xlu0.b32.cont [6/16] %v3753, 128
        %3846 = vxpose.xlu0.b32.cont [7/16] %v3760, 128
        %3847 = vxpose.xlu0.b32.cont [8/16] %v3767, 128
        %3848 = vxpose.xlu0.b32.cont [9/16] %v3774, 128
        %3849 = vxpose.xlu0.b32.cont [10/16] %v3781, 128
        %3850 = vxpose.xlu0.b32.cont [11/16] %v3788, 128
        %3851 = vxpose.xlu0.b32.cont [12/16] %v3795, 128
        %3852 = vxpose.xlu0.b32.cont [13/16] %v3802, 128
        %3853 = vxpose.xlu0.b32.cont [14/16] %v3809, 128
        %3854 = vxpose.xlu0.b32.cont [15/16] %v3816, 128
        %3855 = vxpose.xlu0.b32.end [16/16] %v3823, 128
        %v3856 = vpop.trf.xlu0
        %v3857 = vpop.trf.xlu0
        %v3858 = vpop.trf.xlu0
        %v3859 = vpop.trf.xlu0
        %v3860 = vpop.trf.xlu0
        %v3861 = vpop.trf.xlu0
        %v3862 = vpop.trf.xlu0
        %v3863 = vpop.trf.xlu0
        %v3864 = vpop.trf.xlu0
        %v3865 = vpop.trf.xlu0
        %v3866 = vpop.trf.xlu0
        %v3867 = vpop.trf.xlu0
        %v3868 = vpop.trf.xlu0
        %v3869 = vpop.trf.xlu0
        %v3870 = vpop.trf.xlu0
        %v3871 = vpop.trf.xlu0
        %v3872 = vld [vmem:[%s852] sm:$0xff]
        %vm3873 = vcmp.ne.s32.totalorder %v3872, 0
        %v3874 = vsel %vm3873, %v3856, -1e+10
        %3875 = vmax.xlane.f32.xlu0 %v3874
        %v3876 = vpop.xlane.xlu0 %3875
        %v3877 = vsub.f32 %v3874, %v3876
        %v3878 = vmul.f32 %v3877, 1.442695
        %v3879 = vpow.pop %v3878
        %3880 = vadd.xlane.f32.xlu0 %v3879
        %v3881 = vpop.xlane.xlu0 %3880
        %v3882 = vrcp.pop %v3881
        %v3883 = vmul.f32 %v3879, %v3882
        %3884 = vst [vmem:[%s844] sm:$0xff] %v3883
        %s3885 = sand.u32 %s191, 1
        %s3886 = scalar_lea.sflag [#allocation4], %s3885
        %s3887 = sand.u32 %s191, 1
        %s3888 = smul.addr %s3887, 8
        %s3889 = scalar_lea.vmem [#allocation3], %s3888
        // Predicated region
        $region87: #{attention_forward.1} parent=81 // pred_check
          %p3890 = pneg %p201
        $region88: #{attention_forward.1} parent=81 // pred_check_branch
          %3892 = sbr.rel (%p3890) target = $region90
        $region89: #{attention_forward.1} parent=81 // pred_region
          %s3894 = ssub.s32 128, 128
          %3895 = vsyncadd %s3886, %s3894
          %s3896 = smul.addr %s21, 128
          %s3897 = scalar_lea.hbm %s7, %s3896
          %s3899 = sshll.u32 %s3889, 4
          %s3900 = int_to_ptr.vmem [resolvable:$true] %s3899
          %3902 = dma.vmem_to_hbm [thread:$0]  %s3900, 128, %s3897, %s3886
        $region90: #{attention_forward.1} parent=81 // pred_fallthru
          _
      $region82: #{attention_forward.1} parent=5 // pred_fallthru
        _
      %p3903 = scmp.le.s32.totalorder 2, %s16
      // Predicated region
      $region91: #{attention_forward.1} parent=5 // pred_check
        %p3904 = pneg %p3903
      $region92: #{attention_forward.1} parent=5 // pred_check_branch
        %3906 = sbr.rel (%p3904) target = $region94
      $region93: #{attention_forward.1} parent=5 // pred_region
        %s3907 = ssub.s32 %s16, 2
        // Predicated region
        $region95: #{attention_forward.1} parent=93 // pred_check
          %p3908 = pneg %p207
        $region96: #{attention_forward.1} parent=93 // pred_check_branch
          %3910 = sbr.rel (%p3908) target = $region98
        $region97: #{attention_forward.1} parent=93 // pred_region
          %s3911 = sand.u32 %s192, 1
          %s3912 = scalar_lea.sflag [#allocation4], %s3911
          %s3913 = sand.u32 %s192, 1
          %s3914 = smul.addr %s3913, 8
          %s3915 = scalar_lea.vmem [#allocation3], %s3914
          %3916 = dma.done %s3912, 128
        $region98: #{attention_forward.1} parent=93 // pred_fallthru
          _
      $region94: #{attention_forward.1} parent=5 // pred_fallthru
        _
    $region6: #{attention_forward.1} parent=1 // loop_footer
      %s20 = sadd.s32 1, %s16
    $region7: #{attention_forward.1} parent=1 // loop_footer_branch
      %15 = sbr.rel target = $region3
    $region8: #{attention_forward.1} parent=1 // loop_exit
      _
    %3917 = vsyncpa [#allocation4], 1
    %s3918 = scalar_lea.sflag [#allocation4], 1
    %3919 = vsyncpa %s3918, 1

</llo_original>
